<compile_context>
chip_gen: v6e
topology: v6e:2x2x1
jax: 0.10.0
libtpu: 0.0.40
codegen_flags: <defaults>
</compile_context>

<pallas_src>
import functools

import jax
import jax.numpy as jnp
import numpy as np
from jax.experimental import pallas as pl
from jax.experimental.pallas import tpu as pltpu

NEG_INFTY = -1.0e9
LN_EPS = 1e-6

CORE_WEIGHTS = (
    "ln2_g", "ln2_b", "ln3_g", "ln3_b", "ln4_g", "ln4_b",
    "s_wc", "c_wq", "c_wc",
    "f1_w1", "f1_b1", "f1_w2", "f1_b2",
    "f2_w1", "f2_b1", "f2_w2", "f2_b2",
)


# ----------------------------- shared math helpers (pure jnp) ----------------
# These are used both inside the Pallas kernels and by the pure-JAX reference,
# so the two paths compute numerically identical math (up to matmul rounding).

def _layernorm(x, g, b):
    # x: (S, D) f32; g, b: (1, D). Matches torch.nn.LayerNorm (biased variance).
    mu = jnp.mean(x, axis=-1, keepdims=True)
    var = jnp.mean((x - mu) ** 2, axis=-1, keepdims=True)
    return (x - mu) * jax.lax.rsqrt(var + LN_EPS) * g + b


def _softmax_lastdim(x):
    m = jnp.max(x, axis=-1, keepdims=True)
    e = jnp.exp(x - m)
    s = jnp.sum(e, axis=-1, keepdims=True)
    return e * (1.0 / s)


def _causal_bias(q0, sq, sk):
    rows = q0 + jax.lax.broadcasted_iota(jnp.int32, (sq, sk), 0)
    cols = jax.lax.broadcasted_iota(jnp.int32, (sq, sk), 1)
    return jnp.where(cols > rows, NEG_INFTY, 0.0).astype(jnp.float32)


def _ffw(x, w1, b1, w2, b2):
    h = jnp.dot(x.astype(jnp.bfloat16), w1, preferred_element_type=jnp.float32) + b1
    h = jnp.maximum(h, 0.0)
    return jnp.dot(h.astype(jnp.bfloat16), w2, preferred_element_type=jnp.float32) + b2


def _mha_from_projected(q, k, v, wc, mask_bias, n_heads, dd):
    """Attention from already-projected Q/K/V.

    q: (Sq, D) bf16, pre-scaled by 1/sqrt(dd); k, v: (Sk, D) bf16; wc: (D, D) bf16.
    Per-head 2-D matmuls (static lane slices, unrolled loop); the output
    projection accumulates directly into a (Sq, D) f32 buffer.
    """
    sq, d_model = q.shape
    acc = jnp.zeros((sq, d_model), jnp.float32)
    for h in range(n_heads):
        lo = h * dd
        hi = lo + dd
        q_h = q[:, lo:hi]                                   # (Sq, dd)
        k_h = k[:, lo:hi]                                   # (Sk, dd)
        v_h = v[:, lo:hi]                                   # (Sk, dd)
        logits = jax.lax.dot_general(                       # (Sq, Sk)  q @ k^T
            q_h, k_h, (((1,), (1,)), ((), ())),
            preferred_element_type=jnp.float32)
        if mask_bias is not None:
            logits = logits + mask_bias
        p = _softmax_lastdim(logits)                        # (Sq, Sk) f32
        ctx = jnp.dot(p.astype(jnp.bfloat16), v_h,
                      preferred_element_type=jnp.float32)   # (Sq, dd)
        acc = acc + jnp.dot(ctx.astype(jnp.bfloat16), wc[lo:hi, :],
                            preferred_element_type=jnp.float32)  # (Sq, D)
    return acc


def _embed_qkv_math(x_dec, x_pos, ln1_g, ln1_b, wq, wk, wv, dd):
    x_embed = x_dec + x_pos
    x_norm = _layernorm(x_embed, ln1_g, ln1_b)
    xb = x_norm.astype(jnp.bfloat16)
    q = (jnp.dot(xb, wq, preferred_element_type=jnp.float32)
         * jax.lax.rsqrt(jnp.float32(dd))).astype(jnp.bfloat16)
    k = jnp.dot(xb, wk, preferred_element_type=jnp.float32).astype(jnp.bfloat16)
    v = jnp.dot(xb, wv, preferred_element_type=jnp.float32).astype(jnp.bfloat16)
    return x_embed, q, k, v


def _cross_kv_math(x_enc, wk, wv):
    xe = x_enc.astype(jnp.bfloat16)
    k = jnp.dot(xe, wk, preferred_element_type=jnp.float32).astype(jnp.bfloat16)
    v = jnp.dot(xe, wv, preferred_element_type=jnp.float32).astype(jnp.bfloat16)
    return k, v


def _layer_core_math(x_embed, q_self, k_self, v_self, k_cross, v_cross,
                     w, mask_bias, n_heads):
    d_model = x_embed.shape[-1]
    dd = d_model // n_heads
    attn_self = _mha_from_projected(q_self, k_self, v_self, w["s_wc"],
                                    mask_bias, n_heads, dd)
    ffwd_self = _ffw(_layernorm(x_embed, w["ln2_g"], w["ln2_b"]),
                     w["f1_w1"], w["f1_b1"], w["f1_w2"], w["f1_b2"])
    dec_output = x_embed + (attn_self + ffwd_self)
    dec_norm = _layernorm(dec_output, w["ln3_g"], w["ln3_b"])
    q_cross = (jnp.dot(dec_norm.astype(jnp.bfloat16), w["c_wq"],
                       preferred_element_type=jnp.float32)
               * jax.lax.rsqrt(jnp.float32(dd))).astype(jnp.bfloat16)
    enc_dec = _mha_from_projected(q_cross, k_cross, v_cross, w["c_wc"],
                                  None, n_heads, dd)
    enc_ffwd = _ffw(_layernorm(dec_output, w["ln4_g"], w["ln4_b"]),
                    w["f2_w1"], w["f2_b1"], w["f2_w2"], w["f2_b2"])
    return dec_output + (enc_ffwd + enc_dec)


# ----------------------------- Pallas kernels --------------------------------

def embed_qkv_kernel(x_dec_ref, x_pos_ref, ln1_g_ref, ln1_b_ref,
                     wq_ref, wk_ref, wv_ref,
                     x_embed_ref, q_ref, k_ref, v_ref, *, dd):
    x_embed, q, k, v = _embed_qkv_math(
        x_dec_ref[0], x_pos_ref[0], ln1_g_ref[...], ln1_b_ref[...],
        wq_ref[...], wk_ref[...], wv_ref[...], dd)
    x_embed_ref[0] = x_embed
    q_ref[0] = q
    k_ref[0] = k
    v_ref[0] = v


def cross_kv_kernel(x_enc_ref, wk_ref, wv_ref, k_ref, v_ref):
    k, v = _cross_kv_math(x_enc_ref[0], wk_ref[...], wv_ref[...])
    k_ref[0] = k
    v_ref[0] = v


def decoder_layer_core_kernel(x_embed_ref, q_ref, k_self_ref, v_self_ref,
                              k_cross_ref, v_cross_ref, *refs, n_heads):
    out_ref = refs[-1]
    w = {name: r[...] for name, r in zip(CORE_WEIGHTS, refs[:-1])}

    x_embed = x_embed_ref[0]                                 # (TQ, D) f32
    tq = x_embed.shape[0]
    sk = k_self_ref.shape[1]
    q0 = pl.program_id(1) * tq
    mask_bias = _causal_bias(q0, tq, sk)                     # generated in-kernel

    out = _layer_core_math(x_embed, q_ref[0], k_self_ref[0], v_self_ref[0],
                           k_cross_ref[0], v_cross_ref[0], w, mask_bias, n_heads)
    out_ref[0] = out.astype(out_ref.dtype)


def logits_kernel(x_ref, emb_ref, o_ref):
    # x: (1, TS, D) f32; emb: (D, TV) bf16 (pre-transposed) -> out: (1, TS, TV) f32
    o_ref[0] = jnp.dot(x_ref[0].astype(jnp.bfloat16), emb_ref[...],
                       preferred_element_type=jnp.float32)


# ----------------------------- Pallas wrappers --------------------------------

def _pick_tile(n, candidates, multiple=8):
    for c in candidates:
        if n % c == 0:
            return c
    cap = max(candidates)
    for d in range(min(cap, n), 0, -1):
        if n % d == 0 and d % multiple == 0:
            return d
    return n


def _rep_spec(arr):
    zeros = (0,) * arr.ndim
    return pl.BlockSpec(arr.shape, lambda *_args, _z=zeros: _z)


def _vmem_limit_bytes(estimate_bytes):
    # Chip-aware scoped-VMEM budget.
    try:
        kind = jax.devices()[0].device_kind.lower()
    except Exception:
        kind = ""
    if ("v5" in kind) or ("v6" in kind):
        cap = 100 * 2 ** 20        # 128 MiB physical: use most of it
    else:
        cap = 48 * 2 ** 20         # v7x (64 MiB physical) / unknown: leave headroom
    return int(min(cap, max(32 * 2 ** 20, 2 * int(estimate_bytes))))


def embed_qkv_pallas(x_dec, x_pos, w, n_heads):
    B, S, D = x_dec.shape
    dd = D // n_heads
    ts = _pick_tile(S, (512, 256, 128))
    grid = (B, S // ts)
    tile = lambda b, st: (b, st, 0)
    pos_tile = lambda b, st: (0, st, 0)
    names = ("ln1_g", "ln1_b", "s_wq", "s_wk", "s_wv")
    w_bytes = sum(int(w[k].size) * w[k].dtype.itemsize for k in names)
    est = w_bytes + 2 * ts * D * 8 + 2 * ts * D * 10 + 6 * ts * D * 4
    out_spec = pl.BlockSpec((1, ts, D), tile)
    return pl.pallas_call(
        functools.partial(embed_qkv_kernel, dd=dd),
        out_shape=(jax.ShapeDtypeStruct((B, S, D), jnp.float32),   # x_embed
                   jax.ShapeDtypeStruct((B, S, D), jnp.bfloat16),  # q (pre-scaled)
                   jax.ShapeDtypeStruct((B, S, D), jnp.bfloat16),  # k
                   jax.ShapeDtypeStruct((B, S, D), jnp.bfloat16)),  # v
        grid=grid,
        in_specs=[pl.BlockSpec((1, ts, D), tile),
                  pl.BlockSpec((1, ts, D), pos_tile)] + [_rep_spec(w[k]) for k in names],
        out_specs=(out_spec, out_spec, out_spec, out_spec),
        compiler_params=pltpu.CompilerParams(
            dimension_semantics=("parallel", "parallel"),
            vmem_limit_bytes=_vmem_limit_bytes(est)),
    )(x_dec, x_pos, *[w[k] for k in names])


def cross_kv_pallas(x_enc, w):
    B, Se, D = x_enc.shape
    ts = _pick_tile(Se, (512, 256, 128))
    grid = (B, Se // ts)
    tile = lambda b, st: (b, st, 0)
    names = ("c_wk", "c_wv")
    w_bytes = sum(int(w[k].size) * w[k].dtype.itemsize for k in names)
    est = w_bytes + 2 * ts * D * 4 + 4 * ts * D * 2 + 4 * ts * D * 4
    out_spec = pl.BlockSpec((1, ts, D), tile)
    return pl.pallas_call(
        cross_kv_kernel,
        out_shape=(jax.ShapeDtypeStruct((B, Se, D), jnp.bfloat16),
                   jax.ShapeDtypeStruct((B, Se, D), jnp.bfloat16)),
        grid=grid,
        in_specs=[pl.BlockSpec((1, ts, D), tile)] + [_rep_spec(w[k]) for k in names],
        out_specs=(out_spec, out_spec),
        compiler_params=pltpu.CompilerParams(
            dimension_semantics=("parallel", "parallel"),
            vmem_limit_bytes=_vmem_limit_bytes(est)),
    )(x_enc, *[w[k] for k in names])


def layer_core_pallas(x_embed, q_self, k_self, v_self, k_cross, v_cross, w, n_heads):
    B, S, D = x_embed.shape
    Se = k_cross.shape[1]
    tq = _pick_tile(S, (512, 256, 128))
    grid = (B, S // tq)
    tile = lambda b, qt: (b, qt, 0)
    full = lambda b, qt: (b, 0, 0)
    ff = w["f1_w1"].shape[1]
    w_bytes = sum(int(w[k].size) * w[k].dtype.itemsize for k in CORE_WEIGHTS)
    est = (w_bytes
           + 2 * (tq * D * 6 + 2 * S * D * 2 + 2 * Se * D * 2 + tq * D * 4)
           + 4 * tq * max(S, Se) * 4 + 2 * tq * ff * 4 + 8 * tq * D * 4)
    return pl.pallas_call(
        functools.partial(decoder_layer_core_kernel, n_heads=n_heads),
        out_shape=jax.ShapeDtypeStruct((B, S, D), jnp.float32),
        grid=grid,
        in_specs=[pl.BlockSpec((1, tq, D), tile),      # x_embed tile
                  pl.BlockSpec((1, tq, D), tile),      # q_self tile (pre-scaled)
                  pl.BlockSpec((1, S, D), full),       # k_self (full, precomputed)
                  pl.BlockSpec((1, S, D), full),       # v_self
                  pl.BlockSpec((1, Se, D), full),      # k_cross
                  pl.BlockSpec((1, Se, D), full)]      # v_cross
                 + [_rep_spec(w[k]) for k in CORE_WEIGHTS],
        out_specs=pl.BlockSpec((1, tq, D), tile),
        compiler_params=pltpu.CompilerParams(
            dimension_semantics=("parallel", "parallel"),
            vmem_limit_bytes=_vmem_limit_bytes(est)),
    )(x_embed, q_self, k_self, v_self, k_cross, v_cross,
      *[w[k] for k in CORE_WEIGHTS])


def decoder_layer_pallas(x_enc, x_dec, x_pos, w, n_heads):
    x_embed, q_self, k_self, v_self = embed_qkv_pallas(x_dec, x_pos, w, n_heads)
    k_cross, v_cross = cross_kv_pallas(x_enc, w)
    return layer_core_pallas(x_embed, q_self, k_self, v_self,
                             k_cross, v_cross, w, n_heads)


def logits_pallas(x, emb_t):
    B, S, D = x.shape
    V = emb_t.shape[1]
    ts = _pick_tile(S, (512, 256, 128))
    tv = _pick_tile(V, (2048, 1024, 512, 256, 128), multiple=128)
    # seq innermost so each (D, TV) embedding tile is reused across seq tiles
    grid = (B, V // tv, S // ts)
    est = 2 * (ts * D * 4 + D * tv * 2 + ts * tv * 4) + ts * tv * 4
    return pl.pallas_call(
        logits_kernel,
        out_shape=jax.ShapeDtypeStruct((B, S, V), jnp.float32),
        grid=grid,
        in_specs=[pl.BlockSpec((1, ts, D), lambda b, vt, st: (b, st, 0)),
                  pl.BlockSpec((D, tv), lambda b, vt, st: (0, vt))],
        out_specs=pl.BlockSpec((1, ts, tv), lambda b, vt, st: (b, st, vt)),
        compiler_params=pltpu.CompilerParams(
            dimension_semantics=("parallel", "parallel", "parallel"),
            vmem_limit_bytes=_vmem_limit_bytes(est)),
    )(x, emb_t)


# ----------------------------- pure-JAX reference layer -----------------------

def _layer_ref(x_enc, x_dec, x_pos, w, n_heads):
    s = x_dec.shape[0]
    dd = x_dec.shape[1] // n_heads
    x_embed, q, k, v = _embed_qkv_math(x_dec, x_pos, w["ln1_g"], w["ln1_b"],
                                       w["s_wq"], w["s_wk"], w["s_wv"], dd)
    kc, vc = _cross_kv_math(x_enc, w["c_wk"], w["c_wv"])
    mask_bias = _causal_bias(0, s, s)
    return _layer_core_math(x_embed, q, k, v, kc, vc, w, mask_bias, n_heads)


# ----------------------------- param preparation -------------------------------

def prepare_params(params, seq_len):
    """One-time weight prep (hoisted out of the forward path):
    bf16 casts of all matmul weights, pre-transposed (D, V) embedding for the
    logits kernel, and pre-scaled positional embeddings."""
    E = params["dec_embed"]                                 # (V, D) f32
    D = E.shape[1]
    d_rsqrt = jax.lax.rsqrt(jnp.float32(D))
    prepped = {
        "emb": E,                                           # f32, for token lookup
        "emb_t": jnp.transpose(E).astype(jnp.bfloat16),     # (D, V) bf16 for logits
        "pos": [(p[:seq_len] * d_rsqrt)[None, :, :].astype(jnp.float32)
                for p in params["pos_embed"]],              # (1, S, D) per layer
        "layers": [],
    }
    for lp in params["layers"]:
        out = {}
        for ln in ("ln1", "ln2", "ln3", "ln4"):
            out[f"{ln}_g"] = lp[f"{ln}_g"]
            out[f"{ln}_b"] = lp[f"{ln}_b"]
        for nm in ("s_wq", "s_wk", "s_wv", "s_wc", "c_wq", "c_wk", "c_wv", "c_wc",
                   "f1_w1", "f1_w2", "f2_w1", "f2_w2"):
            out[nm] = lp[nm].astype(jnp.bfloat16)
        for nm in ("f1_b1", "f1_b2", "f2_b1", "f2_b2"):
            out[nm] = lp[nm]
        prepped["layers"].append(out)
    return prepped


# ----------------------------- full Decoder forward ---------------------------

@functools.partial(jax.jit, static_argnames=("n_heads", "use_pallas"))
def decoder_forward(prepped, enc_outputs, x_decode, n_heads, use_pallas=True):
    """Equivalent of Decoder.forward(enc_outputs, x_decode, training=False)."""
    E = prepped["emb"]
    D = E.shape[1]
    d_rsqrt = jax.lax.rsqrt(jnp.float32(D))
    layer_input = jnp.take(E, x_decode, axis=0) * d_rsqrt          # (B, S, D)

    for m, lp in enumerate(prepped["layers"]):
        x_pos = prepped["pos"][m]                                  # (1, S, D)
        if use_pallas:
            layer_input = decoder_layer_pallas(enc_outputs, layer_input, x_pos,
                                               lp, n_heads)
        else:
            def single(xe, xd, _w=lp, _pos=x_pos):
                return _layer_ref(xe, xd, _pos[0], _w, n_heads)
            layer_input = jax.vmap(single)(enc_outputs, layer_input)

    if use_pallas:
        dec_logits = logits_pallas(layer_input, prepped["emb_t"])
    else:
        dec_logits = jnp.einsum("bsd,dv->bsv", layer_input.astype(jnp.bfloat16),
                                prepped["emb_t"], preferred_element_type=jnp.float32)
    return layer_input, dec_logits


# ----------------------------- deterministic param init -----------------------

def init_params(key, n_layers, d_model, n_heads, d_ffwd, vocab_size, max_seq):
    keys = iter(jax.random.split(key, 8 + n_layers * 32))

    def nrm(shape, scale=0.05):
        return (scale * jax.random.normal(next(keys), shape)).astype(jnp.float32)

    params = {
        "dec_embed": nrm((vocab_size, d_model), 0.5),
        "pos_embed": [nrm((max_seq, d_model), 0.5) for _ in range(n_layers)],
        "layers": [],
    }
    for _ in range(n_layers):
        lp = {}
        for ln in ("ln1", "ln2", "ln3", "ln4"):
            lp[f"{ln}_g"] = (1.0 + nrm((1, d_model), 0.1))
            lp[f"{ln}_b"] = nrm((1, d_model), 0.1)
        for w in ("s_wq", "s_wk", "s_wv", "s_wc", "c_wq", "c_wk", "c_wv", "c_wc"):
            lp[w] = nrm((d_model, d_model))
        lp["f1_w1"] = nrm((d_model, d_ffwd)); lp["f1_b1"] = nrm((1, d_ffwd), 0.01)
        lp["f1_w2"] = nrm((d_ffwd, d_model)); lp["f1_b2"] = nrm((1, d_model), 0.01)
        lp["f2_w1"] = nrm((d_model, d_ffwd)); lp["f2_b1"] = nrm((1, d_ffwd), 0.01)
        lp["f2_w2"] = nrm((d_ffwd, d_model)); lp["f2_b2"] = nrm((1, d_model), 0.01)
        params["layers"].append(lp)
    return params


# ----------------------------- main -------------------------------------------

if __name__ == "__main__":
    B, S, D, H, FF, V, L, MAX_S = 2, 8, 32, 4, 64, 50, 2, 16

    root = jax.random.PRNGKey(0)
    k_par, k_tok, k_enc = jax.random.split(root, 3)

    params = init_params(k_par, L, D, H, FF, V, MAX_S)
    x_decode = jax.random.randint(k_tok, (B, S), 0, V, dtype=jnp.int32)
    enc_outputs = jax.random.normal(k_enc, (B, S, D), dtype=jnp.float32)

    prepped = prepare_params(params, S)   # one-time weight prep (bf16 cast, emb^T)

    layer_out, dec_logits = decoder_forward(prepped, enc_outputs, x_decode,
                                            n_heads=H, use_pallas=True)
    jax.block_until_ready((layer_out, dec_logits))

    # pure-JAX reference using identical (bf16-matmul / exact-softmax) math
    ref_out, ref_logits = decoder_forward(prepped, enc_outputs, x_decode,
                                          n_heads=H, use_pallas=False)

    np.testing.assert_allclose(np.asarray(layer_out), np.asarray(ref_out),
                               rtol=2e-3, atol=2e-3)

    # isolated check of the logits kernel (identical inputs -> matmul rounding only)
    iso_logits = jnp.einsum("bsd,dv->bsv", layer_out.astype(jnp.bfloat16),
                            prepped["emb_t"], preferred_element_type=jnp.float32)
    np.testing.assert_allclose(np.asarray(dec_logits), np.asarray(iso_logits),
                               rtol=2e-3, atol=2e-3)

    # end-to-end logits sanity (accumulated matmul-rounding drift across layers)
    np.testing.assert_allclose(np.asarray(dec_logits), np.asarray(ref_logits),
                               rtol=2e-2, atol=2e-2)

    print("KERNEL_OK")
</pallas_src>

<mosaic_0001>
module attributes {stable_mosaic.version = 11 : i64} {
  func.func @cross_kv_kernel(%arg0: i32, %arg1: i32, %arg2: memref<1x8x32xf32, #tpu.memory_space<vmem>>, %arg3: memref<32x32xbf16, #tpu.memory_space<vmem>>, %arg4: memref<32x32xbf16, #tpu.memory_space<vmem>>, %arg5: memref<1x8x32xbf16, #tpu.memory_space<vmem>>, %arg6: memref<1x8x32xbf16, #tpu.memory_space<vmem>>) attributes {dimension_semantics = [#tpu.dimension_semantics<parallel>, #tpu.dimension_semantics<parallel>], iteration_bounds = array<i64: 2, 1>, scalar_prefetch = 0 : i64, scratch_operands = 0 : i64, tpu.core_type = #tpu.core_type<tc>, window_params = [{transform_indices = @transform_0, window_bounds = array<i64: 1, 8, 32>}, {pipeline_mode = #tpu.pipeline_mode<synchronous>, transform_indices = @transform_1, window_bounds = array<i64: 32, 32>}, {pipeline_mode = #tpu.pipeline_mode<synchronous>, transform_indices = @transform_2, window_bounds = array<i64: 32, 32>}, {transform_indices = @transform_3, window_bounds = array<i64: 1, 8, 32>}, {transform_indices = @transform_4, window_bounds = array<i64: 1, 8, 32>}]} {
    %c0 = arith.constant 0 : index
    %c0_0 = arith.constant 0 : index
    %c0_1 = arith.constant 0 : index
    %0 = vector.load %arg2[%c0, %c0_0, %c0_1] : memref<1x8x32xf32, #tpu.memory_space<vmem>>, vector<1x8x32xf32>
    %1 = vector.shape_cast %0 : vector<1x8x32xf32> to vector<8x32xf32>
    %c0_2 = arith.constant 0 : index
    %c0_3 = arith.constant 0 : index
    %2 = vector.load %arg3[%c0_2, %c0_3] : memref<32x32xbf16, #tpu.memory_space<vmem>>, vector<32x32xbf16>
    %c0_4 = arith.constant 0 : index
    %c0_5 = arith.constant 0 : index
    %3 = vector.load %arg4[%c0_4, %c0_5] : memref<32x32xbf16, #tpu.memory_space<vmem>>, vector<32x32xbf16>
    %4 = arith.truncf %1 : vector<8x32xf32> to vector<8x32xbf16>
    %cst = arith.constant dense<0.000000e+00> : vector<8x32xf32>
    %5 = tpu.matmul %4, %2, %cst {dimension_numbers = #tpu.dot_dimension_numbers<[1], [0], [0], [1], [0, 0, 1, 1], [], []>} : vector<8x32xbf16>, vector<32x32xbf16>, vector<8x32xf32> -> vector<8x32xf32>
    %6 = arith.truncf %5 : vector<8x32xf32> to vector<8x32xbf16>
    %cst_6 = arith.constant dense<0.000000e+00> : vector<8x32xf32>
    %7 = tpu.matmul %4, %3, %cst_6 {dimension_numbers = #tpu.dot_dimension_numbers<[1], [0], [0], [1], [0, 0, 1, 1], [], []>} : vector<8x32xbf16>, vector<32x32xbf16>, vector<8x32xf32> -> vector<8x32xf32>
    %8 = arith.truncf %7 : vector<8x32xf32> to vector<8x32xbf16>
    %c0_7 = arith.constant 0 : index
    %c0_8 = arith.constant 0 : index
    %c0_9 = arith.constant 0 : index
    %9 = vector.load %arg5[%c0_7, %c0_8, %c0_9] : memref<1x8x32xbf16, #tpu.memory_space<vmem>>, vector<1x8x32xbf16>
    %10 = vector.shape_cast %9 : vector<1x8x32xbf16> to vector<8x32xbf16>
    %11 = vector.shape_cast %6 : vector<8x32xbf16> to vector<1x8x32xbf16>
    tpu.vector_store %arg5[%c0_7, %c0_8, %c0_9], %11 {strides = array<i32>} : memref<1x8x32xbf16, #tpu.memory_space<vmem>>, vector<1x8x32xbf16>,
    %c0_10 = arith.constant 0 : index
    %c0_11 = arith.constant 0 : index
    %c0_12 = arith.constant 0 : index
    %12 = vector.load %arg6[%c0_10, %c0_11, %c0_12] : memref<1x8x32xbf16, #tpu.memory_space<vmem>>, vector<1x8x32xbf16>
    %13 = vector.shape_cast %12 : vector<1x8x32xbf16> to vector<8x32xbf16>
    %14 = vector.shape_cast %8 : vector<8x32xbf16> to vector<1x8x32xbf16>
    tpu.vector_store %arg6[%c0_10, %c0_11, %c0_12], %14 {strides = array<i32>} : memref<1x8x32xbf16, #tpu.memory_space<vmem>>, vector<1x8x32xbf16>,
    return
  }
  func.func @transform_0(%arg0: i32, %arg1: i32) -> (i32, i32, i32) {
    %c0_i32 = arith.constant 0 : i32
    %c0_i32_0 = arith.constant 0 : i32
    return %arg0, %arg1, %c0_i32 : i32, i32, i32
  }
  func.func @transform_1(%arg0: i32, %arg1: i32) -> (i32, i32) {
    %c0_i32 = arith.constant 0 : i32
    %c0_i32_0 = arith.constant 0 : i32
    %c0_i32_1 = arith.constant 0 : i32
    return %c0_i32, %c0_i32_0 : i32, i32
  }
  func.func @transform_2(%arg0: i32, %arg1: i32) -> (i32, i32) {
    %c0_i32 = arith.constant 0 : i32
    %c0_i32_0 = arith.constant 0 : i32
    %c0_i32_1 = arith.constant 0 : i32
    return %c0_i32, %c0_i32_0 : i32, i32
  }
  func.func @transform_3(%arg0: i32, %arg1: i32) -> (i32, i32, i32) {
    %c0_i32 = arith.constant 0 : i32
    %c0_i32_0 = arith.constant 0 : i32
    return %arg0, %arg1, %c0_i32 : i32, i32, i32
  }
  func.func @transform_4(%arg0: i32, %arg1: i32) -> (i32, i32, i32) {
    %c0_i32 = arith.constant 0 : i32
    %c0_i32_0 = arith.constant 0 : i32
    return %arg0, %arg1, %c0_i32 : i32, i32, i32
  }
}

module attributes {stable_mosaic.version = 11 : i64} {
  func.func @embed_qkv_kernel(%arg0: i32, %arg1: i32, %arg2: memref<1x8x32xf32, #tpu.memory_space<vmem>>, %arg3: memref<1x8x32xf32, #tpu.memory_space<vmem>>, %arg4: memref<1x32xf32, #tpu.memory_space<vmem>>, %arg5: memref<1x32xf32, #tpu.memory_space<vmem>>, %arg6: memref<32x32xbf16, #tpu.memory_space<vmem>>, %arg7: memref<32x32xbf16, #tpu.memory_space<vmem>>, %arg8: memref<32x32xbf16, #tpu.memory_space<vmem>>, %arg9: memref<1x8x32xf32, #tpu.memory_space<vmem>>, %arg10: memref<1x8x32xbf16, #tpu.memory_space<vmem>>, %arg11: memref<1x8x32xbf16, #tpu.memory_space<vmem>>, %arg12: memref<1x8x32xbf16, #tpu.memory_space<vmem>>) attributes {dimension_semantics = [#tpu.dimension_semantics<parallel>, #tpu.dimension_semantics<parallel>], iteration_bounds = array<i64: 2, 1>, scalar_prefetch = 0 : i64, scratch_operands = 0 : i64, tpu.core_type = #tpu.core_type<tc>, window_params = [{transform_indices = @transform_0, window_bounds = array<i64: 1, 8, 32>}, {transform_indices = @transform_1, window_bounds = array<i64: 1, 8, 32>}, {pipeline_mode = #tpu.pipeline_mode<synchronous>, transform_indices = @transform_2, window_bounds = array<i64: 1, 32>}, {pipeline_mode = #tpu.pipeline_mode<synchronous>, transform_indices = @transform_3, window_bounds = array<i64: 1, 32>}, {pipeline_mode = #tpu.pipeline_mode<synchronous>, transform_indices = @transform_4, window_bounds = array<i64: 32, 32>}, {pipeline_mode = #tpu.pipeline_mode<synchronous>, transform_indices = @transform_5, window_bounds = array<i64: 32, 32>}, {pipeline_mode = #tpu.pipeline_mode<synchronous>, transform_indices = @transform_6, window_bounds = array<i64: 32, 32>}, {transform_indices = @transform_7, window_bounds = array<i64: 1, 8, 32>}, {transform_indices = @transform_8, window_bounds = array<i64: 1, 8, 32>}, {transform_indices = @transform_9, window_bounds = array<i64: 1, 8, 32>}, {transform_indices = @transform_10, window_bounds = array<i64: 1, 8, 32>}]} {
    %c0 = arith.constant 0 : index
    %c0_0 = arith.constant 0 : index
    %c0_1 = arith.constant 0 : index
    %0 = vector.load %arg2[%c0, %c0_0, %c0_1] : memref<1x8x32xf32, #tpu.memory_space<vmem>>, vector<1x8x32xf32>
    %1 = vector.shape_cast %0 : vector<1x8x32xf32> to vector<8x32xf32>
    %c0_2 = arith.constant 0 : index
    %c0_3 = arith.constant 0 : index
    %c0_4 = arith.constant 0 : index
    %2 = vector.load %arg3[%c0_2, %c0_3, %c0_4] : memref<1x8x32xf32, #tpu.memory_space<vmem>>, vector<1x8x32xf32>
    %3 = vector.shape_cast %2 : vector<1x8x32xf32> to vector<8x32xf32>
    %c0_5 = arith.constant 0 : index
    %c0_6 = arith.constant 0 : index
    %4 = vector.load %arg4[%c0_5, %c0_6] : memref<1x32xf32, #tpu.memory_space<vmem>>, vector<1x32xf32>
    %c0_7 = arith.constant 0 : index
    %c0_8 = arith.constant 0 : index
    %5 = vector.load %arg5[%c0_7, %c0_8] : memref<1x32xf32, #tpu.memory_space<vmem>>, vector<1x32xf32>
    %c0_9 = arith.constant 0 : index
    %c0_10 = arith.constant 0 : index
    %6 = vector.load %arg6[%c0_9, %c0_10] : memref<32x32xbf16, #tpu.memory_space<vmem>>, vector<32x32xbf16>
    %c0_11 = arith.constant 0 : index
    %c0_12 = arith.constant 0 : index
    %7 = vector.load %arg7[%c0_11, %c0_12] : memref<32x32xbf16, #tpu.memory_space<vmem>>, vector<32x32xbf16>
    %c0_13 = arith.constant 0 : index
    %c0_14 = arith.constant 0 : index
    %8 = vector.load %arg8[%c0_13, %c0_14] : memref<32x32xbf16, #tpu.memory_space<vmem>>, vector<32x32xbf16>
    %9 = arith.addf %1, %3 : vector<8x32xf32>
    %cst = arith.constant dense<0.000000e+00> : vector<8xf32>
    %10 = vector.multi_reduction <add>, %9, %cst [1] : vector<8x32xf32> to vector<8xf32>
    %11 = vector.shape_cast %10 : vector<8xf32> to vector<8x1xf32>
    %cst_15 = arith.constant 3.200000e+01 : f32
    %12 = vector.broadcast %cst_15 : f32 to vector<8x1xf32>
    %13 = arith.divf %11, %12 : vector<8x1xf32>
    %14 = vector.broadcast %13 : vector<8x1xf32> to vector<8x32xf32>
    %15 = arith.subf %9, %14 : vector<8x32xf32>
    %16 = arith.mulf %15, %15 : vector<8x32xf32>
    %cst_16 = arith.constant dense<0.000000e+00> : vector<8xf32>
    %17 = vector.multi_reduction <add>, %16, %cst_16 [1] : vector<8x32xf32> to vector<8xf32>
    %18 = vector.shape_cast %17 : vector<8xf32> to vector<8x1xf32>
    %cst_17 = arith.constant 3.200000e+01 : f32
    %19 = vector.broadcast %cst_17 : f32 to vector<8x1xf32>
    %20 = arith.divf %18, %19 : vector<8x1xf32>
    %21 = vector.broadcast %13 : vector<8x1xf32> to vector<8x32xf32>
    %22 = arith.subf %9, %21 : vector<8x32xf32>
    %cst_18 = arith.constant 9.99999997E-7 : f32
    %23 = vector.broadcast %cst_18 : f32 to vector<8x1xf32>
    %24 = arith.addf %20, %23 : vector<8x1xf32>
    %25 = math.rsqrt %24 : vector<8x1xf32>
    %26 = vector.broadcast %25 : vector<8x1xf32> to vector<8x32xf32>
    %27 = arith.mulf %22, %26 : vector<8x32xf32>
    %28 = vector.broadcast %4 : vector<1x32xf32> to vector<8x32xf32>
    %29 = arith.mulf %27, %28 : vector<8x32xf32>
    %30 = vector.broadcast %5 : vector<1x32xf32> to vector<8x32xf32>
    %31 = arith.addf %29, %30 : vector<8x32xf32>
    %32 = arith.truncf %31 : vector<8x32xf32> to vector<8x32xbf16>
    %cst_19 = arith.constant dense<0.000000e+00> : vector<8x32xf32>
    %33 = tpu.matmul %32, %6, %cst_19 {dimension_numbers = #tpu.dot_dimension_numbers<[1], [0], [0], [1], [0, 0, 1, 1], [], []>} : vector<8x32xbf16>, vector<32x32xbf16>, vector<8x32xf32> -> vector<8x32xf32>
    %cst_20 = arith.constant 8.000000e+00 : f32
    %34 = math.rsqrt %cst_20 : f32
    %35 = vector.broadcast %34 : f32 to vector<8x32xf32>
    %36 = arith.mulf %33, %35 : vector<8x32xf32>
    %37 = arith.truncf %36 : vector<8x32xf32> to vector<8x32xbf16>
    %cst_21 = arith.constant dense<0.000000e+00> : vector<8x32xf32>
    %38 = tpu.matmul %32, %7, %cst_21 {dimension_numbers = #tpu.dot_dimension_numbers<[1], [0], [0], [1], [0, 0, 1, 1], [], []>} : vector<8x32xbf16>, vector<32x32xbf16>, vector<8x32xf32> -> vector<8x32xf32>
    %39 = arith.truncf %38 : vector<8x32xf32> to vector<8x32xbf16>
    %cst_22 = arith.constant dense<0.000000e+00> : vector<8x32xf32>
    %40 = tpu.matmul %32, %8, %cst_22 {dimension_numbers = #tpu.dot_dimension_numbers<[1], [0], [0], [1], [0, 0, 1, 1], [], []>} : vector<8x32xbf16>, vector<32x32xbf16>, vector<8x32xf32> -> vector<8x32xf32>
    %41 = arith.truncf %40 : vector<8x32xf32> to vector<8x32xbf16>
    %c0_23 = arith.constant 0 : index
    %c0_24 = arith.constant 0 : index
    %c0_25 = arith.constant 0 : index
    %42 = vector.load %arg9[%c0_23, %c0_24, %c0_25] : memref<1x8x32xf32, #tpu.memory_space<vmem>>, vector<1x8x32xf32>
    %43 = vector.shape_cast %42 : vector<1x8x32xf32> to vector<8x32xf32>
    %44 = vector.shape_cast %9 : vector<8x32xf32> to vector<1x8x32xf32>
    tpu.vector_store %arg9[%c0_23, %c0_24, %c0_25], %44 {strides = array<i32>} : memref<1x8x32xf32, #tpu.memory_space<vmem>>, vector<1x8x32xf32>,
    %c0_26 = arith.constant 0 : index
    %c0_27 = arith.constant 0 : index
    %c0_28 = arith.constant 0 : index
    %45 = vector.load %arg10[%c0_26, %c0_27, %c0_28] : memref<1x8x32xbf16, #tpu.memory_space<vmem>>, vector<1x8x32xbf16>
    %46 = vector.shape_cast %45 : vector<1x8x32xbf16> to vector<8x32xbf16>
    %47 = vector.shape_cast %37 : vector<8x32xbf16> to vector<1x8x32xbf16>
    tpu.vector_store %arg10[%c0_26, %c0_27, %c0_28], %47 {strides = array<i32>} : memref<1x8x32xbf16, #tpu.memory_space<vmem>>, vector<1x8x32xbf16>,
    %c0_29 = arith.constant 0 : index
    %c0_30 = arith.constant 0 : index
    %c0_31 = arith.constant 0 : index
    %48 = vector.load %arg11[%c0_29, %c0_30, %c0_31] : memref<1x8x32xbf16, #tpu.memory_space<vmem>>, vector<1x8x32xbf16>
    %49 = vector.shape_cast %48 : vector<1x8x32xbf16> to vector<8x32xbf16>
    %50 = vector.shape_cast %39 : vector<8x32xbf16> to vector<1x8x32xbf16>
    tpu.vector_store %arg11[%c0_29, %c0_30, %c0_31], %50 {strides = array<i32>} : memref<1x8x32xbf16, #tpu.memory_space<vmem>>, vector<1x8x32xbf16>,
    %c0_32 = arith.constant 0 : index
    %c0_33 = arith.constant 0 : index
    %c0_34 = arith.constant 0 : index
    %51 = vector.load %arg12[%c0_32, %c0_33, %c0_34] : memref<1x8x32xbf16, #tpu.memory_space<vmem>>, vector<1x8x32xbf16>
    %52 = vector.shape_cast %51 : vector<1x8x32xbf16> to vector<8x32xbf16>
    %53 = vector.shape_cast %41 : vector<8x32xbf16> to vector<1x8x32xbf16>
    tpu.vector_store %arg12[%c0_32, %c0_33, %c0_34], %53 {strides = array<i32>} : memref<1x8x32xbf16, #tpu.memory_space<vmem>>, vector<1x8x32xbf16>,
    return
  }
  func.func @transform_0(%arg0: i32, %arg1: i32) -> (i32, i32, i32) {
    %c0_i32 = arith.constant 0 : i32
    %c0_i32_0 = arith.constant 0 : i32
    return %arg0, %arg1, %c0_i32 : i32, i32, i32
  }
  func.func @transform_1(%arg0: i32, %arg1: i32) -> (i32, i32, i32) {
    %c0_i32 = arith.constant 0 : i32
    %c0_i32_0 = arith.constant 0 : i32
    %c0_i32_1 = arith.constant 0 : i32
    return %c0_i32, %arg1, %c0_i32_0 : i32, i32, i32
  }
  func.func @transform_2(%arg0: i32, %arg1: i32) -> (i32, i32) {
    %c0_i32 = arith.constant 0 : i32
    %c0_i32_0 = arith.constant 0 : i32
    %c0_i32_1 = arith.constant 0 : i32
    return %c0_i32, %c0_i32_0 : i32, i32
  }
  func.func @transform_3(%arg0: i32, %arg1: i32) -> (i32, i32) {
    %c0_i32 = arith.constant 0 : i32
    %c0_i32_0 = arith.constant 0 : i32
    %c0_i32_1 = arith.constant 0 : i32
    return %c0_i32, %c0_i32_0 : i32, i32
  }
  func.func @transform_4(%arg0: i32, %arg1: i32) -> (i32, i32) {
    %c0_i32 = arith.constant 0 : i32
    %c0_i32_0 = arith.constant 0 : i32
    %c0_i32_1 = arith.constant 0 : i32
    return %c0_i32, %c0_i32_0 : i32, i32
  }
  func.func @transform_5(%arg0: i32, %arg1: i32) -> (i32, i32) {
    %c0_i32 = arith.constant 0 : i32
    %c0_i32_0 = arith.constant 0 : i32
    %c0_i32_1 = arith.constant 0 : i32
    return %c0_i32, %c0_i32_0 : i32, i32
  }
  func.func @transform_6(%arg0: i32, %arg1: i32) -> (i32, i32) {
    %c0_i32 = arith.constant 0 : i32
    %c0_i32_0 = arith.constant 0 : i32
    %c0_i32_1 = arith.constant 0 : i32
    return %c0_i32, %c0_i32_0 : i32, i32
  }
  func.func @transform_7(%arg0: i32, %arg1: i32) -> (i32, i32, i32) {
    %c0_i32 = arith.constant 0 : i32
    %c0_i32_0 = arith.constant 0 : i32
    return %arg0, %arg1, %c0_i32 : i32, i32, i32
  }
  func.func @transform_8(%arg0: i32, %arg1: i32) -> (i32, i32, i32) {
    %c0_i32 = arith.constant 0 : i32
    %c0_i32_0 = arith.constant 0 : i32
    return %arg0, %arg1, %c0_i32 : i32, i32, i32
  }
  func.func @transform_9(%arg0: i32, %arg1: i32) -> (i32, i32, i32) {
    %c0_i32 = arith.constant 0 : i32
    %c0_i32_0 = arith.constant 0 : i32
    return %arg0, %arg1, %c0_i32 : i32, i32, i32
  }
  func.func @transform_10(%arg0: i32, %arg1: i32) -> (i32, i32, i32) {
    %c0_i32 = arith.constant 0 : i32
    %c0_i32_0 = arith.constant 0 : i32
    return %arg0, %arg1, %c0_i32 : i32, i32, i32
  }
}

module attributes {stable_mosaic.version = 11 : i64} {
  func.func @logits_kernel(%arg0: i32, %arg1: i32, %arg2: i32, %arg3: memref<1x8x32xf32, #tpu.memory_space<vmem>>, %arg4: memref<32x50xbf16, #tpu.memory_space<vmem>>, %arg5: memref<1x8x50xf32, #tpu.memory_space<vmem>>) attributes {dimension_semantics = [#tpu.dimension_semantics<parallel>, #tpu.dimension_semantics<parallel>, #tpu.dimension_semantics<parallel>], iteration_bounds = array<i64: 2, 1, 1>, scalar_prefetch = 0 : i64, scratch_operands = 0 : i64, tpu.core_type = #tpu.core_type<tc>, window_params = [{transform_indices = @transform_0, window_bounds = array<i64: 1, 8, 32>}, {transform_indices = @transform_1, window_bounds = array<i64: 32, 50>}, {transform_indices = @transform_2, window_bounds = array<i64: 1, 8, 50>}]} {
    %c0 = arith.constant 0 : index
    %c0_0 = arith.constant 0 : index
    %c0_1 = arith.constant 0 : index
    %0 = vector.load %arg3[%c0, %c0_0, %c0_1] : memref<1x8x32xf32, #tpu.memory_space<vmem>>, vector<1x8x32xf32>
    %1 = vector.shape_cast %0 : vector<1x8x32xf32> to vector<8x32xf32>
    %2 = arith.truncf %1 : vector<8x32xf32> to vector<8x32xbf16>
    %c0_2 = arith.constant 0 : index
    %c0_3 = arith.constant 0 : index
    %3 = vector.load %arg4[%c0_2, %c0_3] : memref<32x50xbf16, #tpu.memory_space<vmem>>, vector<32x50xbf16>
    %cst = arith.constant dense<0.000000e+00> : vector<8x50xf32>
    %4 = tpu.matmul %2, %3, %cst {dimension_numbers = #tpu.dot_dimension_numbers<[1], [0], [0], [1], [0, 0, 1, 1], [], []>} : vector<8x32xbf16>, vector<32x50xbf16>, vector<8x50xf32> -> vector<8x50xf32>
    %c0_4 = arith.constant 0 : index
    %c0_5 = arith.constant 0 : index
    %c0_6 = arith.constant 0 : index
    %5 = vector.load %arg5[%c0_4, %c0_5, %c0_6] : memref<1x8x50xf32, #tpu.memory_space<vmem>>, vector<1x8x50xf32>
    %6 = vector.shape_cast %5 : vector<1x8x50xf32> to vector<8x50xf32>
    %7 = vector.shape_cast %4 : vector<8x50xf32> to vector<1x8x50xf32>
    tpu.vector_store %arg5[%c0_4, %c0_5, %c0_6], %7 {strides = array<i32>} : memref<1x8x50xf32, #tpu.memory_space<vmem>>, vector<1x8x50xf32>,
    return
  }
  func.func @transform_0(%arg0: i32, %arg1: i32, %arg2: i32) -> (i32, i32, i32) {
    %c0_i32 = arith.constant 0 : i32
    %c0_i32_0 = arith.constant 0 : i32
    return %arg0, %arg2, %c0_i32 : i32, i32, i32
  }
  func.func @transform_1(%arg0: i32, %arg1: i32, %arg2: i32) -> (i32, i32) {
    %c0_i32 = arith.constant 0 : i32
    %c0_i32_0 = arith.constant 0 : i32
    return %c0_i32, %arg1 : i32, i32
  }
  func.func @transform_2(%arg0: i32, %arg1: i32, %arg2: i32) -> (i32, i32, i32) {
    %c0_i32 = arith.constant 0 : i32
    return %arg0, %arg2, %arg1 : i32, i32, i32
  }
}

module attributes {stable_mosaic.version = 11 : i64} {
  func.func @decoder_layer_core_kernel(%arg0: i32, %arg1: i32, %arg2: memref<1x8x32xf32, #tpu.memory_space<vmem>>, %arg3: memref<1x8x32xbf16, #tpu.memory_space<vmem>>, %arg4: memref<1x8x32xbf16, #tpu.memory_space<vmem>>, %arg5: memref<1x8x32xbf16, #tpu.memory_space<vmem>>, %arg6: memref<1x8x32xbf16, #tpu.memory_space<vmem>>, %arg7: memref<1x8x32xbf16, #tpu.memory_space<vmem>>, %arg8: memref<1x32xf32, #tpu.memory_space<vmem>>, %arg9: memref<1x32xf32, #tpu.memory_space<vmem>>, %arg10: memref<1x32xf32, #tpu.memory_space<vmem>>, %arg11: memref<1x32xf32, #tpu.memory_space<vmem>>, %arg12: memref<1x32xf32, #tpu.memory_space<vmem>>, %arg13: memref<1x32xf32, #tpu.memory_space<vmem>>, %arg14: memref<32x32xbf16, #tpu.memory_space<vmem>>, %arg15: memref<32x32xbf16, #tpu.memory_space<vmem>>, %arg16: memref<32x32xbf16, #tpu.memory_space<vmem>>, %arg17: memref<32x64xbf16, #tpu.memory_space<vmem>>, %arg18: memref<1x64xf32, #tpu.memory_space<vmem>>, %arg19: memref<64x32xbf16, #tpu.memory_space<vmem>>, %arg20: memref<1x32xf32, #tpu.memory_space<vmem>>, %arg21: memref<32x64xbf16, #tpu.memory_space<vmem>>, %arg22: memref<1x64xf32, #tpu.memory_space<vmem>>, %arg23: memref<64x32xbf16, #tpu.memory_space<vmem>>, %arg24: memref<1x32xf32, #tpu.memory_space<vmem>>, %arg25: memref<1x8x32xf32, #tpu.memory_space<vmem>>) attributes {dimension_semantics = [#tpu.dimension_semantics<parallel>, #tpu.dimension_semantics<parallel>], iteration_bounds = array<i64: 2, 1>, scalar_prefetch = 0 : i64, scratch_operands = 0 : i64, tpu.core_type = #tpu.core_type<tc>, window_params = [{transform_indices = @transform_0, window_bounds = array<i64: 1, 8, 32>}, {transform_indices = @transform_1, window_bounds = array<i64: 1, 8, 32>}, {transform_indices = @transform_2, window_bounds = array<i64: 1, 8, 32>}, {transform_indices = @transform_3, window_bounds = array<i64: 1, 8, 32>}, {transform_indices = @transform_4, window_bounds = array<i64: 1, 8, 32>}, {transform_indices = @transform_5, window_bounds = array<i64: 1, 8, 32>}, {pipeline_mode = #tpu.pipeline_mode<synchronous>, transform_indices = @transform_6, window_bounds = array<i64: 1, 32>}, {pipeline_mode = #tpu.pipeline_mode<synchronous>, transform_indices = @transform_7, window_bounds = array<i64: 1, 32>}, {pipeline_mode = #tpu.pipeline_mode<synchronous>, transform_indices = @transform_8, window_bounds = array<i64: 1, 32>}, {pipeline_mode = #tpu.pipeline_mode<synchronous>, transform_indices = @transform_9, window_bounds = array<i64: 1, 32>}, {pipeline_mode = #tpu.pipeline_mode<synchronous>, transform_indices = @transform_10, window_bounds = array<i64: 1, 32>}, {pipeline_mode = #tpu.pipeline_mode<synchronous>, transform_indices = @transform_11, window_bounds = array<i64: 1, 32>}, {pipeline_mode = #tpu.pipeline_mode<synchronous>, transform_indices = @transform_12, window_bounds = array<i64: 32, 32>}, {pipeline_mode = #tpu.pipeline_mode<synchronous>, transform_indices = @transform_13, window_bounds = array<i64: 32, 32>}, {pipeline_mode = #tpu.pipeline_mode<synchronous>, transform_indices = @transform_14, window_bounds = array<i64: 32, 32>}, {pipeline_mode = #tpu.pipeline_mode<synchronous>, transform_indices = @transform_15, window_bounds = array<i64: 32, 64>}, {pipeline_mode = #tpu.pipeline_mode<synchronous>, transform_indices = @transform_16, window_bounds = array<i64: 1, 64>}, {pipeline_mode = #tpu.pipeline_mode<synchronous>, transform_indices = @transform_17, window_bounds = array<i64: 64, 32>}, {pipeline_mode = #tpu.pipeline_mode<synchronous>, transform_indices = @transform_18, window_bounds = array<i64: 1, 32>}, {pipeline_mode = #tpu.pipeline_mode<synchronous>, transform_indices = @transform_19, window_bounds = array<i64: 32, 64>}, {pipeline_mode = #tpu.pipeline_mode<synchronous>, transform_indices = @transform_20, window_bounds = array<i64: 1, 64>}, {pipeline_mode = #tpu.pipeline_mode<synchronous>, transform_indices = @transform_21, window_bounds = array<i64: 64, 32>}, {pipeline_mode = #tpu.pipeline_mode<synchronous>, transform_indices = @transform_22, window_bounds = array<i64: 1, 32>}, {transform_indices = @transform_23, window_bounds = array<i64: 1, 8, 32>}]} {
    %c0 = arith.constant 0 : index
    %c0_0 = arith.constant 0 : index
    %0 = vector.load %arg8[%c0, %c0_0] : memref<1x32xf32, #tpu.memory_space<vmem>>, vector<1x32xf32>
    %c0_1 = arith.constant 0 : index
    %c0_2 = arith.constant 0 : index
    %1 = vector.load %arg9[%c0_1, %c0_2] : memref<1x32xf32, #tpu.memory_space<vmem>>, vector<1x32xf32>
    %c0_3 = arith.constant 0 : index
    %c0_4 = arith.constant 0 : index
    %2 = vector.load %arg10[%c0_3, %c0_4] : memref<1x32xf32, #tpu.memory_space<vmem>>, vector<1x32xf32>
    %c0_5 = arith.constant 0 : index
    %c0_6 = arith.constant 0 : index
    %3 = vector.load %arg11[%c0_5, %c0_6] : memref<1x32xf32, #tpu.memory_space<vmem>>, vector<1x32xf32>
    %c0_7 = arith.constant 0 : index
    %c0_8 = arith.constant 0 : index
    %4 = vector.load %arg12[%c0_7, %c0_8] : memref<1x32xf32, #tpu.memory_space<vmem>>, vector<1x32xf32>
    %c0_9 = arith.constant 0 : index
    %c0_10 = arith.constant 0 : index
    %5 = vector.load %arg13[%c0_9, %c0_10] : memref<1x32xf32, #tpu.memory_space<vmem>>, vector<1x32xf32>
    %c0_11 = arith.constant 0 : index
    %c0_12 = arith.constant 0 : index
    %6 = vector.load %arg14[%c0_11, %c0_12] : memref<32x32xbf16, #tpu.memory_space<vmem>>, vector<32x32xbf16>
    %c0_13 = arith.constant 0 : index
    %c0_14 = arith.constant 0 : index
    %7 = vector.load %arg15[%c0_13, %c0_14] : memref<32x32xbf16, #tpu.memory_space<vmem>>, vector<32x32xbf16>
    %c0_15 = arith.constant 0 : index
    %c0_16 = arith.constant 0 : index
    %8 = vector.load %arg16[%c0_15, %c0_16] : memref<32x32xbf16, #tpu.memory_space<vmem>>, vector<32x32xbf16>
    %c0_17 = arith.constant 0 : index
    %c0_18 = arith.constant 0 : index
    %9 = vector.load %arg17[%c0_17, %c0_18] : memref<32x64xbf16, #tpu.memory_space<vmem>>, vector<32x64xbf16>
    %c0_19 = arith.constant 0 : index
    %c0_20 = arith.constant 0 : index
    %10 = vector.load %arg18[%c0_19, %c0_20] : memref<1x64xf32, #tpu.memory_space<vmem>>, vector<1x64xf32>
    %c0_21 = arith.constant 0 : index
    %c0_22 = arith.constant 0 : index
    %11 = vector.load %arg19[%c0_21, %c0_22] : memref<64x32xbf16, #tpu.memory_space<vmem>>, vector<64x32xbf16>
    %c0_23 = arith.constant 0 : index
    %c0_24 = arith.constant 0 : index
    %12 = vector.load %arg20[%c0_23, %c0_24] : memref<1x32xf32, #tpu.memory_space<vmem>>, vector<1x32xf32>
    %c0_25 = arith.constant 0 : index
    %c0_26 = arith.constant 0 : index
    %13 = vector.load %arg21[%c0_25, %c0_26] : memref<32x64xbf16, #tpu.memory_space<vmem>>, vector<32x64xbf16>
    %c0_27 = arith.constant 0 : index
    %c0_28 = arith.constant 0 : index
    %14 = vector.load %arg22[%c0_27, %c0_28] : memref<1x64xf32, #tpu.memory_space<vmem>>, vector<1x64xf32>
    %c0_29 = arith.constant 0 : index
    %c0_30 = arith.constant 0 : index
    %15 = vector.load %arg23[%c0_29, %c0_30] : memref<64x32xbf16, #tpu.memory_space<vmem>>, vector<64x32xbf16>
    %c0_31 = arith.constant 0 : index
    %c0_32 = arith.constant 0 : index
    %16 = vector.load %arg24[%c0_31, %c0_32] : memref<1x32xf32, #tpu.memory_space<vmem>>, vector<1x32xf32>
    %c0_33 = arith.constant 0 : index
    %c0_34 = arith.constant 0 : index
    %c0_35 = arith.constant 0 : index
    %17 = vector.load %arg2[%c0_33, %c0_34, %c0_35] : memref<1x8x32xf32, #tpu.memory_space<vmem>>, vector<1x8x32xf32>
    %18 = vector.shape_cast %17 : vector<1x8x32xf32> to vector<8x32xf32>
    %c8_i32 = arith.constant 8 : i32
    %19 = arith.muli %arg1, %c8_i32 : i32
    %20 = tpu.iota {dimensions = array<i32: 0>} : vector<8x8xi32>
    %21 = vector.broadcast %19 : i32 to vector<8x8xi32>
    %22 = arith.addi %21, %20 : vector<8x8xi32>
    %23 = tpu.iota {dimensions = array<i32: 1>} : vector<8x8xi32>
    %24 = arith.cmpi sgt, %23, %22 : vector<8x8xi32>
    %cst = arith.constant -1.000000e+09 : f32
    %cst_36 = arith.constant 0.000000e+00 : f32
    %25 = vector.broadcast %cst : f32 to vector<8x8xf32>
    %26 = vector.broadcast %cst_36 : f32 to vector<8x8xf32>
    %27 = arith.select %24, %25, %26 : vector<8x8xi1>, vector<8x8xf32>
    %c0_37 = arith.constant 0 : index
    %c0_38 = arith.constant 0 : index
    %c0_39 = arith.constant 0 : index
    %28 = vector.load %arg3[%c0_37, %c0_38, %c0_39] : memref<1x8x32xbf16, #tpu.memory_space<vmem>>, vector<1x8x32xbf16>
    %29 = vector.shape_cast %28 : vector<1x8x32xbf16> to vector<8x32xbf16>
    %c0_40 = arith.constant 0 : index
    %c0_41 = arith.constant 0 : index
    %c0_42 = arith.constant 0 : index
    %30 = vector.load %arg4[%c0_40, %c0_41, %c0_42] : memref<1x8x32xbf16, #tpu.memory_space<vmem>>, vector<1x8x32xbf16>
    %31 = vector.shape_cast %30 : vector<1x8x32xbf16> to vector<8x32xbf16>
    %c0_43 = arith.constant 0 : index
    %c0_44 = arith.constant 0 : index
    %c0_45 = arith.constant 0 : index
    %32 = vector.load %arg5[%c0_43, %c0_44, %c0_45] : memref<1x8x32xbf16, #tpu.memory_space<vmem>>, vector<1x8x32xbf16>
    %33 = vector.shape_cast %32 : vector<1x8x32xbf16> to vector<8x32xbf16>
    %c0_46 = arith.constant 0 : index
    %c0_47 = arith.constant 0 : index
    %c0_48 = arith.constant 0 : index
    %34 = vector.load %arg6[%c0_46, %c0_47, %c0_48] : memref<1x8x32xbf16, #tpu.memory_space<vmem>>, vector<1x8x32xbf16>
    %35 = vector.shape_cast %34 : vector<1x8x32xbf16> to vector<8x32xbf16>
    %c0_49 = arith.constant 0 : index
    %c0_50 = arith.constant 0 : index
    %c0_51 = arith.constant 0 : index
    %36 = vector.load %arg7[%c0_49, %c0_50, %c0_51] : memref<1x8x32xbf16, #tpu.memory_space<vmem>>, vector<1x8x32xbf16>
    %37 = vector.shape_cast %36 : vector<1x8x32xbf16> to vector<8x32xbf16>
    %cst_52 = arith.constant 0.000000e+00 : f32
    %38 = vector.broadcast %cst_52 : f32 to vector<8x32xf32>
    %39 = vector.extract_strided_slice %29 {offsets = [0, 0], sizes = [8, 8], strides = [1, 1]} : vector<8x32xbf16> to vector<8x8xbf16>
    %40 = vector.extract_strided_slice %31 {offsets = [0, 0], sizes = [8, 8], strides = [1, 1]} : vector<8x32xbf16> to vector<8x8xbf16>
    %41 = vector.extract_strided_slice %33 {offsets = [0, 0], sizes = [8, 8], strides = [1, 1]} : vector<8x32xbf16> to vector<8x8xbf16>
    %cst_53 = arith.constant dense<0.000000e+00> : vector<8x8xf32>
    %42 = tpu.matmul %39, %40, %cst_53 {dimension_numbers = #tpu.dot_dimension_numbers<[1], [1], [0], [0], [0, 0, 1, 0], [], []>} : vector<8x8xbf16>, vector<8x8xbf16>, vector<8x8xf32> -> vector<8x8xf32>
    %43 = arith.addf %42, %27 : vector<8x8xf32>
    %cst_54 = arith.constant dense<0xFF800000> : vector<8xf32>
    %44 = vector.multi_reduction <maximumf>, %43, %cst_54 [1] : vector<8x8xf32> to vector<8xf32>
    %45 = vector.shape_cast %44 : vector<8xf32> to vector<8x1xf32>
    %46 = vector.broadcast %45 : vector<8x1xf32> to vector<8x8xf32>
    %47 = arith.subf %43, %46 : vector<8x8xf32>
    %48 = math.exp %47 : vector<8x8xf32>
    %cst_55 = arith.constant dense<0.000000e+00> : vector<8xf32>
    %49 = vector.multi_reduction <add>, %48, %cst_55 [1] : vector<8x8xf32> to vector<8xf32>
    %50 = vector.shape_cast %49 : vector<8xf32> to vector<8x1xf32>
    %cst_56 = arith.constant 1.000000e+00 : f32
    %51 = vector.broadcast %cst_56 : f32 to vector<8x1xf32>
    %52 = arith.divf %51, %50 : vector<8x1xf32>
    %53 = vector.broadcast %52 : vector<8x1xf32> to vector<8x8xf32>
    %54 = arith.mulf %48, %53 : vector<8x8xf32>
    %55 = arith.truncf %54 : vector<8x8xf32> to vector<8x8xbf16>
    %cst_57 = arith.constant dense<0.000000e+00> : vector<8x8xf32>
    %56 = tpu.matmul %55, %41, %cst_57 {dimension_numbers = #tpu.dot_dimension_numbers<[1], [0], [0], [1], [0, 0, 1, 1], [], []>} : vector<8x8xbf16>, vector<8x8xbf16>, vector<8x8xf32> -> vector<8x8xf32>
    %57 = arith.truncf %56 : vector<8x8xf32> to vector<8x8xbf16>
    %58 = vector.extract_strided_slice %6 {offsets = [0, 0], sizes = [8, 32], strides = [1, 1]} : vector<32x32xbf16> to vector<8x32xbf16>
    %cst_58 = arith.constant dense<0.000000e+00> : vector<8x32xf32>
    %59 = tpu.matmul %57, %58, %cst_58 {dimension_numbers = #tpu.dot_dimension_numbers<[1], [0], [0], [1], [0, 0, 1, 1], [], []>} : vector<8x8xbf16>, vector<8x32xbf16>, vector<8x32xf32> -> vector<8x32xf32>
    %60 = arith.addf %38, %59 : vector<8x32xf32>
    %61 = vector.extract_strided_slice %29 {offsets = [0, 8], sizes = [8, 8], strides = [1, 1]} : vector<8x32xbf16> to vector<8x8xbf16>
    %62 = vector.extract_strided_slice %31 {offsets = [0, 8], sizes = [8, 8], strides = [1, 1]} : vector<8x32xbf16> to vector<8x8xbf16>
    %63 = vector.extract_strided_slice %33 {offsets = [0, 8], sizes = [8, 8], strides = [1, 1]} : vector<8x32xbf16> to vector<8x8xbf16>
    %cst_59 = arith.constant dense<0.000000e+00> : vector<8x8xf32>
    %64 = tpu.matmul %61, %62, %cst_59 {dimension_numbers = #tpu.dot_dimension_numbers<[1], [1], [0], [0], [0, 0, 1, 0], [], []>} : vector<8x8xbf16>, vector<8x8xbf16>, vector<8x8xf32> -> vector<8x8xf32>
    %65 = arith.addf %64, %27 : vector<8x8xf32>
    %cst_60 = arith.constant dense<0xFF800000> : vector<8xf32>
    %66 = vector.multi_reduction <maximumf>, %65, %cst_60 [1] : vector<8x8xf32> to vector<8xf32>
    %67 = vector.shape_cast %66 : vector<8xf32> to vector<8x1xf32>
    %68 = vector.broadcast %67 : vector<8x1xf32> to vector<8x8xf32>
    %69 = arith.subf %65, %68 : vector<8x8xf32>
    %70 = math.exp %69 : vector<8x8xf32>
    %cst_61 = arith.constant dense<0.000000e+00> : vector<8xf32>
    %71 = vector.multi_reduction <add>, %70, %cst_61 [1] : vector<8x8xf32> to vector<8xf32>
    %72 = vector.shape_cast %71 : vector<8xf32> to vector<8x1xf32>
    %cst_62 = arith.constant 1.000000e+00 : f32
    %73 = vector.broadcast %cst_62 : f32 to vector<8x1xf32>
    %74 = arith.divf %73, %72 : vector<8x1xf32>
    %75 = vector.broadcast %74 : vector<8x1xf32> to vector<8x8xf32>
    %76 = arith.mulf %70, %75 : vector<8x8xf32>
    %77 = arith.truncf %76 : vector<8x8xf32> to vector<8x8xbf16>
    %cst_63 = arith.constant dense<0.000000e+00> : vector<8x8xf32>
    %78 = tpu.matmul %77, %63, %cst_63 {dimension_numbers = #tpu.dot_dimension_numbers<[1], [0], [0], [1], [0, 0, 1, 1], [], []>} : vector<8x8xbf16>, vector<8x8xbf16>, vector<8x8xf32> -> vector<8x8xf32>
    %79 = arith.truncf %78 : vector<8x8xf32> to vector<8x8xbf16>
    %80 = vector.extract_strided_slice %6 {offsets = [8, 0], sizes = [8, 32], strides = [1, 1]} : vector<32x32xbf16> to vector<8x32xbf16>
    %cst_64 = arith.constant dense<0.000000e+00> : vector<8x32xf32>
    %81 = tpu.matmul %79, %80, %cst_64 {dimension_numbers = #tpu.dot_dimension_numbers<[1], [0], [0], [1], [0, 0, 1, 1], [], []>} : vector<8x8xbf16>, vector<8x32xbf16>, vector<8x32xf32> -> vector<8x32xf32>
    %82 = arith.addf %60, %81 : vector<8x32xf32>
    %83 = vector.extract_strided_slice %29 {offsets = [0, 16], sizes = [8, 8], strides = [1, 1]} : vector<8x32xbf16> to vector<8x8xbf16>
    %84 = vector.extract_strided_slice %31 {offsets = [0, 16], sizes = [8, 8], strides = [1, 1]} : vector<8x32xbf16> to vector<8x8xbf16>
    %85 = vector.extract_strided_slice %33 {offsets = [0, 16], sizes = [8, 8], strides = [1, 1]} : vector<8x32xbf16> to vector<8x8xbf16>
    %cst_65 = arith.constant dense<0.000000e+00> : vector<8x8xf32>
    %86 = tpu.matmul %83, %84, %cst_65 {dimension_numbers = #tpu.dot_dimension_numbers<[1], [1], [0], [0], [0, 0, 1, 0], [], []>} : vector<8x8xbf16>, vector<8x8xbf16>, vector<8x8xf32> -> vector<8x8xf32>
    %87 = arith.addf %86, %27 : vector<8x8xf32>
    %cst_66 = arith.constant dense<0xFF800000> : vector<8xf32>
    %88 = vector.multi_reduction <maximumf>, %87, %cst_66 [1] : vector<8x8xf32> to vector<8xf32>
    %89 = vector.shape_cast %88 : vector<8xf32> to vector<8x1xf32>
    %90 = vector.broadcast %89 : vector<8x1xf32> to vector<8x8xf32>
    %91 = arith.subf %87, %90 : vector<8x8xf32>
    %92 = math.exp %91 : vector<8x8xf32>
    %cst_67 = arith.constant dense<0.000000e+00> : vector<8xf32>
    %93 = vector.multi_reduction <add>, %92, %cst_67 [1] : vector<8x8xf32> to vector<8xf32>
    %94 = vector.shape_cast %93 : vector<8xf32> to vector<8x1xf32>
    %cst_68 = arith.constant 1.000000e+00 : f32
    %95 = vector.broadcast %cst_68 : f32 to vector<8x1xf32>
    %96 = arith.divf %95, %94 : vector<8x1xf32>
    %97 = vector.broadcast %96 : vector<8x1xf32> to vector<8x8xf32>
    %98 = arith.mulf %92, %97 : vector<8x8xf32>
    %99 = arith.truncf %98 : vector<8x8xf32> to vector<8x8xbf16>
    %cst_69 = arith.constant dense<0.000000e+00> : vector<8x8xf32>
    %100 = tpu.matmul %99, %85, %cst_69 {dimension_numbers = #tpu.dot_dimension_numbers<[1], [0], [0], [1], [0, 0, 1, 1], [], []>} : vector<8x8xbf16>, vector<8x8xbf16>, vector<8x8xf32> -> vector<8x8xf32>
    %101 = arith.truncf %100 : vector<8x8xf32> to vector<8x8xbf16>
    %102 = vector.extract_strided_slice %6 {offsets = [16, 0], sizes = [8, 32], strides = [1, 1]} : vector<32x32xbf16> to vector<8x32xbf16>
    %cst_70 = arith.constant dense<0.000000e+00> : vector<8x32xf32>
    %103 = tpu.matmul %101, %102, %cst_70 {dimension_numbers = #tpu.dot_dimension_numbers<[1], [0], [0], [1], [0, 0, 1, 1], [], []>} : vector<8x8xbf16>, vector<8x32xbf16>, vector<8x32xf32> -> vector<8x32xf32>
    %104 = arith.addf %82, %103 : vector<8x32xf32>
    %105 = vector.extract_strided_slice %29 {offsets = [0, 24], sizes = [8, 8], strides = [1, 1]} : vector<8x32xbf16> to vector<8x8xbf16>
    %106 = vector.extract_strided_slice %31 {offsets = [0, 24], sizes = [8, 8], strides = [1, 1]} : vector<8x32xbf16> to vector<8x8xbf16>
    %107 = vector.extract_strided_slice %33 {offsets = [0, 24], sizes = [8, 8], strides = [1, 1]} : vector<8x32xbf16> to vector<8x8xbf16>
    %cst_71 = arith.constant dense<0.000000e+00> : vector<8x8xf32>
    %108 = tpu.matmul %105, %106, %cst_71 {dimension_numbers = #tpu.dot_dimension_numbers<[1], [1], [0], [0], [0, 0, 1, 0], [], []>} : vector<8x8xbf16>, vector<8x8xbf16>, vector<8x8xf32> -> vector<8x8xf32>
    %109 = arith.addf %108, %27 : vector<8x8xf32>
    %cst_72 = arith.constant dense<0xFF800000> : vector<8xf32>
    %110 = vector.multi_reduction <maximumf>, %109, %cst_72 [1] : vector<8x8xf32> to vector<8xf32>
    %111 = vector.shape_cast %110 : vector<8xf32> to vector<8x1xf32>
    %112 = vector.broadcast %111 : vector<8x1xf32> to vector<8x8xf32>
    %113 = arith.subf %109, %112 : vector<8x8xf32>
    %114 = math.exp %113 : vector<8x8xf32>
    %cst_73 = arith.constant dense<0.000000e+00> : vector<8xf32>
    %115 = vector.multi_reduction <add>, %114, %cst_73 [1] : vector<8x8xf32> to vector<8xf32>
    %116 = vector.shape_cast %115 : vector<8xf32> to vector<8x1xf32>
    %cst_74 = arith.constant 1.000000e+00 : f32
    %117 = vector.broadcast %cst_74 : f32 to vector<8x1xf32>
    %118 = arith.divf %117, %116 : vector<8x1xf32>
    %119 = vector.broadcast %118 : vector<8x1xf32> to vector<8x8xf32>
    %120 = arith.mulf %114, %119 : vector<8x8xf32>
    %121 = arith.truncf %120 : vector<8x8xf32> to vector<8x8xbf16>
    %cst_75 = arith.constant dense<0.000000e+00> : vector<8x8xf32>
    %122 = tpu.matmul %121, %107, %cst_75 {dimension_numbers = #tpu.dot_dimension_numbers<[1], [0], [0], [1], [0, 0, 1, 1], [], []>} : vector<8x8xbf16>, vector<8x8xbf16>, vector<8x8xf32> -> vector<8x8xf32>
    %123 = arith.truncf %122 : vector<8x8xf32> to vector<8x8xbf16>
    %124 = vector.extract_strided_slice %6 {offsets = [24, 0], sizes = [8, 32], strides = [1, 1]} : vector<32x32xbf16> to vector<8x32xbf16>
    %cst_76 = arith.constant dense<0.000000e+00> : vector<8x32xf32>
    %125 = tpu.matmul %123, %124, %cst_76 {dimension_numbers = #tpu.dot_dimension_numbers<[1], [0], [0], [1], [0, 0, 1, 1], [], []>} : vector<8x8xbf16>, vector<8x32xbf16>, vector<8x32xf32> -> vector<8x32xf32>
    %126 = arith.addf %104, %125 : vector<8x32xf32>
    %cst_77 = arith.constant dense<0.000000e+00> : vector<8xf32>
    %127 = vector.multi_reduction <add>, %18, %cst_77 [1] : vector<8x32xf32> to vector<8xf32>
    %128 = vector.shape_cast %127 : vector<8xf32> to vector<8x1xf32>
    %cst_78 = arith.constant 3.200000e+01 : f32
    %129 = vector.broadcast %cst_78 : f32 to vector<8x1xf32>
    %130 = arith.divf %128, %129 : vector<8x1xf32>
    %131 = vector.broadcast %130 : vector<8x1xf32> to vector<8x32xf32>
    %132 = arith.subf %18, %131 : vector<8x32xf32>
    %133 = arith.mulf %132, %132 : vector<8x32xf32>
    %cst_79 = arith.constant dense<0.000000e+00> : vector<8xf32>
    %134 = vector.multi_reduction <add>, %133, %cst_79 [1] : vector<8x32xf32> to vector<8xf32>
    %135 = vector.shape_cast %134 : vector<8xf32> to vector<8x1xf32>
    %cst_80 = arith.constant 3.200000e+01 : f32
    %136 = vector.broadcast %cst_80 : f32 to vector<8x1xf32>
    %137 = arith.divf %135, %136 : vector<8x1xf32>
    %138 = vector.broadcast %130 : vector<8x1xf32> to vector<8x32xf32>
    %139 = arith.subf %18, %138 : vector<8x32xf32>
    %cst_81 = arith.constant 9.99999997E-7 : f32
    %140 = vector.broadcast %cst_81 : f32 to vector<8x1xf32>
    %141 = arith.addf %137, %140 : vector<8x1xf32>
    %142 = math.rsqrt %141 : vector<8x1xf32>
    %143 = vector.broadcast %142 : vector<8x1xf32> to vector<8x32xf32>
    %144 = arith.mulf %139, %143 : vector<8x32xf32>
    %145 = vector.broadcast %0 : vector<1x32xf32> to vector<8x32xf32>
    %146 = arith.mulf %144, %145 : vector<8x32xf32>
    %147 = vector.broadcast %1 : vector<1x32xf32> to vector<8x32xf32>
    %148 = arith.addf %146, %147 : vector<8x32xf32>
    %149 = arith.truncf %148 : vector<8x32xf32> to vector<8x32xbf16>
    %cst_82 = arith.constant dense<0.000000e+00> : vector<8x64xf32>
    %150 = tpu.matmul %149, %9, %cst_82 {dimension_numbers = #tpu.dot_dimension_numbers<[1], [0], [0], [1], [0, 0, 1, 1], [], []>} : vector<8x32xbf16>, vector<32x64xbf16>, vector<8x64xf32> -> vector<8x64xf32>
    %151 = vector.broadcast %10 : vector<1x64xf32> to vector<8x64xf32>
    %152 = arith.addf %150, %151 : vector<8x64xf32>
    %cst_83 = arith.constant 0.000000e+00 : f32
    %153 = vector.broadcast %cst_83 : f32 to vector<8x64xf32>
    %154 = arith.maximumf %152, %153 : vector<8x64xf32>
    %155 = arith.truncf %154 : vector<8x64xf32> to vector<8x64xbf16>
    %cst_84 = arith.constant dense<0.000000e+00> : vector<8x32xf32>
    %156 = tpu.matmul %155, %11, %cst_84 {dimension_numbers = #tpu.dot_dimension_numbers<[1], [0], [0], [1], [0, 0, 1, 1], [], []>} : vector<8x64xbf16>, vector<64x32xbf16>, vector<8x32xf32> -> vector<8x32xf32>
    %157 = vector.broadcast %12 : vector<1x32xf32> to vector<8x32xf32>
    %158 = arith.addf %156, %157 : vector<8x32xf32>
    %159 = arith.addf %126, %158 : vector<8x32xf32>
    %160 = arith.addf %18, %159 : vector<8x32xf32>
    %cst_85 = arith.constant dense<0.000000e+00> : vector<8xf32>
    %161 = vector.multi_reduction <add>, %160, %cst_85 [1] : vector<8x32xf32> to vector<8xf32>
    %162 = vector.shape_cast %161 : vector<8xf32> to vector<8x1xf32>
    %cst_86 = arith.constant 3.200000e+01 : f32
    %163 = vector.broadcast %cst_86 : f32 to vector<8x1xf32>
    %164 = arith.divf %162, %163 : vector<8x1xf32>
    %165 = vector.broadcast %164 : vector<8x1xf32> to vector<8x32xf32>
    %166 = arith.subf %160, %165 : vector<8x32xf32>
    %167 = arith.mulf %166, %166 : vector<8x32xf32>
    %cst_87 = arith.constant dense<0.000000e+00> : vector<8xf32>
    %168 = vector.multi_reduction <add>, %167, %cst_87 [1] : vector<8x32xf32> to vector<8xf32>
    %169 = vector.shape_cast %168 : vector<8xf32> to vector<8x1xf32>
    %cst_88 = arith.constant 3.200000e+01 : f32
    %170 = vector.broadcast %cst_88 : f32 to vector<8x1xf32>
    %171 = arith.divf %169, %170 : vector<8x1xf32>
    %172 = vector.broadcast %164 : vector<8x1xf32> to vector<8x32xf32>
    %173 = arith.subf %160, %172 : vector<8x32xf32>
    %cst_89 = arith.constant 9.99999997E-7 : f32
    %174 = vector.broadcast %cst_89 : f32 to vector<8x1xf32>
    %175 = arith.addf %171, %174 : vector<8x1xf32>
    %176 = math.rsqrt %175 : vector<8x1xf32>
    %177 = vector.broadcast %176 : vector<8x1xf32> to vector<8x32xf32>
    %178 = arith.mulf %173, %177 : vector<8x32xf32>
    %179 = vector.broadcast %2 : vector<1x32xf32> to vector<8x32xf32>
    %180 = arith.mulf %178, %179 : vector<8x32xf32>
    %181 = vector.broadcast %3 : vector<1x32xf32> to vector<8x32xf32>
    %182 = arith.addf %180, %181 : vector<8x32xf32>
    %183 = arith.truncf %182 : vector<8x32xf32> to vector<8x32xbf16>
    %cst_90 = arith.constant dense<0.000000e+00> : vector<8x32xf32>
    %184 = tpu.matmul %183, %7, %cst_90 {dimension_numbers = #tpu.dot_dimension_numbers<[1], [0], [0], [1], [0, 0, 1, 1], [], []>} : vector<8x32xbf16>, vector<32x32xbf16>, vector<8x32xf32> -> vector<8x32xf32>
    %cst_91 = arith.constant 8.000000e+00 : f32
    %185 = math.rsqrt %cst_91 : f32
    %186 = vector.broadcast %185 : f32 to vector<8x32xf32>
    %187 = arith.mulf %184, %186 : vector<8x32xf32>
    %188 = arith.truncf %187 : vector<8x32xf32> to vector<8x32xbf16>
    %cst_92 = arith.constant 0.000000e+00 : f32
    %189 = vector.broadcast %cst_92 : f32 to vector<8x32xf32>
    %190 = vector.extract_strided_slice %188 {offsets = [0, 0], sizes = [8, 8], strides = [1, 1]} : vector<8x32xbf16> to vector<8x8xbf16>
    %191 = vector.extract_strided_slice %35 {offsets = [0, 0], sizes = [8, 8], strides = [1, 1]} : vector<8x32xbf16> to vector<8x8xbf16>
    %192 = vector.extract_strided_slice %37 {offsets = [0, 0], sizes = [8, 8], strides = [1, 1]} : vector<8x32xbf16> to vector<8x8xbf16>
    %cst_93 = arith.constant dense<0.000000e+00> : vector<8x8xf32>
    %193 = tpu.matmul %190, %191, %cst_93 {dimension_numbers = #tpu.dot_dimension_numbers<[1], [1], [0], [0], [0, 0, 1, 0], [], []>} : vector<8x8xbf16>, vector<8x8xbf16>, vector<8x8xf32> -> vector<8x8xf32>
    %cst_94 = arith.constant dense<0xFF800000> : vector<8xf32>
    %194 = vector.multi_reduction <maximumf>, %193, %cst_94 [1] : vector<8x8xf32> to vector<8xf32>
    %195 = vector.shape_cast %194 : vector<8xf32> to vector<8x1xf32>
    %196 = vector.broadcast %195 : vector<8x1xf32> to vector<8x8xf32>
    %197 = arith.subf %193, %196 : vector<8x8xf32>
    %198 = math.exp %197 : vector<8x8xf32>
    %cst_95 = arith.constant dense<0.000000e+00> : vector<8xf32>
    %199 = vector.multi_reduction <add>, %198, %cst_95 [1] : vector<8x8xf32> to vector<8xf32>
    %200 = vector.shape_cast %199 : vector<8xf32> to vector<8x1xf32>
    %cst_96 = arith.constant 1.000000e+00 : f32
    %201 = vector.broadcast %cst_96 : f32 to vector<8x1xf32>
    %202 = arith.divf %201, %200 : vector<8x1xf32>
    %203 = vector.broadcast %202 : vector<8x1xf32> to vector<8x8xf32>
    %204 = arith.mulf %198, %203 : vector<8x8xf32>
    %205 = arith.truncf %204 : vector<8x8xf32> to vector<8x8xbf16>
    %cst_97 = arith.constant dense<0.000000e+00> : vector<8x8xf32>
    %206 = tpu.matmul %205, %192, %cst_97 {dimension_numbers = #tpu.dot_dimension_numbers<[1], [0], [0], [1], [0, 0, 1, 1], [], []>} : vector<8x8xbf16>, vector<8x8xbf16>, vector<8x8xf32> -> vector<8x8xf32>
    %207 = arith.truncf %206 : vector<8x8xf32> to vector<8x8xbf16>
    %208 = vector.extract_strided_slice %8 {offsets = [0, 0], sizes = [8, 32], strides = [1, 1]} : vector<32x32xbf16> to vector<8x32xbf16>
    %cst_98 = arith.constant dense<0.000000e+00> : vector<8x32xf32>
    %209 = tpu.matmul %207, %208, %cst_98 {dimension_numbers = #tpu.dot_dimension_numbers<[1], [0], [0], [1], [0, 0, 1, 1], [], []>} : vector<8x8xbf16>, vector<8x32xbf16>, vector<8x32xf32> -> vector<8x32xf32>
    %210 = arith.addf %189, %209 : vector<8x32xf32>
    %211 = vector.extract_strided_slice %188 {offsets = [0, 8], sizes = [8, 8], strides = [1, 1]} : vector<8x32xbf16> to vector<8x8xbf16>
    %212 = vector.extract_strided_slice %35 {offsets = [0, 8], sizes = [8, 8], strides = [1, 1]} : vector<8x32xbf16> to vector<8x8xbf16>
    %213 = vector.extract_strided_slice %37 {offsets = [0, 8], sizes = [8, 8], strides = [1, 1]} : vector<8x32xbf16> to vector<8x8xbf16>
    %cst_99 = arith.constant dense<0.000000e+00> : vector<8x8xf32>
    %214 = tpu.matmul %211, %212, %cst_99 {dimension_numbers = #tpu.dot_dimension_numbers<[1], [1], [0], [0], [0, 0, 1, 0], [], []>} : vector<8x8xbf16>, vector<8x8xbf16>, vector<8x8xf32> -> vector<8x8xf32>
    %cst_100 = arith.constant dense<0xFF800000> : vector<8xf32>
    %215 = vector.multi_reduction <maximumf>, %214, %cst_100 [1] : vector<8x8xf32> to vector<8xf32>
    %216 = vector.shape_cast %215 : vector<8xf32> to vector<8x1xf32>
    %217 = vector.broadcast %216 : vector<8x1xf32> to vector<8x8xf32>
    %218 = arith.subf %214, %217 : vector<8x8xf32>
    %219 = math.exp %218 : vector<8x8xf32>
    %cst_101 = arith.constant dense<0.000000e+00> : vector<8xf32>
    %220 = vector.multi_reduction <add>, %219, %cst_101 [1] : vector<8x8xf32> to vector<8xf32>
    %221 = vector.shape_cast %220 : vector<8xf32> to vector<8x1xf32>
    %cst_102 = arith.constant 1.000000e+00 : f32
    %222 = vector.broadcast %cst_102 : f32 to vector<8x1xf32>
    %223 = arith.divf %222, %221 : vector<8x1xf32>
    %224 = vector.broadcast %223 : vector<8x1xf32> to vector<8x8xf32>
    %225 = arith.mulf %219, %224 : vector<8x8xf32>
    %226 = arith.truncf %225 : vector<8x8xf32> to vector<8x8xbf16>
    %cst_103 = arith.constant dense<0.000000e+00> : vector<8x8xf32>
    %227 = tpu.matmul %226, %213, %cst_103 {dimension_numbers = #tpu.dot_dimension_numbers<[1], [0], [0], [1], [0, 0, 1, 1], [], []>} : vector<8x8xbf16>, vector<8x8xbf16>, vector<8x8xf32> -> vector<8x8xf32>
    %228 = arith.truncf %227 : vector<8x8xf32> to vector<8x8xbf16>
    %229 = vector.extract_strided_slice %8 {offsets = [8, 0], sizes = [8, 32], strides = [1, 1]} : vector<32x32xbf16> to vector<8x32xbf16>
    %cst_104 = arith.constant dense<0.000000e+00> : vector<8x32xf32>
    %230 = tpu.matmul %228, %229, %cst_104 {dimension_numbers = #tpu.dot_dimension_numbers<[1], [0], [0], [1], [0, 0, 1, 1], [], []>} : vector<8x8xbf16>, vector<8x32xbf16>, vector<8x32xf32> -> vector<8x32xf32>
    %231 = arith.addf %210, %230 : vector<8x32xf32>
    %232 = vector.extract_strided_slice %188 {offsets = [0, 16], sizes = [8, 8], strides = [1, 1]} : vector<8x32xbf16> to vector<8x8xbf16>
    %233 = vector.extract_strided_slice %35 {offsets = [0, 16], sizes = [8, 8], strides = [1, 1]} : vector<8x32xbf16> to vector<8x8xbf16>
    %234 = vector.extract_strided_slice %37 {offsets = [0, 16], sizes = [8, 8], strides = [1, 1]} : vector<8x32xbf16> to vector<8x8xbf16>
    %cst_105 = arith.constant dense<0.000000e+00> : vector<8x8xf32>
    %235 = tpu.matmul %232, %233, %cst_105 {dimension_numbers = #tpu.dot_dimension_numbers<[1], [1], [0], [0], [0, 0, 1, 0], [], []>} : vector<8x8xbf16>, vector<8x8xbf16>, vector<8x8xf32> -> vector<8x8xf32>
    %cst_106 = arith.constant dense<0xFF800000> : vector<8xf32>
    %236 = vector.multi_reduction <maximumf>, %235, %cst_106 [1] : vector<8x8xf32> to vector<8xf32>
    %237 = vector.shape_cast %236 : vector<8xf32> to vector<8x1xf32>
    %238 = vector.broadcast %237 : vector<8x1xf32> to vector<8x8xf32>
    %239 = arith.subf %235, %238 : vector<8x8xf32>
    %240 = math.exp %239 : vector<8x8xf32>
    %cst_107 = arith.constant dense<0.000000e+00> : vector<8xf32>
    %241 = vector.multi_reduction <add>, %240, %cst_107 [1] : vector<8x8xf32> to vector<8xf32>
    %242 = vector.shape_cast %241 : vector<8xf32> to vector<8x1xf32>
    %cst_108 = arith.constant 1.000000e+00 : f32
    %243 = vector.broadcast %cst_108 : f32 to vector<8x1xf32>
    %244 = arith.divf %243, %242 : vector<8x1xf32>
    %245 = vector.broadcast %244 : vector<8x1xf32> to vector<8x8xf32>
    %246 = arith.mulf %240, %245 : vector<8x8xf32>
    %247 = arith.truncf %246 : vector<8x8xf32> to vector<8x8xbf16>
    %cst_109 = arith.constant dense<0.000000e+00> : vector<8x8xf32>
    %248 = tpu.matmul %247, %234, %cst_109 {dimension_numbers = #tpu.dot_dimension_numbers<[1], [0], [0], [1], [0, 0, 1, 1], [], []>} : vector<8x8xbf16>, vector<8x8xbf16>, vector<8x8xf32> -> vector<8x8xf32>
    %249 = arith.truncf %248 : vector<8x8xf32> to vector<8x8xbf16>
    %250 = vector.extract_strided_slice %8 {offsets = [16, 0], sizes = [8, 32], strides = [1, 1]} : vector<32x32xbf16> to vector<8x32xbf16>
    %cst_110 = arith.constant dense<0.000000e+00> : vector<8x32xf32>
    %251 = tpu.matmul %249, %250, %cst_110 {dimension_numbers = #tpu.dot_dimension_numbers<[1], [0], [0], [1], [0, 0, 1, 1], [], []>} : vector<8x8xbf16>, vector<8x32xbf16>, vector<8x32xf32> -> vector<8x32xf32>
    %252 = arith.addf %231, %251 : vector<8x32xf32>
    %253 = vector.extract_strided_slice %188 {offsets = [0, 24], sizes = [8, 8], strides = [1, 1]} : vector<8x32xbf16> to vector<8x8xbf16>
    %254 = vector.extract_strided_slice %35 {offsets = [0, 24], sizes = [8, 8], strides = [1, 1]} : vector<8x32xbf16> to vector<8x8xbf16>
    %255 = vector.extract_strided_slice %37 {offsets = [0, 24], sizes = [8, 8], strides = [1, 1]} : vector<8x32xbf16> to vector<8x8xbf16>
    %cst_111 = arith.constant dense<0.000000e+00> : vector<8x8xf32>
    %256 = tpu.matmul %253, %254, %cst_111 {dimension_numbers = #tpu.dot_dimension_numbers<[1], [1], [0], [0], [0, 0, 1, 0], [], []>} : vector<8x8xbf16>, vector<8x8xbf16>, vector<8x8xf32> -> vector<8x8xf32>
    %cst_112 = arith.constant dense<0xFF800000> : vector<8xf32>
    %257 = vector.multi_reduction <maximumf>, %256, %cst_112 [1] : vector<8x8xf32> to vector<8xf32>
    %258 = vector.shape_cast %257 : vector<8xf32> to vector<8x1xf32>
    %259 = vector.broadcast %258 : vector<8x1xf32> to vector<8x8xf32>
    %260 = arith.subf %256, %259 : vector<8x8xf32>
    %261 = math.exp %260 : vector<8x8xf32>
    %cst_113 = arith.constant dense<0.000000e+00> : vector<8xf32>
    %262 = vector.multi_reduction <add>, %261, %cst_113 [1] : vector<8x8xf32> to vector<8xf32>
    %263 = vector.shape_cast %262 : vector<8xf32> to vector<8x1xf32>
    %cst_114 = arith.constant 1.000000e+00 : f32
    %264 = vector.broadcast %cst_114 : f32 to vector<8x1xf32>
    %265 = arith.divf %264, %263 : vector<8x1xf32>
    %266 = vector.broadcast %265 : vector<8x1xf32> to vector<8x8xf32>
    %267 = arith.mulf %261, %266 : vector<8x8xf32>
    %268 = arith.truncf %267 : vector<8x8xf32> to vector<8x8xbf16>
    %cst_115 = arith.constant dense<0.000000e+00> : vector<8x8xf32>
    %269 = tpu.matmul %268, %255, %cst_115 {dimension_numbers = #tpu.dot_dimension_numbers<[1], [0], [0], [1], [0, 0, 1, 1], [], []>} : vector<8x8xbf16>, vector<8x8xbf16>, vector<8x8xf32> -> vector<8x8xf32>
    %270 = arith.truncf %269 : vector<8x8xf32> to vector<8x8xbf16>
    %271 = vector.extract_strided_slice %8 {offsets = [24, 0], sizes = [8, 32], strides = [1, 1]} : vector<32x32xbf16> to vector<8x32xbf16>
    %cst_116 = arith.constant dense<0.000000e+00> : vector<8x32xf32>
    %272 = tpu.matmul %270, %271, %cst_116 {dimension_numbers = #tpu.dot_dimension_numbers<[1], [0], [0], [1], [0, 0, 1, 1], [], []>} : vector<8x8xbf16>, vector<8x32xbf16>, vector<8x32xf32> -> vector<8x32xf32>
    %273 = arith.addf %252, %272 : vector<8x32xf32>
    %cst_117 = arith.constant dense<0.000000e+00> : vector<8xf32>
    %274 = vector.multi_reduction <add>, %160, %cst_117 [1] : vector<8x32xf32> to vector<8xf32>
    %275 = vector.shape_cast %274 : vector<8xf32> to vector<8x1xf32>
    %cst_118 = arith.constant 3.200000e+01 : f32
    %276 = vector.broadcast %cst_118 : f32 to vector<8x1xf32>
    %277 = arith.divf %275, %276 : vector<8x1xf32>
    %278 = vector.broadcast %277 : vector<8x1xf32> to vector<8x32xf32>
    %279 = arith.subf %160, %278 : vector<8x32xf32>
    %280 = arith.mulf %279, %279 : vector<8x32xf32>
    %cst_119 = arith.constant dense<0.000000e+00> : vector<8xf32>
    %281 = vector.multi_reduction <add>, %280, %cst_119 [1] : vector<8x32xf32> to vector<8xf32>
    %282 = vector.shape_cast %281 : vector<8xf32> to vector<8x1xf32>
    %cst_120 = arith.constant 3.200000e+01 : f32
    %283 = vector.broadcast %cst_120 : f32 to vector<8x1xf32>
    %284 = arith.divf %282, %283 : vector<8x1xf32>
    %285 = vector.broadcast %277 : vector<8x1xf32> to vector<8x32xf32>
    %286 = arith.subf %160, %285 : vector<8x32xf32>
    %cst_121 = arith.constant 9.99999997E-7 : f32
    %287 = vector.broadcast %cst_121 : f32 to vector<8x1xf32>
    %288 = arith.addf %284, %287 : vector<8x1xf32>
    %289 = math.rsqrt %288 : vector<8x1xf32>
    %290 = vector.broadcast %289 : vector<8x1xf32> to vector<8x32xf32>
    %291 = arith.mulf %286, %290 : vector<8x32xf32>
    %292 = vector.broadcast %4 : vector<1x32xf32> to vector<8x32xf32>
    %293 = arith.mulf %291, %292 : vector<8x32xf32>
    %294 = vector.broadcast %5 : vector<1x32xf32> to vector<8x32xf32>
    %295 = arith.addf %293, %294 : vector<8x32xf32>
    %296 = arith.truncf %295 : vector<8x32xf32> to vector<8x32xbf16>
    %cst_122 = arith.constant dense<0.000000e+00> : vector<8x64xf32>
    %297 = tpu.matmul %296, %13, %cst_122 {dimension_numbers = #tpu.dot_dimension_numbers<[1], [0], [0], [1], [0, 0, 1, 1], [], []>} : vector<8x32xbf16>, vector<32x64xbf16>, vector<8x64xf32> -> vector<8x64xf32>
    %298 = vector.broadcast %14 : vector<1x64xf32> to vector<8x64xf32>
    %299 = arith.addf %297, %298 : vector<8x64xf32>
    %cst_123 = arith.constant 0.000000e+00 : f32
    %300 = vector.broadcast %cst_123 : f32 to vector<8x64xf32>
    %301 = arith.maximumf %299, %300 : vector<8x64xf32>
    %302 = arith.truncf %301 : vector<8x64xf32> to vector<8x64xbf16>
    %cst_124 = arith.constant dense<0.000000e+00> : vector<8x32xf32>
    %303 = tpu.matmul %302, %15, %cst_124 {dimension_numbers = #tpu.dot_dimension_numbers<[1], [0], [0], [1], [0, 0, 1, 1], [], []>} : vector<8x64xbf16>, vector<64x32xbf16>, vector<8x32xf32> -> vector<8x32xf32>
    %304 = vector.broadcast %16 : vector<1x32xf32> to vector<8x32xf32>
    %305 = arith.addf %303, %304 : vector<8x32xf32>
    %306 = arith.addf %305, %273 : vector<8x32xf32>
    %307 = arith.addf %160, %306 : vector<8x32xf32>
    %c0_125 = arith.constant 0 : index
    %c0_126 = arith.constant 0 : index
    %c0_127 = arith.constant 0 : index
    %308 = vector.load %arg25[%c0_125, %c0_126, %c0_127] : memref<1x8x32xf32, #tpu.memory_space<vmem>>, vector<1x8x32xf32>
    %309 = vector.shape_cast %308 : vector<1x8x32xf32> to vector<8x32xf32>
    %310 = vector.shape_cast %307 : vector<8x32xf32> to vector<1x8x32xf32>
    tpu.vector_store %arg25[%c0_125, %c0_126, %c0_127], %310 {strides = array<i32>} : memref<1x8x32xf32, #tpu.memory_space<vmem>>, vector<1x8x32xf32>,
    return
  }
  func.func @transform_0(%arg0: i32, %arg1: i32) -> (i32, i32, i32) {
    %c0_i32 = arith.constant 0 : i32
    %c0_i32_0 = arith.constant 0 : i32
    return %arg0, %arg1, %c0_i32 : i32, i32, i32
  }
  func.func @transform_1(%arg0: i32, %arg1: i32) -> (i32, i32, i32) {
    %c0_i32 = arith.constant 0 : i32
    %c0_i32_0 = arith.constant 0 : i32
    return %arg0, %arg1, %c0_i32 : i32, i32, i32
  }
  func.func @transform_2(%arg0: i32, %arg1: i32) -> (i32, i32, i32) {
    %c0_i32 = arith.constant 0 : i32
    %c0_i32_0 = arith.constant 0 : i32
    %c0_i32_1 = arith.constant 0 : i32
    return %arg0, %c0_i32, %c0_i32_0 : i32, i32, i32
  }
  func.func @transform_3(%arg0: i32, %arg1: i32) -> (i32, i32, i32) {
    %c0_i32 = arith.constant 0 : i32
    %c0_i32_0 = arith.constant 0 : i32
    %c0_i32_1 = arith.constant 0 : i32
    return %arg0, %c0_i32, %c0_i32_0 : i32, i32, i32
  }
  func.func @transform_4(%arg0: i32, %arg1: i32) -> (i32, i32, i32) {
    %c0_i32 = arith.constant 0 : i32
    %c0_i32_0 = arith.constant 0 : i32
    %c0_i32_1 = arith.constant 0 : i32
    return %arg0, %c0_i32, %c0_i32_0 : i32, i32, i32
  }
  func.func @transform_5(%arg0: i32, %arg1: i32) -> (i32, i32, i32) {
    %c0_i32 = arith.constant 0 : i32
    %c0_i32_0 = arith.constant 0 : i32
    %c0_i32_1 = arith.constant 0 : i32
    return %arg0, %c0_i32, %c0_i32_0 : i32, i32, i32
  }
  func.func @transform_6(%arg0: i32, %arg1: i32) -> (i32, i32) {
    %c0_i32 = arith.constant 0 : i32
    %c0_i32_0 = arith.constant 0 : i32
    %c0_i32_1 = arith.constant 0 : i32
    return %c0_i32, %c0_i32_0 : i32, i32
  }
  func.func @transform_7(%arg0: i32, %arg1: i32) -> (i32, i32) {
    %c0_i32 = arith.constant 0 : i32
    %c0_i32_0 = arith.constant 0 : i32
    %c0_i32_1 = arith.constant 0 : i32
    return %c0_i32, %c0_i32_0 : i32, i32
  }
  func.func @transform_8(%arg0: i32, %arg1: i32) -> (i32, i32) {
    %c0_i32 = arith.constant 0 : i32
    %c0_i32_0 = arith.constant 0 : i32
    %c0_i32_1 = arith.constant 0 : i32
    return %c0_i32, %c0_i32_0 : i32, i32
  }
  func.func @transform_9(%arg0: i32, %arg1: i32) -> (i32, i32) {
    %c0_i32 = arith.constant 0 : i32
    %c0_i32_0 = arith.constant 0 : i32
    %c0_i32_1 = arith.constant 0 : i32
    return %c0_i32, %c0_i32_0 : i32, i32
  }
  func.func @transform_10(%arg0: i32, %arg1: i32) -> (i32, i32) {
    %c0_i32 = arith.constant 0 : i32
    %c0_i32_0 = arith.constant 0 : i32
    %c0_i32_1 = arith.constant 0 : i32
    return %c0_i32, %c0_i32_0 : i32, i32
  }
  func.func @transform_11(%arg0: i32, %arg1: i32) -> (i32, i32) {
    %c0_i32 = arith.constant 0 : i32
    %c0_i32_0 = arith.constant 0 : i32
    %c0_i32_1 = arith.constant 0 : i32
    return %c0_i32, %c0_i32_0 : i32, i32
  }
  func.func @transform_12(%arg0: i32, %arg1: i32) -> (i32, i32) {
    %c0_i32 = arith.constant 0 : i32
    %c0_i32_0 = arith.constant 0 : i32
    %c0_i32_1 = arith.constant 0 : i32
    return %c0_i32, %c0_i32_0 : i32, i32
  }
  func.func @transform_13(%arg0: i32, %arg1: i32) -> (i32, i32) {
    %c0_i32 = arith.constant 0 : i32
    %c0_i32_0 = arith.constant 0 : i32
    %c0_i32_1 = arith.constant 0 : i32
    return %c0_i32, %c0_i32_0 : i32, i32
  }
  func.func @transform_14(%arg0: i32, %arg1: i32) -> (i32, i32) {
    %c0_i32 = arith.constant 0 : i32
    %c0_i32_0 = arith.constant 0 : i32
    %c0_i32_1 = arith.constant 0 : i32
    return %c0_i32, %c0_i32_0 : i32, i32
  }
  func.func @transform_15(%arg0: i32, %arg1: i32) -> (i32, i32) {
    %c0_i32 = arith.constant 0 : i32
    %c0_i32_0 = arith.constant 0 : i32
    %c0_i32_1 = arith.constant 0 : i32
    return %c0_i32, %c0_i32_0 : i32, i32
  }
  func.func @transform_16(%arg0: i32, %arg1: i32) -> (i32, i32) {
    %c0_i32 = arith.constant 0 : i32
    %c0_i32_0 = arith.constant 0 : i32
    %c0_i32_1 = arith.constant 0 : i32
    return %c0_i32, %c0_i32_0 : i32, i32
  }
  func.func @transform_17(%arg0: i32, %arg1: i32) -> (i32, i32) {
    %c0_i32 = arith.constant 0 : i32
    %c0_i32_0 = arith.constant 0 : i32
    %c0_i32_1 = arith.constant 0 : i32
    return %c0_i32, %c0_i32_0 : i32, i32
  }
  func.func @transform_18(%arg0: i32, %arg1: i32) -> (i32, i32) {
    %c0_i32 = arith.constant 0 : i32
    %c0_i32_0 = arith.constant 0 : i32
    %c0_i32_1 = arith.constant 0 : i32
    return %c0_i32, %c0_i32_0 : i32, i32
  }
  func.func @transform_19(%arg0: i32, %arg1: i32) -> (i32, i32) {
    %c0_i32 = arith.constant 0 : i32
    %c0_i32_0 = arith.constant 0 : i32
    %c0_i32_1 = arith.constant 0 : i32
    return %c0_i32, %c0_i32_0 : i32, i32
  }
  func.func @transform_20(%arg0: i32, %arg1: i32) -> (i32, i32) {
    %c0_i32 = arith.constant 0 : i32
    %c0_i32_0 = arith.constant 0 : i32
    %c0_i32_1 = arith.constant 0 : i32
    return %c0_i32, %c0_i32_0 : i32, i32
  }
  func.func @transform_21(%arg0: i32, %arg1: i32) -> (i32, i32) {
    %c0_i32 = arith.constant 0 : i32
    %c0_i32_0 = arith.constant 0 : i32
    %c0_i32_1 = arith.constant 0 : i32
    return %c0_i32, %c0_i32_0 : i32, i32
  }
  func.func @transform_22(%arg0: i32, %arg1: i32) -> (i32, i32) {
    %c0_i32 = arith.constant 0 : i32
    %c0_i32_0 = arith.constant 0 : i32
    %c0_i32_1 = arith.constant 0 : i32
    return %c0_i32, %c0_i32_0 : i32, i32
  }
  func.func @transform_23(%arg0: i32, %arg1: i32) -> (i32, i32, i32) {
    %c0_i32 = arith.constant 0 : i32
    %c0_i32_0 = arith.constant 0 : i32
    return %arg0, %arg1, %c0_i32 : i32, i32, i32
  }
}

</mosaic_0001>

<llo_original>
// kernel: decoder_forward.8
$region0: #{decoder_forward.8}
  #allocation0 [shape = 'u32[]', space=smem, size = 0x4, offset = 0x4, fixed_abs, tag = 'smem constant byte address 0x4 - core index']
  #allocation1 [shape = 'u32[144,128]{1,0:T(1,128)}', space=vmem, size = 0x12000, scoped, tag = 'internal scratch']
  %s0 = inlined_call_operand.vmem [shape: f32[2,8,32], index: 0, kind: input, shape index: {}]
  %s1 = inlined_call_operand.vmem [shape: bf16[32,32], index: 1, kind: input, shape index: {}]
  %s2 = inlined_call_operand.vmem [shape: bf16[32,32], index: 2, kind: input, shape index: {}]
  %s3 = inlined_call_operand.vmem [shape: bf16[2,8,32], index: 3, kind: output, shape index: {0}]
  %s4 = inlined_call_operand.vmem [shape: bf16[2,8,32], index: 4, kind: output, shape index: {1}]
  %5 = xla_tuple %s3, %s4
  %s6 = sld [smem:[#allocation0]]
  $region53: #{decoder_forward.8} parent=0
    _
  %s8 = ssub.s32 1, %s6
  %s9 = scalar_select 0, %s8, %s6
  loop: start=0, step=1, limit=4
  $region2: #{decoder_forward.8} parent=0 // loop_pre_header
    _
  $region3: #{decoder_forward.8} parent=0 // loop_header
    %s11 = sphi 0, %s15
    %p12 = scmp.ge.s32.totalorder %s11, 4
    %s18 = sphi 0, %s30
    %s19 = sphi 0, %s26
    %s20 = sphi 0, %s18
    %s21 = sphi 0, %s19
    %s22 = sphi 0, %s20
    %s23 = sphi 0, %s21
    %s35 = sphi 0, %s37
    %s38 = sphi 0, %s35
    %s39 = sphi 0, %s38
    %s55 = sphi 0, %s39
    %s59 = sphi 0, %s59
    %s61 = sphi 0, %s59
    %s62 = sphi 0, %s61
    %s76 = sphi 0, %s62
    %s80 = sphi 0, %s80
    %s82 = sphi 0, %s80
    %s83 = sphi 0, %s82
    %s97 = sphi 0, %s83
    %s105 = sphi 0, %s107
    %s108 = sphi 0, %s105
    %s109 = sphi 0, %s108
    %s125 = sphi 0, %s109
    %s133 = sphi 0, %s135
    %s136 = sphi 0, %s133
    %s137 = sphi 0, %s136
    %s153 = sphi 0, %s137
  $region4: #{decoder_forward.8} parent=0 // loop_header_branch
    %14 = sbr.rel (%p12) target = $region8
  $region5: #{decoder_forward.8} parent=0 // loop_body
    %s16 = ssub.s32 %s11, 1
    %s17 = ssub.s32 %s11, 2
    %s24 = sadd.s32 1, %s19
    %p25 = scmp.ge.s32.totalorder %s24, 1
    %s26 = scalar_select %p25, 0, %s24
    %s27 = sadd.s32 1, %s18
    %s28 = scalar_select %p25, %s27, %s18
    %p29 = scmp.ge.s32.totalorder %s28, 2
    %s30 = scalar_select %p29, 0, %s28
    %s31 = ssub.s32 %s18, %s30
    %s32 = ssub.s32 %s19, %s26
    %s33 = sor.u32 %s31, %s32
    %p34 = scmp.eq.s32.totalorder %s33, 0
    %s36 = sadd.s32 %s35, 1
    %s37 = scalar_select %p34, %s35, %s36
    %p40 = pneg %p34
    %p41 = scmp.eq.s32.totalorder %s11, 1
    %p42 = por %p40, %p41
    %p43 = scmp.ne.s32.totalorder %s35, %s38
    %p44 = scmp.eq.s32.totalorder %s11, 0
    %p45 = por %p43, %p44
    %p46 = scmp.ne.s32.totalorder %s35, %s38
    %p47 = scmp.eq.s32.totalorder %s16, 1
    %p48 = por %p46, %p47
    %p49 = scmp.ne.s32.totalorder %s38, %s39
    %p50 = scmp.eq.s32.totalorder %s16, 0
    %p51 = por %p49, %p50
    %p52 = scmp.ne.s32.totalorder %s38, %s39
    %p53 = scmp.eq.s32.totalorder %s17, 1
    %p54 = por %p52, %p53
    %p56 = scmp.ne.s32.totalorder %s39, %s55
    %p57 = scmp.eq.s32.totalorder %s17, 0
    %p58 = por %p56, %p57
    %s60 = sadd.s32 %s59, 1
    %p63 = scmp.eq.s32.totalorder %s11, 1
    %p64 = scmp.ne.s32.totalorder %s59, %s61
    %p65 = scmp.eq.s32.totalorder %s11, 0
    %p66 = por %p64, %p65
    %p67 = scmp.ne.s32.totalorder %s59, %s61
    %p68 = scmp.eq.s32.totalorder %s16, 1
    %p69 = por %p67, %p68
    %p70 = scmp.ne.s32.totalorder %s61, %s62
    %p71 = scmp.eq.s32.totalorder %s16, 0
    %p72 = por %p70, %p71
    %p73 = scmp.ne.s32.totalorder %s61, %s62
    %p74 = scmp.eq.s32.totalorder %s17, 1
    %p75 = por %p73, %p74
    %p77 = scmp.ne.s32.totalorder %s62, %s76
    %p78 = scmp.eq.s32.totalorder %s17, 0
    %p79 = por %p77, %p78
    %s81 = sadd.s32 %s80, 1
    %p84 = scmp.eq.s32.totalorder %s11, 1
    %p85 = scmp.ne.s32.totalorder %s80, %s82
    %p86 = scmp.eq.s32.totalorder %s11, 0
    %p87 = por %p85, %p86
    %p88 = scmp.ne.s32.totalorder %s80, %s82
    %p89 = scmp.eq.s32.totalorder %s16, 1
    %p90 = por %p88, %p89
    %p91 = scmp.ne.s32.totalorder %s82, %s83
    %p92 = scmp.eq.s32.totalorder %s16, 0
    %p93 = por %p91, %p92
    %p94 = scmp.ne.s32.totalorder %s82, %s83
    %p95 = scmp.eq.s32.totalorder %s17, 1
    %p96 = por %p94, %p95
    %p98 = scmp.ne.s32.totalorder %s83, %s97
    %p99 = scmp.eq.s32.totalorder %s17, 0
    %p100 = por %p98, %p99
    %s101 = ssub.s32 %s18, %s30
    %s102 = ssub.s32 %s19, %s26
    %s103 = sor.u32 %s101, %s102
    %p104 = scmp.eq.s32.totalorder %s103, 0
    %s106 = sadd.s32 %s105, 1
    %s107 = scalar_select %p104, %s105, %s106
    %p110 = pneg %p104
    %p111 = scmp.eq.s32.totalorder %s11, 1
    %p112 = por %p110, %p111
    %p113 = scmp.ne.s32.totalorder %s105, %s108
    %p114 = scmp.eq.s32.totalorder %s11, 0
    %p115 = por %p113, %p114
    %p116 = scmp.ne.s32.totalorder %s105, %s108
    %p117 = scmp.eq.s32.totalorder %s16, 1
    %p118 = por %p116, %p117
    %p119 = scmp.ne.s32.totalorder %s108, %s109
    %p120 = scmp.eq.s32.totalorder %s16, 0
    %p121 = por %p119, %p120
    %p122 = scmp.ne.s32.totalorder %s108, %s109
    %p123 = scmp.eq.s32.totalorder %s17, 1
    %p124 = por %p122, %p123
    %p126 = scmp.ne.s32.totalorder %s109, %s125
    %p127 = scmp.eq.s32.totalorder %s17, 0
    %p128 = por %p126, %p127
    %s129 = ssub.s32 %s18, %s30
    %s130 = ssub.s32 %s19, %s26
    %s131 = sor.u32 %s129, %s130
    %p132 = scmp.eq.s32.totalorder %s131, 0
    %s134 = sadd.s32 %s133, 1
    %s135 = scalar_select %p132, %s133, %s134
    %p138 = pneg %p132
    %p139 = scmp.eq.s32.totalorder %s11, 1
    %p140 = por %p138, %p139
    %p141 = scmp.ne.s32.totalorder %s133, %s136
    %p142 = scmp.eq.s32.totalorder %s11, 0
    %p143 = por %p141, %p142
    %p144 = scmp.ne.s32.totalorder %s133, %s136
    %p145 = scmp.eq.s32.totalorder %s16, 1
    %p146 = por %p144, %p145
    %p147 = scmp.ne.s32.totalorder %s136, %s137
    %p148 = scmp.eq.s32.totalorder %s16, 0
    %p149 = por %p147, %p148
    %p150 = scmp.ne.s32.totalorder %s136, %s137
    %p151 = scmp.eq.s32.totalorder %s17, 1
    %p152 = por %p150, %p151
    %p154 = scmp.ne.s32.totalorder %s137, %s153
    %p155 = scmp.eq.s32.totalorder %s17, 0
    %p156 = por %p154, %p155
    %p157 = scmp.le.s32.totalorder 1, %s11
    %p158 = scmp.lt.s32.totalorder %s11, 3
    %p159 = pnand %p157, %p158
    %p160 = pneg %p159
    // Predicated region
    $region9: #{decoder_forward.8} parent=5 // pred_check
      _
    $region10: #{decoder_forward.8} parent=5 // pred_check_branch
      %162 = sbr.rel (%p159) target = $region12
    $region11: #{decoder_forward.8} parent=5 // pred_region
      %s163 = ssub.s32 %s11, 1
      // Predicated region
      $region13: #{decoder_forward.8} parent=11 // pred_check
        %p164 = pneg %p72
      $region14: #{decoder_forward.8} parent=11 // pred_check_branch
        %166 = sbr.rel (%p164) target = $region16
      $region15: #{decoder_forward.8} parent=11 // pred_region
        _
      $region16: #{decoder_forward.8} parent=11 // pred_fallthru
        _
      // Predicated region
      $region17: #{decoder_forward.8} parent=11 // pred_check
        %p167 = pneg %p93
      $region18: #{decoder_forward.8} parent=11 // pred_check_branch
        %169 = sbr.rel (%p167) target = $region20
      $region19: #{decoder_forward.8} parent=11 // pred_region
        _
      $region20: #{decoder_forward.8} parent=11 // pred_fallthru
        _
    $region12: #{decoder_forward.8} parent=5 // pred_fallthru
      _
    %p170 = scmp.lt.s32.totalorder %s11, 2
    // Predicated region
    $region21: #{decoder_forward.8} parent=5 // pred_check
      %p171 = pneg %p170
    $region22: #{decoder_forward.8} parent=5 // pred_check_branch
      %173 = sbr.rel (%p171) target = $region24
    $region23: #{decoder_forward.8} parent=5 // pred_region
      // Predicated region
      $region25: #{decoder_forward.8} parent=23 // pred_check
        %p174 = pneg %p45
      $region26: #{decoder_forward.8} parent=23 // pred_check_branch
        %176 = sbr.rel (%p174) target = $region28
      $region27: #{decoder_forward.8} parent=23 // pred_region
        %p177 = scmp.lt.s32.totalorder %s18, 1
        %s178 = scalar_select %p177, %s18, 1
        %p179 = scmp.lt.s32.totalorder %s19, 0
        %s180 = scalar_select %p179, %s19, 0
        %s181 = sadd.s32 %s180, %s178
        %s182 = smul.addr %s181, 8
        %s183 = scalar_lea.vmem %s0, %s182
      $region28: #{decoder_forward.8} parent=23 // pred_fallthru
        _
    $region24: #{decoder_forward.8} parent=5 // pred_fallthru
      _
    %p184 = scmp.le.s32.totalorder 1, %s11
    %p185 = scmp.lt.s32.totalorder %s11, 3
    %p186 = pnand %p184, %p185
    %p187 = pneg %p186
    // Predicated region
    $region29: #{decoder_forward.8} parent=5 // pred_check
      _
    $region30: #{decoder_forward.8} parent=5 // pred_check_branch
      %189 = sbr.rel (%p186) target = $region32
    $region31: #{decoder_forward.8} parent=5 // pred_region
      %s190 = ssub.s32 %s11, 1
      %p191 = scmp.lt.s32.totalorder %s20, 1
      %s192 = scalar_select %p191, %s20, 1
      %p193 = scmp.lt.s32.totalorder %s21, 0
      %s194 = scalar_select %p193, %s21, 0
      %s195 = sadd.s32 %s194, %s192
      %s196 = smul.addr %s195, 8
      %s197 = scalar_lea.vmem %s0, %s196
      %p198 = pneg %p51
      %p199 = pneg %p48
      %p200 = pneg %p72
      %p201 = pneg %p69
      %p202 = pneg %p93
      %p203 = pneg %p90
      %p204 = pneg %p121
      %p205 = pneg %p118
      %p206 = scmp.lt.s32.totalorder %s20, 1
      %s207 = scalar_select %p206, %s20, 1
      %p208 = scmp.lt.s32.totalorder %s21, 0
      %s209 = scalar_select %p208, %s21, 0
      %s210 = sadd.s32 %s209, %s207
      %s211 = smul.addr %s210, 4
      %s212 = scalar_lea.vmem %s3, %s211
      %p213 = pneg %p149
      %p214 = pneg %p146
      %p215 = scmp.lt.s32.totalorder %s20, 1
      %s216 = scalar_select %p215, %s20, 1
      %p217 = scmp.lt.s32.totalorder %s21, 0
      %s218 = scalar_select %p217, %s21, 0
      %s219 = sadd.s32 %s218, %s216
      %s220 = smul.addr %s219, 4
      %s221 = scalar_lea.vmem %s4, %s220
      %p222 = scmp.lt.s32.totalorder %s20, 1
      %s223 = scalar_select %p222, %s20, 1
      %p224 = scmp.lt.s32.totalorder %s21, 0
      %s225 = scalar_select %p224, %s21, 0
      %s226 = sadd.s32 %s225, %s223
      %s227 = smul.addr %s226, 8
      %s228 = scalar_lea.vmem %s0, %s227
      %p229 = scmp.lt.s32.totalorder %s20, 1
      %s230 = scalar_select %p229, %s20, 1
      %p231 = scmp.lt.s32.totalorder %s21, 0
      %s232 = scalar_select %p231, %s21, 0
      %s233 = sadd.s32 %s232, %s230
      %s234 = smul.addr %s233, 4
      %s235 = scalar_lea.vmem %s3, %s234
      %p236 = scmp.lt.s32.totalorder %s20, 1
      %s237 = scalar_select %p236, %s20, 1
      %p238 = scmp.lt.s32.totalorder %s21, 0
      %s239 = scalar_select %p238, %s21, 0
      %s240 = sadd.s32 %s239, %s237
      %s241 = smul.addr %s240, 4
      %s242 = scalar_lea.vmem %s4, %s241
      %v244 = vld [vmem:[%s228] sm:$0xff]
      %v245 = vld [vmem:[%s1] sm:$0xf]
      %v246 = vld [vmem:[%s1 + $0x4] sm:$0xf]
      %v247 = vld [vmem:[%s1 + $0x8] sm:$0xf]
      %v248 = vld [vmem:[%s1 + $0xc] sm:$0xf]
      %v249 = vld [vmem:[%s2] sm:$0xf]
      %v250 = vld [vmem:[%s2 + $0x4] sm:$0xf]
      %v251 = vld [vmem:[%s2 + $0x8] sm:$0xf]
      %v252 = vld [vmem:[%s2 + $0xc] sm:$0xf]
      %v253 = vpack.c.bf16 %v244, %v244
      %v258 = vunpack.c.l.b16 %v245
      %v259 = vunpack.c.l.b16 %v246
      %v260 = vunpack.c.l.b16 %v247
      %v261 = vunpack.c.l.b16 %v248
      %v262 = vpack.c.b16 %v259, %v258
      %v263 = vpack.c.b16 %v261, %v260
      %vm266 = vcmask 261120
      %v268 = vsel %vm266, %v253, 0
      %270 = vmatprep.subr.bf16.mxu0 0
      %271 = vmatpush1.bf16.msra.mxu0 0
      %272 = vmatprep.subr.bf16.mxu0 0
      %273 = vmatpush1.bf16.msra.mxu0 0
      %274 = vmatprep.subr.bf16.mxu0 0
      %275 = vmatpush1.bf16.msra.mxu0 0
      %276 = vmatprep.subr.bf16.mxu0 0
      %277 = vmatpush1.bf16.msra.mxu0 0
      %278 = vmatprep.subr.bf16.mxu0 0
      %279 = vmatpush1.bf16.msra.mxu0 0
      %280 = vmatprep.subr.bf16.mxu0 0
      %281 = vmatpush1.bf16.msra.mxu0 0
      %282 = vmatprep.subr.bf16.mxu0 0
      %283 = vmatpush1.bf16.msra.mxu0 %v263
      %284 = vmatprep.subr.bf16.mxu0 0
      %285 = vmatpush1.bf16.msra.mxu0 %v262
      %286 = vmatprep.subr.bf16.mxu0 0
      %287 = vmatpush2.bf16.msra.mxu0 0
      %288 = vmatprep.subr.bf16.mxu0 0
      %289 = vmatpush2.bf16.msra.mxu0 0
      %290 = vmatprep.subr.bf16.mxu0 0
      %291 = vmatpush2.bf16.msra.mxu0 0
      %292 = vmatprep.subr.bf16.mxu0 0
      %293 = vmatpush2.bf16.msra.mxu0 0
      %294 = vmatprep.subr.bf16.mxu0 0
      %295 = vmatpush2.bf16.msra.mxu0 0
      %296 = vmatprep.subr.bf16.mxu0 0
      %297 = vmatpush2.bf16.msra.mxu0 0
      %298 = vmatprep.subr.bf16.mxu0 0
      %299 = vmatpush2.bf16.msra.mxu0 0
      %300 = vmatprep.subr.bf16.mxu0 0
      %301 = vmatpush2.bf16.msra.mxu0 0
      %302 = vmatprep.mubr.bf16.mxu0 0
      %303 = vmatmul.mubr.bf16.gmra.mxu0 %v268
      %v304 = vpop.f32.mrf.mxu0
      %v305 = vadd.f32 0.0, %v304
      %v306 = vpop.f32.mrf.mxu0
      %v307 = vpop.f32.mrf.mxu0
      %v308 = vpop.f32.mrf.mxu0
      %309 = vdwg.mxu0
      %v310 = vpack.c.bf16 %v305, %v305
      %v315 = vunpack.c.l.b16 %v249
      %v316 = vunpack.c.l.b16 %v250
      %v317 = vunpack.c.l.b16 %v251
      %v318 = vunpack.c.l.b16 %v252
      %v319 = vpack.c.b16 %v316, %v315
      %v320 = vpack.c.b16 %v318, %v317
      %323 = vmatprep.subr.bf16.mxu0 0
      %324 = vmatpush1.bf16.msra.mxu0 0
      %325 = vmatprep.subr.bf16.mxu0 0
      %326 = vmatpush1.bf16.msra.mxu0 0
      %327 = vmatprep.subr.bf16.mxu0 0
      %328 = vmatpush1.bf16.msra.mxu0 0
      %329 = vmatprep.subr.bf16.mxu0 0
      %330 = vmatpush1.bf16.msra.mxu0 0
      %331 = vmatprep.subr.bf16.mxu0 0
      %332 = vmatpush1.bf16.msra.mxu0 0
      %333 = vmatprep.subr.bf16.mxu0 0
      %334 = vmatpush1.bf16.msra.mxu0 0
      %335 = vmatprep.subr.bf16.mxu0 0
      %336 = vmatpush1.bf16.msra.mxu0 %v320
      %337 = vmatprep.subr.bf16.mxu0 0
      %338 = vmatpush1.bf16.msra.mxu0 %v319
      %339 = vmatprep.subr.bf16.mxu0 0
      %340 = vmatpush2.bf16.msra.mxu0 0
      %341 = vmatprep.subr.bf16.mxu0 0
      %342 = vmatpush2.bf16.msra.mxu0 0
      %343 = vmatprep.subr.bf16.mxu0 0
      %344 = vmatpush2.bf16.msra.mxu0 0
      %345 = vmatprep.subr.bf16.mxu0 0
      %346 = vmatpush2.bf16.msra.mxu0 0
      %347 = vmatprep.subr.bf16.mxu0 0
      %348 = vmatpush2.bf16.msra.mxu0 0
      %349 = vmatprep.subr.bf16.mxu0 0
      %350 = vmatpush2.bf16.msra.mxu0 0
      %351 = vmatprep.subr.bf16.mxu0 0
      %352 = vmatpush2.bf16.msra.mxu0 0
      %353 = vmatprep.subr.bf16.mxu0 0
      %354 = vmatpush2.bf16.msra.mxu0 0
      %355 = vmatprep.mubr.bf16.mxu0 0
      %356 = vmatmul.mubr.bf16.gmra.mxu0 %v268
      %v357 = vpop.f32.mrf.mxu0
      %v358 = vadd.f32 0.0, %v357
      %v359 = vpop.f32.mrf.mxu0
      %v360 = vpop.f32.mrf.mxu0
      %v361 = vpop.f32.mrf.mxu0
      %362 = vdwg.mxu0
      %v363 = vpack.c.bf16 %v358, %v358
      %vm364 = vcmask 257024
      %365 = vst.msk [vmem:[%s235] sm:$0xf] %vm364, %v310
      %366 = vst.msk [vmem:[%s242] sm:$0xf] %vm364, %v363
      %p367 = scmp.lt.s32.totalorder %s20, 1
      %s368 = scalar_select %p367, %s20, 1
      %p369 = scmp.lt.s32.totalorder %s21, 0
      %s370 = scalar_select %p369, %s21, 0
      %s371 = sadd.s32 %s370, %s368
      %s372 = smul.addr %s371, 4
      %s373 = scalar_lea.vmem %s3, %s372
      %p374 = scmp.lt.s32.totalorder %s20, 1
      %s375 = scalar_select %p374, %s20, 1
      %p376 = scmp.lt.s32.totalorder %s21, 0
      %s377 = scalar_select %p376, %s21, 0
      %s378 = sadd.s32 %s377, %s375
      %s379 = smul.addr %s378, 4
      %s380 = scalar_lea.vmem %s4, %s379
      // Predicated region
      $region33: #{decoder_forward.8} parent=31 // pred_check
        %p381 = pneg %p118
      $region34: #{decoder_forward.8} parent=31 // pred_check_branch
        %383 = sbr.rel (%p381) target = $region36
      $region35: #{decoder_forward.8} parent=31 // pred_region
        _
      $region36: #{decoder_forward.8} parent=31 // pred_fallthru
        _
      // Predicated region
      $region37: #{decoder_forward.8} parent=31 // pred_check
        %p384 = pneg %p146
      $region38: #{decoder_forward.8} parent=31 // pred_check_branch
        %386 = sbr.rel (%p384) target = $region40
      $region39: #{decoder_forward.8} parent=31 // pred_region
        _
      $region40: #{decoder_forward.8} parent=31 // pred_fallthru
        _
    $region32: #{decoder_forward.8} parent=5 // pred_fallthru
      _
    %p387 = scmp.le.s32.totalorder 2, %s11
    // Predicated region
    $region41: #{decoder_forward.8} parent=5 // pred_check
      %p388 = pneg %p387
    $region42: #{decoder_forward.8} parent=5 // pred_check_branch
      %390 = sbr.rel (%p388) target = $region44
    $region43: #{decoder_forward.8} parent=5 // pred_region
      %s391 = ssub.s32 %s11, 2
      // Predicated region
      $region45: #{decoder_forward.8} parent=43 // pred_check
        %p392 = pneg %p124
      $region46: #{decoder_forward.8} parent=43 // pred_check_branch
        %394 = sbr.rel (%p392) target = $region48
      $region47: #{decoder_forward.8} parent=43 // pred_region
        %p395 = scmp.lt.s32.totalorder %s22, 1
        %s396 = scalar_select %p395, %s22, 1
        %p397 = scmp.lt.s32.totalorder %s23, 0
        %s398 = scalar_select %p397, %s23, 0
        %s399 = sadd.s32 %s398, %s396
        %s400 = smul.addr %s399, 4
        %s401 = scalar_lea.vmem %s3, %s400
      $region48: #{decoder_forward.8} parent=43 // pred_fallthru
        _
      // Predicated region
      $region49: #{decoder_forward.8} parent=43 // pred_check
        %p402 = pneg %p152
      $region50: #{decoder_forward.8} parent=43 // pred_check_branch
        %404 = sbr.rel (%p402) target = $region52
      $region51: #{decoder_forward.8} parent=43 // pred_region
        %p405 = scmp.lt.s32.totalorder %s22, 1
        %s406 = scalar_select %p405, %s22, 1
        %p407 = scmp.lt.s32.totalorder %s23, 0
        %s408 = scalar_select %p407, %s23, 0
        %s409 = sadd.s32 %s408, %s406
        %s410 = smul.addr %s409, 4
        %s411 = scalar_lea.vmem %s4, %s410
      $region52: #{decoder_forward.8} parent=43 // pred_fallthru
        _
    $region44: #{decoder_forward.8} parent=5 // pred_fallthru
      _
  $region6: #{decoder_forward.8} parent=0 // loop_footer
    %s15 = sadd.s32 1, %s11
  $region7: #{decoder_forward.8} parent=0 // loop_footer_branch
    %10 = sbr.rel target = $region3
  $region8: #{decoder_forward.8} parent=0 // loop_exit
    _

// kernel: decoder_forward.13
$region0: #{decoder_forward.13}
  #allocation0 [shape = 'u32[]', space=smem, size = 0x4, offset = 0x4, fixed_abs, tag = 'smem constant byte address 0x4 - core index']
  #allocation1 [shape = 'u32[144,128]{1,0:T(1,128)}', space=vmem, size = 0x12000, scoped, tag = 'internal scratch']
  %s0 = inlined_call_operand.vmem [shape: f32[2,8,32], index: 0, kind: input, shape index: {}]
  %s1 = inlined_call_operand.vmem [shape: bf16[32,50], index: 1, kind: input, shape index: {}]
  %s2 = inlined_call_operand.hbm [shape: f32[2,8,50], index: 2, kind: output, shape index: {}]
  %s3 = sld [smem:[#allocation0]]
  $region41: #{decoder_forward.13} parent=0
    _
  %s5 = ssub.s32 1, %s3
  %s6 = scalar_select 0, %s5, %s3
  $region1: #{decoder_forward.13} parent=0
    #allocation2 [shape = 'u8[8192]{0}', space=vmem, size = 0x2000, scoped, tag = 'output window, operand 0']
    #allocation3 [shape = 's32[2]{0}', space=sflag, size = 0x8, scoped, tag = 'scoped memory for decoder_forward.13']
    %7 = vsyncpa [#allocation3], 0
    %s8 = scalar_lea.sflag [#allocation3], 1
    %9 = vsyncpa %s8, 0
    loop: start=0, step=1, limit=4
    $region2: #{decoder_forward.13} parent=1 // loop_pre_header
      _
    $region3: #{decoder_forward.13} parent=1 // loop_header
      %s11 = sphi 0, %s15
      %p12 = scmp.ge.s32.totalorder %s11, 4
      %s18 = sphi 0, %s37
      %s19 = sphi 0, %s33
      %s20 = sphi 0, %s29
      %s21 = sphi 0, %s18
      %s22 = sphi 0, %s19
      %s23 = sphi 0, %s20
      %s24 = sphi 0, %s21
      %s25 = sphi 0, %s22
      %s26 = sphi 0, %s23
      %s42 = sphi 0, %s44
      %s45 = sphi 0, %s42
      %s46 = sphi 0, %s45
      %s62 = sphi 0, %s46
      %s68 = sphi 0, %s70
      %s71 = sphi 0, %s68
      %s72 = sphi 0, %s71
      %s88 = sphi 0, %s72
      %s98 = sphi 0, %s100
      %s101 = sphi 0, %s98
      %s102 = sphi 0, %s101
      %s118 = sphi 0, %s102
    $region4: #{decoder_forward.13} parent=1 // loop_header_branch
      %14 = sbr.rel (%p12) target = $region8
    $region5: #{decoder_forward.13} parent=1 // loop_body
      %s16 = ssub.s32 %s11, 1
      %s17 = ssub.s32 %s11, 2
      %s27 = sadd.s32 1, %s20
      %p28 = scmp.ge.s32.totalorder %s27, 1
      %s29 = scalar_select %p28, 0, %s27
      %s30 = sadd.s32 1, %s19
      %s31 = scalar_select %p28, %s30, %s19
      %p32 = scmp.ge.s32.totalorder %s31, 1
      %s33 = scalar_select %p32, 0, %s31
      %s34 = sadd.s32 1, %s18
      %s35 = scalar_select %p32, %s34, %s18
      %p36 = scmp.ge.s32.totalorder %s35, 2
      %s37 = scalar_select %p36, 0, %s35
      %s38 = ssub.s32 %s18, %s37
      %s39 = ssub.s32 %s20, %s29
      %s40 = sor.u32 %s38, %s39
      %p41 = scmp.eq.s32.totalorder %s40, 0
      %s43 = sadd.s32 %s42, 1
      %s44 = scalar_select %p41, %s42, %s43
      %p47 = pneg %p41
      %p48 = scmp.eq.s32.totalorder %s11, 1
      %p49 = por %p47, %p48
      %p50 = scmp.ne.s32.totalorder %s42, %s45
      %p51 = scmp.eq.s32.totalorder %s11, 0
      %p52 = por %p50, %p51
      %p53 = scmp.ne.s32.totalorder %s42, %s45
      %p54 = scmp.eq.s32.totalorder %s16, 1
      %p55 = por %p53, %p54
      %p56 = scmp.ne.s32.totalorder %s45, %s46
      %p57 = scmp.eq.s32.totalorder %s16, 0
      %p58 = por %p56, %p57
      %p59 = scmp.ne.s32.totalorder %s45, %s46
      %p60 = scmp.eq.s32.totalorder %s17, 1
      %p61 = por %p59, %p60
      %p63 = scmp.ne.s32.totalorder %s46, %s62
      %p64 = scmp.eq.s32.totalorder %s17, 0
      %p65 = por %p63, %p64
      %s66 = ssub.s32 %s19, %s33
      %p67 = scmp.eq.s32.totalorder %s66, 0
      %s69 = sadd.s32 %s68, 1
      %s70 = scalar_select %p67, %s68, %s69
      %p73 = pneg %p67
      %p74 = scmp.eq.s32.totalorder %s11, 1
      %p75 = por %p73, %p74
      %p76 = scmp.ne.s32.totalorder %s68, %s71
      %p77 = scmp.eq.s32.totalorder %s11, 0
      %p78 = por %p76, %p77
      %p79 = scmp.ne.s32.totalorder %s68, %s71
      %p80 = scmp.eq.s32.totalorder %s16, 1
      %p81 = por %p79, %p80
      %p82 = scmp.ne.s32.totalorder %s71, %s72
      %p83 = scmp.eq.s32.totalorder %s16, 0
      %p84 = por %p82, %p83
      %p85 = scmp.ne.s32.totalorder %s71, %s72
      %p86 = scmp.eq.s32.totalorder %s17, 1
      %p87 = por %p85, %p86
      %p89 = scmp.ne.s32.totalorder %s72, %s88
      %p90 = scmp.eq.s32.totalorder %s17, 0
      %p91 = por %p89, %p90
      %s92 = ssub.s32 %s18, %s37
      %s93 = ssub.s32 %s20, %s29
      %s94 = sor.u32 %s92, %s93
      %s95 = ssub.s32 %s19, %s33
      %s96 = sor.u32 %s94, %s95
      %p97 = scmp.eq.s32.totalorder %s96, 0
      %s99 = sadd.s32 %s98, 1
      %s100 = scalar_select %p97, %s98, %s99
      %p103 = pneg %p97
      %p104 = scmp.eq.s32.totalorder %s11, 1
      %p105 = por %p103, %p104
      %p106 = scmp.ne.s32.totalorder %s98, %s101
      %p107 = scmp.eq.s32.totalorder %s11, 0
      %p108 = por %p106, %p107
      %p109 = scmp.ne.s32.totalorder %s98, %s101
      %p110 = scmp.eq.s32.totalorder %s16, 1
      %p111 = por %p109, %p110
      %p112 = scmp.ne.s32.totalorder %s101, %s102
      %p113 = scmp.eq.s32.totalorder %s16, 0
      %p114 = por %p112, %p113
      %p115 = scmp.ne.s32.totalorder %s101, %s102
      %p116 = scmp.eq.s32.totalorder %s17, 1
      %p117 = por %p115, %p116
      %p119 = scmp.ne.s32.totalorder %s102, %s118
      %p120 = scmp.eq.s32.totalorder %s17, 0
      %p121 = por %p119, %p120
      %p122 = scmp.le.s32.totalorder 1, %s11
      %p123 = scmp.lt.s32.totalorder %s11, 3
      %p124 = pnand %p122, %p123
      %p125 = pneg %p124
      // Predicated region
      $region9: #{decoder_forward.13} parent=5 // pred_check
        _
      $region10: #{decoder_forward.13} parent=5 // pred_check_branch
        %127 = sbr.rel (%p124) target = $region12
      $region11: #{decoder_forward.13} parent=5 // pred_region
        %s128 = ssub.s32 %s11, 1
        // Predicated region
        $region13: #{decoder_forward.13} parent=11 // pred_check
          %p129 = pneg %p84
        $region14: #{decoder_forward.13} parent=11 // pred_check_branch
          %131 = sbr.rel (%p129) target = $region16
        $region15: #{decoder_forward.13} parent=11 // pred_region
          %p132 = scmp.lt.s32.totalorder %s22, 0
          %s133 = scalar_select %p132, %s22, 0
          %s134 = smul.addr %s133, 4
          %s135 = scalar_lea.vmem %s1, %s134
        $region16: #{decoder_forward.13} parent=11 // pred_fallthru
          _
      $region12: #{decoder_forward.13} parent=5 // pred_fallthru
        _
      %p136 = scmp.lt.s32.totalorder %s11, 2
      // Predicated region
      $region17: #{decoder_forward.13} parent=5 // pred_check
        %p137 = pneg %p136
      $region18: #{decoder_forward.13} parent=5 // pred_check_branch
        %139 = sbr.rel (%p137) target = $region20
      $region19: #{decoder_forward.13} parent=5 // pred_region
        // Predicated region
        $region21: #{decoder_forward.13} parent=19 // pred_check
          %p140 = pneg %p52
        $region22: #{decoder_forward.13} parent=19 // pred_check_branch
          %142 = sbr.rel (%p140) target = $region24
        $region23: #{decoder_forward.13} parent=19 // pred_region
          %p143 = scmp.lt.s32.totalorder %s18, 1
          %s144 = scalar_select %p143, %s18, 1
          %p145 = scmp.lt.s32.totalorder %s20, 0
          %s146 = scalar_select %p145, %s20, 0
          %s147 = sadd.s32 %s146, %s144
          %s148 = smul.addr %s147, 8
          %s149 = scalar_lea.vmem %s0, %s148
        $region24: #{decoder_forward.13} parent=19 // pred_fallthru
          _
      $region20: #{decoder_forward.13} parent=5 // pred_fallthru
        _
      %p150 = scmp.le.s32.totalorder 1, %s11
      %p151 = scmp.lt.s32.totalorder %s11, 3
      %p152 = pnand %p150, %p151
      %p153 = pneg %p152
      // Predicated region
      $region25: #{decoder_forward.13} parent=5 // pred_check
        _
      $region26: #{decoder_forward.13} parent=5 // pred_check_branch
        %155 = sbr.rel (%p152) target = $region28
      $region27: #{decoder_forward.13} parent=5 // pred_region
        %s156 = ssub.s32 %s11, 1
        %p157 = scmp.lt.s32.totalorder %s21, 1
        %s158 = scalar_select %p157, %s21, 1
        %p159 = scmp.lt.s32.totalorder %s23, 0
        %s160 = scalar_select %p159, %s23, 0
        %s161 = sadd.s32 %s160, %s158
        %s162 = smul.addr %s161, 8
        %s163 = scalar_lea.vmem %s0, %s162
        %p164 = pneg %p58
        %p165 = pneg %p55
        %p166 = scmp.lt.s32.totalorder %s22, 0
        %s167 = scalar_select %p166, %s22, 0
        %s168 = smul.addr %s167, 4
        %s169 = scalar_lea.vmem %s1, %s168
        %p170 = pneg %p84
        %p171 = pneg %p81
        %p172 = pneg %p114
        %p173 = pneg %p111
        %s174 = sand.u32 %s101, 1
        %s175 = scalar_lea.sflag [#allocation3], %s174
        %s176 = sand.u32 %s101, 1
        %s177 = smul.addr %s176, 8
        %s178 = scalar_lea.vmem [#allocation2], %s177
        %p179 = scmp.lt.s32.totalorder %s21, 1
        %s180 = scalar_select %p179, %s21, 1
        %p181 = scmp.lt.s32.totalorder %s23, 0
        %s182 = scalar_select %p181, %s23, 0
        %s183 = sadd.s32 %s182, %s180
        %s184 = smul.addr %s183, 8
        %s185 = scalar_lea.vmem %s0, %s184
        %p186 = scmp.lt.s32.totalorder %s22, 0
        %s187 = scalar_select %p186, %s22, 0
        %s188 = smul.addr %s187, 4
        %s189 = scalar_lea.vmem %s1, %s188
        %v191 = vld [vmem:[%s185] sm:$0xff]
        %v192 = vpack.c.bf16 %v191, %v191
        %v193 = vld [vmem:[%s189] sm:$0xf]
        %v194 = vld [vmem:[%s189 + $0x4] sm:$0xf]
        %v195 = vld [vmem:[%s189 + $0x8] sm:$0xf]
        %v196 = vld [vmem:[%s189 + $0xc] sm:$0xf]
        %v201 = vunpack.c.l.b16 %v193
        %v202 = vunpack.c.l.b16 %v194
        %v203 = vunpack.c.l.b16 %v195
        %v204 = vunpack.c.l.b16 %v196
        %v205 = vpack.c.b16 %v202, %v201
        %v206 = vpack.c.b16 %v204, %v203
        %vm209 = vcmask 261120
        %v211 = vsel %vm209, %v192, 0
        %213 = vmatprep.subr.bf16.mxu0 0
        %214 = vmatpush1.bf16.msra.mxu0 0
        %215 = vmatprep.subr.bf16.mxu0 0
        %216 = vmatpush1.bf16.msra.mxu0 0
        %217 = vmatprep.subr.bf16.mxu0 0
        %218 = vmatpush1.bf16.msra.mxu0 0
        %219 = vmatprep.subr.bf16.mxu0 0
        %220 = vmatpush1.bf16.msra.mxu0 0
        %221 = vmatprep.subr.bf16.mxu0 0
        %222 = vmatpush1.bf16.msra.mxu0 0
        %223 = vmatprep.subr.bf16.mxu0 0
        %224 = vmatpush1.bf16.msra.mxu0 0
        %225 = vmatprep.subr.bf16.mxu0 0
        %226 = vmatpush1.bf16.msra.mxu0 %v206
        %227 = vmatprep.subr.bf16.mxu0 0
        %228 = vmatpush1.bf16.msra.mxu0 %v205
        %229 = vmatprep.subr.bf16.mxu0 0
        %230 = vmatpush2.bf16.msra.mxu0 0
        %231 = vmatprep.subr.bf16.mxu0 0
        %232 = vmatpush2.bf16.msra.mxu0 0
        %233 = vmatprep.subr.bf16.mxu0 0
        %234 = vmatpush2.bf16.msra.mxu0 0
        %235 = vmatprep.subr.bf16.mxu0 0
        %236 = vmatpush2.bf16.msra.mxu0 0
        %237 = vmatprep.subr.bf16.mxu0 0
        %238 = vmatpush2.bf16.msra.mxu0 0
        %239 = vmatprep.subr.bf16.mxu0 0
        %240 = vmatpush2.bf16.msra.mxu0 0
        %241 = vmatprep.subr.bf16.mxu0 0
        %242 = vmatpush2.bf16.msra.mxu0 0
        %243 = vmatprep.subr.bf16.mxu0 0
        %244 = vmatpush2.bf16.msra.mxu0 0
        %245 = vmatprep.mubr.bf16.mxu0 0
        %246 = vmatmul.mubr.bf16.gmra.mxu0 %v211
        %v247 = vpop.f32.mrf.mxu0
        %v248 = vadd.f32 0.0, %v247
        %v249 = vpop.f32.mrf.mxu0
        %v250 = vpop.f32.mrf.mxu0
        %v251 = vpop.f32.mrf.mxu0
        %252 = vdwg.mxu0
        %vm253 = vcmask 408576
        %254 = vst.msk [vmem:[%s178] sm:$0xff] %vm253, %v248
        %s255 = sand.u32 %s101, 1
        %s256 = scalar_lea.sflag [#allocation3], %s255
        %s257 = sand.u32 %s101, 1
        %s258 = smul.addr %s257, 8
        %s259 = scalar_lea.vmem [#allocation2], %s258
        // Predicated region
        $region29: #{decoder_forward.13} parent=27 // pred_check
          %p260 = pneg %p111
        $region30: #{decoder_forward.13} parent=27 // pred_check_branch
          %262 = sbr.rel (%p260) target = $region32
        $region31: #{decoder_forward.13} parent=27 // pred_region
          %s264 = ssub.s32 128, 128
          %265 = vsyncadd %s256, %s264
          %s266 = sadd.s32 %s22, %s23
          %s267 = sadd.s32 %s266, %s21
          %s268 = smul.addr %s267, 128
          %s269 = scalar_lea.hbm %s2, %s268
          %s271 = sshll.u32 %s259, 4
          %s272 = int_to_ptr.vmem [resolvable:$true] %s271
          %274 = dma.vmem_to_hbm [thread:$0]  %s272, 128, %s269, %s256
        $region32: #{decoder_forward.13} parent=27 // pred_fallthru
          _
      $region28: #{decoder_forward.13} parent=5 // pred_fallthru
        _
      %p275 = scmp.le.s32.totalorder 2, %s11
      // Predicated region
      $region33: #{decoder_forward.13} parent=5 // pred_check
        %p276 = pneg %p275
      $region34: #{decoder_forward.13} parent=5 // pred_check_branch
        %278 = sbr.rel (%p276) target = $region36
      $region35: #{decoder_forward.13} parent=5 // pred_region
        %s279 = ssub.s32 %s11, 2
        // Predicated region
        $region37: #{decoder_forward.13} parent=35 // pred_check
          %p280 = pneg %p117
        $region38: #{decoder_forward.13} parent=35 // pred_check_branch
          %282 = sbr.rel (%p280) target = $region40
        $region39: #{decoder_forward.13} parent=35 // pred_region
          %s283 = sand.u32 %s102, 1
          %s284 = scalar_lea.sflag [#allocation3], %s283
          %s285 = sand.u32 %s102, 1
          %s286 = smul.addr %s285, 8
          %s287 = scalar_lea.vmem [#allocation2], %s286
          %288 = dma.done %s284, 128
        $region40: #{decoder_forward.13} parent=35 // pred_fallthru
          _
      $region36: #{decoder_forward.13} parent=5 // pred_fallthru
        _
    $region6: #{decoder_forward.13} parent=1 // loop_footer
      %s15 = sadd.s32 1, %s11
    $region7: #{decoder_forward.13} parent=1 // loop_footer_branch
      %10 = sbr.rel target = $region3
    $region8: #{decoder_forward.13} parent=1 // loop_exit
      _
    %289 = vsyncpa [#allocation3], 1
    %s290 = scalar_lea.sflag [#allocation3], 1
    %291 = vsyncpa %s290, 1

// kernel: decoder_forward.7
$region0: #{decoder_forward.7}
  #allocation0 [shape = 'u32[]', space=smem, size = 0x4, offset = 0x4, fixed_abs, tag = 'smem constant byte address 0x4 - core index']
  #allocation1 [shape = 'u32[144,128]{1,0:T(1,128)}', space=vmem, size = 0x12000, scoped, tag = 'internal scratch']
  %s0 = inlined_call_operand.vmem [shape: f32[2,8,32], index: 0, kind: input, shape index: {}]
  %s1 = inlined_call_operand.vmem [shape: f32[1,8,32], index: 1, kind: input, shape index: {}]
  %s2 = inlined_call_operand.vmem [shape: f32[1,32], index: 2, kind: input, shape index: {}]
  %s3 = inlined_call_operand.vmem [shape: f32[1,32], index: 3, kind: input, shape index: {}]
  %s4 = inlined_call_operand.vmem [shape: bf16[32,32], index: 4, kind: input, shape index: {}]
  %s5 = inlined_call_operand.vmem [shape: bf16[32,32], index: 5, kind: input, shape index: {}]
  %s6 = inlined_call_operand.vmem [shape: bf16[32,32], index: 6, kind: input, shape index: {}]
  %s7 = inlined_call_operand.vmem [shape: f32[2,8,32], index: 7, kind: output, shape index: {0}]
  %s8 = inlined_call_operand.vmem [shape: bf16[2,8,32], index: 8, kind: output, shape index: {1}]
  %s9 = inlined_call_operand.vmem [shape: bf16[2,8,32], index: 9, kind: output, shape index: {2}]
  %s10 = inlined_call_operand.vmem [shape: bf16[2,8,32], index: 10, kind: output, shape index: {3}]
  %11 = xla_tuple %s7, %s8, %s9, %s10
  %s12 = sld [smem:[#allocation0]]
  $region85: #{decoder_forward.7} parent=0
    _
  %s14 = ssub.s32 1, %s12
  %s15 = scalar_select 0, %s14, %s12
  loop: start=0, step=1, limit=4
  $region2: #{decoder_forward.7} parent=0 // loop_pre_header
    _
  $region3: #{decoder_forward.7} parent=0 // loop_header
    %s17 = sphi 0, %s21
    %p18 = scmp.ge.s32.totalorder %s17, 4
    %s24 = sphi 0, %s36
    %s25 = sphi 0, %s32
    %s26 = sphi 0, %s24
    %s27 = sphi 0, %s25
    %s28 = sphi 0, %s26
    %s29 = sphi 0, %s27
    %s41 = sphi 0, %s43
    %s44 = sphi 0, %s41
    %s45 = sphi 0, %s44
    %s61 = sphi 0, %s45
    %s67 = sphi 0, %s69
    %s70 = sphi 0, %s67
    %s71 = sphi 0, %s70
    %s87 = sphi 0, %s71
    %s91 = sphi 0, %s91
    %s93 = sphi 0, %s91
    %s94 = sphi 0, %s93
    %s108 = sphi 0, %s94
    %s112 = sphi 0, %s112
    %s114 = sphi 0, %s112
    %s115 = sphi 0, %s114
    %s129 = sphi 0, %s115
    %s133 = sphi 0, %s133
    %s135 = sphi 0, %s133
    %s136 = sphi 0, %s135
    %s150 = sphi 0, %s136
    %s154 = sphi 0, %s154
    %s156 = sphi 0, %s154
    %s157 = sphi 0, %s156
    %s171 = sphi 0, %s157
    %s175 = sphi 0, %s175
    %s177 = sphi 0, %s175
    %s178 = sphi 0, %s177
    %s192 = sphi 0, %s178
    %s200 = sphi 0, %s202
    %s203 = sphi 0, %s200
    %s204 = sphi 0, %s203
    %s220 = sphi 0, %s204
    %s228 = sphi 0, %s230
    %s231 = sphi 0, %s228
    %s232 = sphi 0, %s231
    %s248 = sphi 0, %s232
    %s256 = sphi 0, %s258
    %s259 = sphi 0, %s256
    %s260 = sphi 0, %s259
    %s276 = sphi 0, %s260
    %s284 = sphi 0, %s286
    %s287 = sphi 0, %s284
    %s288 = sphi 0, %s287
    %s304 = sphi 0, %s288
  $region4: #{decoder_forward.7} parent=0 // loop_header_branch
    %20 = sbr.rel (%p18) target = $region8
  $region5: #{decoder_forward.7} parent=0 // loop_body
    %s22 = ssub.s32 %s17, 1
    %s23 = ssub.s32 %s17, 2
    %s30 = sadd.s32 1, %s25
    %p31 = scmp.ge.s32.totalorder %s30, 1
    %s32 = scalar_select %p31, 0, %s30
    %s33 = sadd.s32 1, %s24
    %s34 = scalar_select %p31, %s33, %s24
    %p35 = scmp.ge.s32.totalorder %s34, 2
    %s36 = scalar_select %p35, 0, %s34
    %s37 = ssub.s32 %s24, %s36
    %s38 = ssub.s32 %s25, %s32
    %s39 = sor.u32 %s37, %s38
    %p40 = scmp.eq.s32.totalorder %s39, 0
    %s42 = sadd.s32 %s41, 1
    %s43 = scalar_select %p40, %s41, %s42
    %p46 = pneg %p40
    %p47 = scmp.eq.s32.totalorder %s17, 1
    %p48 = por %p46, %p47
    %p49 = scmp.ne.s32.totalorder %s41, %s44
    %p50 = scmp.eq.s32.totalorder %s17, 0
    %p51 = por %p49, %p50
    %p52 = scmp.ne.s32.totalorder %s41, %s44
    %p53 = scmp.eq.s32.totalorder %s22, 1
    %p54 = por %p52, %p53
    %p55 = scmp.ne.s32.totalorder %s44, %s45
    %p56 = scmp.eq.s32.totalorder %s22, 0
    %p57 = por %p55, %p56
    %p58 = scmp.ne.s32.totalorder %s44, %s45
    %p59 = scmp.eq.s32.totalorder %s23, 1
    %p60 = por %p58, %p59
    %p62 = scmp.ne.s32.totalorder %s45, %s61
    %p63 = scmp.eq.s32.totalorder %s23, 0
    %p64 = por %p62, %p63
    %s65 = ssub.s32 %s25, %s32
    %p66 = scmp.eq.s32.totalorder %s65, 0
    %s68 = sadd.s32 %s67, 1
    %s69 = scalar_select %p66, %s67, %s68
    %p72 = pneg %p66
    %p73 = scmp.eq.s32.totalorder %s17, 1
    %p74 = por %p72, %p73
    %p75 = scmp.ne.s32.totalorder %s67, %s70
    %p76 = scmp.eq.s32.totalorder %s17, 0
    %p77 = por %p75, %p76
    %p78 = scmp.ne.s32.totalorder %s67, %s70
    %p79 = scmp.eq.s32.totalorder %s22, 1
    %p80 = por %p78, %p79
    %p81 = scmp.ne.s32.totalorder %s70, %s71
    %p82 = scmp.eq.s32.totalorder %s22, 0
    %p83 = por %p81, %p82
    %p84 = scmp.ne.s32.totalorder %s70, %s71
    %p85 = scmp.eq.s32.totalorder %s23, 1
    %p86 = por %p84, %p85
    %p88 = scmp.ne.s32.totalorder %s71, %s87
    %p89 = scmp.eq.s32.totalorder %s23, 0
    %p90 = por %p88, %p89
    %s92 = sadd.s32 %s91, 1
    %p95 = scmp.eq.s32.totalorder %s17, 1
    %p96 = scmp.ne.s32.totalorder %s91, %s93
    %p97 = scmp.eq.s32.totalorder %s17, 0
    %p98 = por %p96, %p97
    %p99 = scmp.ne.s32.totalorder %s91, %s93
    %p100 = scmp.eq.s32.totalorder %s22, 1
    %p101 = por %p99, %p100
    %p102 = scmp.ne.s32.totalorder %s93, %s94
    %p103 = scmp.eq.s32.totalorder %s22, 0
    %p104 = por %p102, %p103
    %p105 = scmp.ne.s32.totalorder %s93, %s94
    %p106 = scmp.eq.s32.totalorder %s23, 1
    %p107 = por %p105, %p106
    %p109 = scmp.ne.s32.totalorder %s94, %s108
    %p110 = scmp.eq.s32.totalorder %s23, 0
    %p111 = por %p109, %p110
    %s113 = sadd.s32 %s112, 1
    %p116 = scmp.eq.s32.totalorder %s17, 1
    %p117 = scmp.ne.s32.totalorder %s112, %s114
    %p118 = scmp.eq.s32.totalorder %s17, 0
    %p119 = por %p117, %p118
    %p120 = scmp.ne.s32.totalorder %s112, %s114
    %p121 = scmp.eq.s32.totalorder %s22, 1
    %p122 = por %p120, %p121
    %p123 = scmp.ne.s32.totalorder %s114, %s115
    %p124 = scmp.eq.s32.totalorder %s22, 0
    %p125 = por %p123, %p124
    %p126 = scmp.ne.s32.totalorder %s114, %s115
    %p127 = scmp.eq.s32.totalorder %s23, 1
    %p128 = por %p126, %p127
    %p130 = scmp.ne.s32.totalorder %s115, %s129
    %p131 = scmp.eq.s32.totalorder %s23, 0
    %p132 = por %p130, %p131
    %s134 = sadd.s32 %s133, 1
    %p137 = scmp.eq.s32.totalorder %s17, 1
    %p138 = scmp.ne.s32.totalorder %s133, %s135
    %p139 = scmp.eq.s32.totalorder %s17, 0
    %p140 = por %p138, %p139
    %p141 = scmp.ne.s32.totalorder %s133, %s135
    %p142 = scmp.eq.s32.totalorder %s22, 1
    %p143 = por %p141, %p142
    %p144 = scmp.ne.s32.totalorder %s135, %s136
    %p145 = scmp.eq.s32.totalorder %s22, 0
    %p146 = por %p144, %p145
    %p147 = scmp.ne.s32.totalorder %s135, %s136
    %p148 = scmp.eq.s32.totalorder %s23, 1
    %p149 = por %p147, %p148
    %p151 = scmp.ne.s32.totalorder %s136, %s150
    %p152 = scmp.eq.s32.totalorder %s23, 0
    %p153 = por %p151, %p152
    %s155 = sadd.s32 %s154, 1
    %p158 = scmp.eq.s32.totalorder %s17, 1
    %p159 = scmp.ne.s32.totalorder %s154, %s156
    %p160 = scmp.eq.s32.totalorder %s17, 0
    %p161 = por %p159, %p160
    %p162 = scmp.ne.s32.totalorder %s154, %s156
    %p163 = scmp.eq.s32.totalorder %s22, 1
    %p164 = por %p162, %p163
    %p165 = scmp.ne.s32.totalorder %s156, %s157
    %p166 = scmp.eq.s32.totalorder %s22, 0
    %p167 = por %p165, %p166
    %p168 = scmp.ne.s32.totalorder %s156, %s157
    %p169 = scmp.eq.s32.totalorder %s23, 1
    %p170 = por %p168, %p169
    %p172 = scmp.ne.s32.totalorder %s157, %s171
    %p173 = scmp.eq.s32.totalorder %s23, 0
    %p174 = por %p172, %p173
    %s176 = sadd.s32 %s175, 1
    %p179 = scmp.eq.s32.totalorder %s17, 1
    %p180 = scmp.ne.s32.totalorder %s175, %s177
    %p181 = scmp.eq.s32.totalorder %s17, 0
    %p182 = por %p180, %p181
    %p183 = scmp.ne.s32.totalorder %s175, %s177
    %p184 = scmp.eq.s32.totalorder %s22, 1
    %p185 = por %p183, %p184
    %p186 = scmp.ne.s32.totalorder %s177, %s178
    %p187 = scmp.eq.s32.totalorder %s22, 0
    %p188 = por %p186, %p187
    %p189 = scmp.ne.s32.totalorder %s177, %s178
    %p190 = scmp.eq.s32.totalorder %s23, 1
    %p191 = por %p189, %p190
    %p193 = scmp.ne.s32.totalorder %s178, %s192
    %p194 = scmp.eq.s32.totalorder %s23, 0
    %p195 = por %p193, %p194
    %s196 = ssub.s32 %s24, %s36
    %s197 = ssub.s32 %s25, %s32
    %s198 = sor.u32 %s196, %s197
    %p199 = scmp.eq.s32.totalorder %s198, 0
    %s201 = sadd.s32 %s200, 1
    %s202 = scalar_select %p199, %s200, %s201
    %p205 = pneg %p199
    %p206 = scmp.eq.s32.totalorder %s17, 1
    %p207 = por %p205, %p206
    %p208 = scmp.ne.s32.totalorder %s200, %s203
    %p209 = scmp.eq.s32.totalorder %s17, 0
    %p210 = por %p208, %p209
    %p211 = scmp.ne.s32.totalorder %s200, %s203
    %p212 = scmp.eq.s32.totalorder %s22, 1
    %p213 = por %p211, %p212
    %p214 = scmp.ne.s32.totalorder %s203, %s204
    %p215 = scmp.eq.s32.totalorder %s22, 0
    %p216 = por %p214, %p215
    %p217 = scmp.ne.s32.totalorder %s203, %s204
    %p218 = scmp.eq.s32.totalorder %s23, 1
    %p219 = por %p217, %p218
    %p221 = scmp.ne.s32.totalorder %s204, %s220
    %p222 = scmp.eq.s32.totalorder %s23, 0
    %p223 = por %p221, %p222
    %s224 = ssub.s32 %s24, %s36
    %s225 = ssub.s32 %s25, %s32
    %s226 = sor.u32 %s224, %s225
    %p227 = scmp.eq.s32.totalorder %s226, 0
    %s229 = sadd.s32 %s228, 1
    %s230 = scalar_select %p227, %s228, %s229
    %p233 = pneg %p227
    %p234 = scmp.eq.s32.totalorder %s17, 1
    %p235 = por %p233, %p234
    %p236 = scmp.ne.s32.totalorder %s228, %s231
    %p237 = scmp.eq.s32.totalorder %s17, 0
    %p238 = por %p236, %p237
    %p239 = scmp.ne.s32.totalorder %s228, %s231
    %p240 = scmp.eq.s32.totalorder %s22, 1
    %p241 = por %p239, %p240
    %p242 = scmp.ne.s32.totalorder %s231, %s232
    %p243 = scmp.eq.s32.totalorder %s22, 0
    %p244 = por %p242, %p243
    %p245 = scmp.ne.s32.totalorder %s231, %s232
    %p246 = scmp.eq.s32.totalorder %s23, 1
    %p247 = por %p245, %p246
    %p249 = scmp.ne.s32.totalorder %s232, %s248
    %p250 = scmp.eq.s32.totalorder %s23, 0
    %p251 = por %p249, %p250
    %s252 = ssub.s32 %s24, %s36
    %s253 = ssub.s32 %s25, %s32
    %s254 = sor.u32 %s252, %s253
    %p255 = scmp.eq.s32.totalorder %s254, 0
    %s257 = sadd.s32 %s256, 1
    %s258 = scalar_select %p255, %s256, %s257
    %p261 = pneg %p255
    %p262 = scmp.eq.s32.totalorder %s17, 1
    %p263 = por %p261, %p262
    %p264 = scmp.ne.s32.totalorder %s256, %s259
    %p265 = scmp.eq.s32.totalorder %s17, 0
    %p266 = por %p264, %p265
    %p267 = scmp.ne.s32.totalorder %s256, %s259
    %p268 = scmp.eq.s32.totalorder %s22, 1
    %p269 = por %p267, %p268
    %p270 = scmp.ne.s32.totalorder %s259, %s260
    %p271 = scmp.eq.s32.totalorder %s22, 0
    %p272 = por %p270, %p271
    %p273 = scmp.ne.s32.totalorder %s259, %s260
    %p274 = scmp.eq.s32.totalorder %s23, 1
    %p275 = por %p273, %p274
    %p277 = scmp.ne.s32.totalorder %s260, %s276
    %p278 = scmp.eq.s32.totalorder %s23, 0
    %p279 = por %p277, %p278
    %s280 = ssub.s32 %s24, %s36
    %s281 = ssub.s32 %s25, %s32
    %s282 = sor.u32 %s280, %s281
    %p283 = scmp.eq.s32.totalorder %s282, 0
    %s285 = sadd.s32 %s284, 1
    %s286 = scalar_select %p283, %s284, %s285
    %p289 = pneg %p283
    %p290 = scmp.eq.s32.totalorder %s17, 1
    %p291 = por %p289, %p290
    %p292 = scmp.ne.s32.totalorder %s284, %s287
    %p293 = scmp.eq.s32.totalorder %s17, 0
    %p294 = por %p292, %p293
    %p295 = scmp.ne.s32.totalorder %s284, %s287
    %p296 = scmp.eq.s32.totalorder %s22, 1
    %p297 = por %p295, %p296
    %p298 = scmp.ne.s32.totalorder %s287, %s288
    %p299 = scmp.eq.s32.totalorder %s22, 0
    %p300 = por %p298, %p299
    %p301 = scmp.ne.s32.totalorder %s287, %s288
    %p302 = scmp.eq.s32.totalorder %s23, 1
    %p303 = por %p301, %p302
    %p305 = scmp.ne.s32.totalorder %s288, %s304
    %p306 = scmp.eq.s32.totalorder %s23, 0
    %p307 = por %p305, %p306
    %p308 = scmp.le.s32.totalorder 1, %s17
    %p309 = scmp.lt.s32.totalorder %s17, 3
    %p310 = pnand %p308, %p309
    %p311 = pneg %p310
    // Predicated region
    $region9: #{decoder_forward.7} parent=5 // pred_check
      _
    $region10: #{decoder_forward.7} parent=5 // pred_check_branch
      %313 = sbr.rel (%p310) target = $region12
    $region11: #{decoder_forward.7} parent=5 // pred_region
      %s314 = ssub.s32 %s17, 1
      // Predicated region
      $region13: #{decoder_forward.7} parent=11 // pred_check
        %p315 = pneg %p83
      $region14: #{decoder_forward.7} parent=11 // pred_check_branch
        %317 = sbr.rel (%p315) target = $region16
      $region15: #{decoder_forward.7} parent=11 // pred_region
        %p318 = scmp.lt.s32.totalorder %s27, 0
        %s319 = scalar_select %p318, %s27, 0
        %s320 = smul.addr %s319, 8
        %s321 = scalar_lea.vmem %s1, %s320
      $region16: #{decoder_forward.7} parent=11 // pred_fallthru
        _
      // Predicated region
      $region17: #{decoder_forward.7} parent=11 // pred_check
        %p322 = pneg %p104
      $region18: #{decoder_forward.7} parent=11 // pred_check_branch
        %324 = sbr.rel (%p322) target = $region20
      $region19: #{decoder_forward.7} parent=11 // pred_region
        _
      $region20: #{decoder_forward.7} parent=11 // pred_fallthru
        _
      // Predicated region
      $region21: #{decoder_forward.7} parent=11 // pred_check
        %p325 = pneg %p125
      $region22: #{decoder_forward.7} parent=11 // pred_check_branch
        %327 = sbr.rel (%p325) target = $region24
      $region23: #{decoder_forward.7} parent=11 // pred_region
        _
      $region24: #{decoder_forward.7} parent=11 // pred_fallthru
        _
      // Predicated region
      $region25: #{decoder_forward.7} parent=11 // pred_check
        %p328 = pneg %p146
      $region26: #{decoder_forward.7} parent=11 // pred_check_branch
        %330 = sbr.rel (%p328) target = $region28
      $region27: #{decoder_forward.7} parent=11 // pred_region
        _
      $region28: #{decoder_forward.7} parent=11 // pred_fallthru
        _
      // Predicated region
      $region29: #{decoder_forward.7} parent=11 // pred_check
        %p331 = pneg %p167
      $region30: #{decoder_forward.7} parent=11 // pred_check_branch
        %333 = sbr.rel (%p331) target = $region32
      $region31: #{decoder_forward.7} parent=11 // pred_region
        _
      $region32: #{decoder_forward.7} parent=11 // pred_fallthru
        _
      // Predicated region
      $region33: #{decoder_forward.7} parent=11 // pred_check
        %p334 = pneg %p188
      $region34: #{decoder_forward.7} parent=11 // pred_check_branch
        %336 = sbr.rel (%p334) target = $region36
      $region35: #{decoder_forward.7} parent=11 // pred_region
        _
      $region36: #{decoder_forward.7} parent=11 // pred_fallthru
        _
    $region12: #{decoder_forward.7} parent=5 // pred_fallthru
      _
    %p337 = scmp.lt.s32.totalorder %s17, 2
    // Predicated region
    $region37: #{decoder_forward.7} parent=5 // pred_check
      %p338 = pneg %p337
    $region38: #{decoder_forward.7} parent=5 // pred_check_branch
      %340 = sbr.rel (%p338) target = $region40
    $region39: #{decoder_forward.7} parent=5 // pred_region
      // Predicated region
      $region41: #{decoder_forward.7} parent=39 // pred_check
        %p341 = pneg %p51
      $region42: #{decoder_forward.7} parent=39 // pred_check_branch
        %343 = sbr.rel (%p341) target = $region44
      $region43: #{decoder_forward.7} parent=39 // pred_region
        %p344 = scmp.lt.s32.totalorder %s24, 1
        %s345 = scalar_select %p344, %s24, 1
        %p346 = scmp.lt.s32.totalorder %s25, 0
        %s347 = scalar_select %p346, %s25, 0
        %s348 = sadd.s32 %s347, %s345
        %s349 = smul.addr %s348, 8
        %s350 = scalar_lea.vmem %s0, %s349
      $region44: #{decoder_forward.7} parent=39 // pred_fallthru
        _
    $region40: #{decoder_forward.7} parent=5 // pred_fallthru
      _
    %p351 = scmp.le.s32.totalorder 1, %s17
    %p352 = scmp.lt.s32.totalorder %s17, 3
    %p353 = pnand %p351, %p352
    %p354 = pneg %p353
    // Predicated region
    $region45: #{decoder_forward.7} parent=5 // pred_check
      _
    $region46: #{decoder_forward.7} parent=5 // pred_check_branch
      %356 = sbr.rel (%p353) target = $region48
    $region47: #{decoder_forward.7} parent=5 // pred_region
      %s357 = ssub.s32 %s17, 1
      %p358 = scmp.lt.s32.totalorder %s26, 1
      %s359 = scalar_select %p358, %s26, 1
      %p360 = scmp.lt.s32.totalorder %s27, 0
      %s361 = scalar_select %p360, %s27, 0
      %s362 = sadd.s32 %s361, %s359
      %s363 = smul.addr %s362, 8
      %s364 = scalar_lea.vmem %s0, %s363
      %p365 = pneg %p57
      %p366 = pneg %p54
      %p367 = scmp.lt.s32.totalorder %s27, 0
      %s368 = scalar_select %p367, %s27, 0
      %s369 = smul.addr %s368, 8
      %s370 = scalar_lea.vmem %s1, %s369
      %p371 = pneg %p83
      %p372 = pneg %p80
      %p373 = pneg %p104
      %p374 = pneg %p101
      %p375 = pneg %p125
      %p376 = pneg %p122
      %p377 = pneg %p146
      %p378 = pneg %p143
      %p379 = pneg %p167
      %p380 = pneg %p164
      %p381 = pneg %p188
      %p382 = pneg %p185
      %p383 = pneg %p216
      %p384 = pneg %p213
      %p385 = scmp.lt.s32.totalorder %s26, 1
      %s386 = scalar_select %p385, %s26, 1
      %p387 = scmp.lt.s32.totalorder %s27, 0
      %s388 = scalar_select %p387, %s27, 0
      %s389 = sadd.s32 %s388, %s386
      %s390 = smul.addr %s389, 8
      %s391 = scalar_lea.vmem %s7, %s390
      %p392 = pneg %p244
      %p393 = pneg %p241
      %p394 = scmp.lt.s32.totalorder %s26, 1
      %s395 = scalar_select %p394, %s26, 1
      %p396 = scmp.lt.s32.totalorder %s27, 0
      %s397 = scalar_select %p396, %s27, 0
      %s398 = sadd.s32 %s397, %s395
      %s399 = smul.addr %s398, 4
      %s400 = scalar_lea.vmem %s8, %s399
      %p401 = pneg %p272
      %p402 = pneg %p269
      %p403 = scmp.lt.s32.totalorder %s26, 1
      %s404 = scalar_select %p403, %s26, 1
      %p405 = scmp.lt.s32.totalorder %s27, 0
      %s406 = scalar_select %p405, %s27, 0
      %s407 = sadd.s32 %s406, %s404
      %s408 = smul.addr %s407, 4
      %s409 = scalar_lea.vmem %s9, %s408
      %p410 = pneg %p300
      %p411 = pneg %p297
      %p412 = scmp.lt.s32.totalorder %s26, 1
      %s413 = scalar_select %p412, %s26, 1
      %p414 = scmp.lt.s32.totalorder %s27, 0
      %s415 = scalar_select %p414, %s27, 0
      %s416 = sadd.s32 %s415, %s413
      %s417 = smul.addr %s416, 4
      %s418 = scalar_lea.vmem %s10, %s417
      %p419 = scmp.lt.s32.totalorder %s26, 1
      %s420 = scalar_select %p419, %s26, 1
      %p421 = scmp.lt.s32.totalorder %s27, 0
      %s422 = scalar_select %p421, %s27, 0
      %s423 = sadd.s32 %s422, %s420
      %s424 = smul.addr %s423, 8
      %s425 = scalar_lea.vmem %s0, %s424
      %p426 = scmp.lt.s32.totalorder %s27, 0
      %s427 = scalar_select %p426, %s27, 0
      %s428 = smul.addr %s427, 8
      %s429 = scalar_lea.vmem %s1, %s428
      %p430 = scmp.lt.s32.totalorder %s26, 1
      %s431 = scalar_select %p430, %s26, 1
      %p432 = scmp.lt.s32.totalorder %s27, 0
      %s433 = scalar_select %p432, %s27, 0
      %s434 = sadd.s32 %s433, %s431
      %s435 = smul.addr %s434, 8
      %s436 = scalar_lea.vmem %s7, %s435
      %p437 = scmp.lt.s32.totalorder %s26, 1
      %s438 = scalar_select %p437, %s26, 1
      %p439 = scmp.lt.s32.totalorder %s27, 0
      %s440 = scalar_select %p439, %s27, 0
      %s441 = sadd.s32 %s440, %s438
      %s442 = smul.addr %s441, 4
      %s443 = scalar_lea.vmem %s8, %s442
      %p444 = scmp.lt.s32.totalorder %s26, 1
      %s445 = scalar_select %p444, %s26, 1
      %p446 = scmp.lt.s32.totalorder %s27, 0
      %s447 = scalar_select %p446, %s27, 0
      %s448 = sadd.s32 %s447, %s445
      %s449 = smul.addr %s448, 4
      %s450 = scalar_lea.vmem %s9, %s449
      %p451 = scmp.lt.s32.totalorder %s26, 1
      %s452 = scalar_select %p451, %s26, 1
      %p453 = scmp.lt.s32.totalorder %s27, 0
      %s454 = scalar_select %p453, %s27, 0
      %s455 = sadd.s32 %s454, %s452
      %s456 = smul.addr %s455, 4
      %s457 = scalar_lea.vmem %s10, %s456
      %v459 = vld [vmem:[%s425] sm:$0xff]
      %v460 = vld [vmem:[%s429] sm:$0xff]
      %v461 = vld [vmem:[%s2] sm:$0x1]
      %v462 = vld [vmem:[%s3] sm:$0x1]
      %v463 = vld [vmem:[%s4] sm:$0xf]
      %v464 = vld [vmem:[%s4 + $0x4] sm:$0xf]
      %v465 = vld [vmem:[%s4 + $0x8] sm:$0xf]
      %v466 = vld [vmem:[%s4 + $0xc] sm:$0xf]
      %v467 = vld [vmem:[%s5] sm:$0xf]
      %v468 = vld [vmem:[%s5 + $0x4] sm:$0xf]
      %v469 = vld [vmem:[%s5 + $0x8] sm:$0xf]
      %v470 = vld [vmem:[%s5 + $0xc] sm:$0xf]
      %v471 = vld [vmem:[%s6] sm:$0xf]
      %v472 = vld [vmem:[%s6 + $0x4] sm:$0xf]
      %v473 = vld [vmem:[%s6 + $0x8] sm:$0xf]
      %v474 = vld [vmem:[%s6 + $0xc] sm:$0xf]
      %v475 = vadd.f32 %v459, %v460
      %vm476 = vcmask 261120
      %v477 = vsel %vm476, %v475, 0.0
      %478 = vadd.xlane.f32.xlu0 %v477
      %v479 = vpop.xlane.xlu0 %478
      %v480 = vrcp.pop 32.0
      %v481 = vmul.f32 %v479, %v480
      %v482 = vsub.f32 %v475, %v481
      %v483 = vmul.f32 %v482, %v482
      %v484 = vsel %vm476, %v483, 0.0
      %485 = vadd.xlane.f32.xlu0 %v484
      %v486 = vpop.xlane.xlu0 %485
      %v487 = vmul.f32 %v486, %v480
      %v488 = vadd.f32 %v487, 1e-06
      %v489 = vrsqrt.pop %v488
      %v490 = vmul.f32 %v482, %v489
      %v492 = vlaneseq
      %v493 = vshrl.u32 %v492, 7
      %v494 = vsub.s32 0, %v493
      %v495 = vrot.slane %v461, %v494
      %v497 = vmul.f32 %v490, %v495
      %v499 = vlaneseq
      %v500 = vshrl.u32 %v499, 7
      %v501 = vsub.s32 0, %v500
      %v502 = vrot.slane %v462, %v501
      %v504 = vadd.f32 %v497, %v502
      %v505 = vpack.c.bf16 %v504, %v504
      %v510 = vunpack.c.l.b16 %v463
      %v511 = vunpack.c.l.b16 %v464
      %v512 = vunpack.c.l.b16 %v465
      %v513 = vunpack.c.l.b16 %v466
      %v514 = vpack.c.b16 %v511, %v510
      %v515 = vpack.c.b16 %v513, %v512
      %v519 = vsel %vm476, %v505, 0
      %521 = vmatprep.subr.bf16.mxu0 0
      %522 = vmatpush1.bf16.msra.mxu0 0
      %523 = vmatprep.subr.bf16.mxu0 0
      %524 = vmatpush1.bf16.msra.mxu0 0
      %525 = vmatprep.subr.bf16.mxu0 0
      %526 = vmatpush1.bf16.msra.mxu0 0
      %527 = vmatprep.subr.bf16.mxu0 0
      %528 = vmatpush1.bf16.msra.mxu0 0
      %529 = vmatprep.subr.bf16.mxu0 0
      %530 = vmatpush1.bf16.msra.mxu0 0
      %531 = vmatprep.subr.bf16.mxu0 0
      %532 = vmatpush1.bf16.msra.mxu0 0
      %533 = vmatprep.subr.bf16.mxu0 0
      %534 = vmatpush1.bf16.msra.mxu0 %v515
      %535 = vmatprep.subr.bf16.mxu0 0
      %536 = vmatpush1.bf16.msra.mxu0 %v514
      %537 = vmatprep.subr.bf16.mxu0 0
      %538 = vmatpush2.bf16.msra.mxu0 0
      %539 = vmatprep.subr.bf16.mxu0 0
      %540 = vmatpush2.bf16.msra.mxu0 0
      %541 = vmatprep.subr.bf16.mxu0 0
      %542 = vmatpush2.bf16.msra.mxu0 0
      %543 = vmatprep.subr.bf16.mxu0 0
      %544 = vmatpush2.bf16.msra.mxu0 0
      %545 = vmatprep.subr.bf16.mxu0 0
      %546 = vmatpush2.bf16.msra.mxu0 0
      %547 = vmatprep.subr.bf16.mxu0 0
      %548 = vmatpush2.bf16.msra.mxu0 0
      %549 = vmatprep.subr.bf16.mxu0 0
      %550 = vmatpush2.bf16.msra.mxu0 0
      %551 = vmatprep.subr.bf16.mxu0 0
      %552 = vmatpush2.bf16.msra.mxu0 0
      %553 = vmatprep.mubr.bf16.mxu0 0
      %554 = vmatmul.mubr.bf16.gmra.mxu0 %v519
      %v555 = vpop.f32.mrf.mxu0
      %v556 = vadd.f32 0.0, %v555
      %v557 = vpop.f32.mrf.mxu0
      %v558 = vpop.f32.mrf.mxu0
      %v559 = vpop.f32.mrf.mxu0
      %560 = vdwg.mxu0
      %v561 = vmul.f32 %v556, 0.35355338
      %v562 = vpack.c.bf16 %v561, %v561
      %v567 = vunpack.c.l.b16 %v467
      %v568 = vunpack.c.l.b16 %v468
      %v569 = vunpack.c.l.b16 %v469
      %v570 = vunpack.c.l.b16 %v470
      %v571 = vpack.c.b16 %v568, %v567
      %v572 = vpack.c.b16 %v570, %v569
      %575 = vmatprep.subr.bf16.mxu0 0
      %576 = vmatpush1.bf16.msra.mxu0 0
      %577 = vmatprep.subr.bf16.mxu0 0
      %578 = vmatpush1.bf16.msra.mxu0 0
      %579 = vmatprep.subr.bf16.mxu0 0
      %580 = vmatpush1.bf16.msra.mxu0 0
      %581 = vmatprep.subr.bf16.mxu0 0
      %582 = vmatpush1.bf16.msra.mxu0 0
      %583 = vmatprep.subr.bf16.mxu0 0
      %584 = vmatpush1.bf16.msra.mxu0 0
      %585 = vmatprep.subr.bf16.mxu0 0
      %586 = vmatpush1.bf16.msra.mxu0 0
      %587 = vmatprep.subr.bf16.mxu0 0
      %588 = vmatpush1.bf16.msra.mxu0 %v572
      %589 = vmatprep.subr.bf16.mxu0 0
      %590 = vmatpush1.bf16.msra.mxu0 %v571
      %591 = vmatprep.subr.bf16.mxu0 0
      %592 = vmatpush2.bf16.msra.mxu0 0
      %593 = vmatprep.subr.bf16.mxu0 0
      %594 = vmatpush2.bf16.msra.mxu0 0
      %595 = vmatprep.subr.bf16.mxu0 0
      %596 = vmatpush2.bf16.msra.mxu0 0
      %597 = vmatprep.subr.bf16.mxu0 0
      %598 = vmatpush2.bf16.msra.mxu0 0
      %599 = vmatprep.subr.bf16.mxu0 0
      %600 = vmatpush2.bf16.msra.mxu0 0
      %601 = vmatprep.subr.bf16.mxu0 0
      %602 = vmatpush2.bf16.msra.mxu0 0
      %603 = vmatprep.subr.bf16.mxu0 0
      %604 = vmatpush2.bf16.msra.mxu0 0
      %605 = vmatprep.subr.bf16.mxu0 0
      %606 = vmatpush2.bf16.msra.mxu0 0
      %607 = vmatprep.mubr.bf16.mxu0 0
      %608 = vmatmul.mubr.bf16.gmra.mxu0 %v519
      %v609 = vpop.f32.mrf.mxu0
      %v610 = vadd.f32 0.0, %v609
      %v611 = vpop.f32.mrf.mxu0
      %v612 = vpop.f32.mrf.mxu0
      %v613 = vpop.f32.mrf.mxu0
      %614 = vdwg.mxu0
      %v615 = vpack.c.bf16 %v610, %v610
      %v620 = vunpack.c.l.b16 %v471
      %v621 = vunpack.c.l.b16 %v472
      %v622 = vunpack.c.l.b16 %v473
      %v623 = vunpack.c.l.b16 %v474
      %v624 = vpack.c.b16 %v621, %v620
      %v625 = vpack.c.b16 %v623, %v622
      %628 = vmatprep.subr.bf16.mxu0 0
      %629 = vmatpush1.bf16.msra.mxu0 0
      %630 = vmatprep.subr.bf16.mxu0 0
      %631 = vmatpush1.bf16.msra.mxu0 0
      %632 = vmatprep.subr.bf16.mxu0 0
      %633 = vmatpush1.bf16.msra.mxu0 0
      %634 = vmatprep.subr.bf16.mxu0 0
      %635 = vmatpush1.bf16.msra.mxu0 0
      %636 = vmatprep.subr.bf16.mxu0 0
      %637 = vmatpush1.bf16.msra.mxu0 0
      %638 = vmatprep.subr.bf16.mxu0 0
      %639 = vmatpush1.bf16.msra.mxu0 0
      %640 = vmatprep.subr.bf16.mxu0 0
      %641 = vmatpush1.bf16.msra.mxu0 %v625
      %642 = vmatprep.subr.bf16.mxu0 0
      %643 = vmatpush1.bf16.msra.mxu0 %v624
      %644 = vmatprep.subr.bf16.mxu0 0
      %645 = vmatpush2.bf16.msra.mxu0 0
      %646 = vmatprep.subr.bf16.mxu0 0
      %647 = vmatpush2.bf16.msra.mxu0 0
      %648 = vmatprep.subr.bf16.mxu0 0
      %649 = vmatpush2.bf16.msra.mxu0 0
      %650 = vmatprep.subr.bf16.mxu0 0
      %651 = vmatpush2.bf16.msra.mxu0 0
      %652 = vmatprep.subr.bf16.mxu0 0
      %653 = vmatpush2.bf16.msra.mxu0 0
      %654 = vmatprep.subr.bf16.mxu0 0
      %655 = vmatpush2.bf16.msra.mxu0 0
      %656 = vmatprep.subr.bf16.mxu0 0
      %657 = vmatpush2.bf16.msra.mxu0 0
      %658 = vmatprep.subr.bf16.mxu0 0
      %659 = vmatpush2.bf16.msra.mxu0 0
      %660 = vmatprep.mubr.bf16.mxu0 0
      %661 = vmatmul.mubr.bf16.gmra.mxu0 %v519
      %v662 = vpop.f32.mrf.mxu0
      %v663 = vadd.f32 0.0, %v662
      %v664 = vpop.f32.mrf.mxu0
      %v665 = vpop.f32.mrf.mxu0
      %v666 = vpop.f32.mrf.mxu0
      %667 = vdwg.mxu0
      %v668 = vpack.c.bf16 %v663, %v663
      %669 = vst.msk [vmem:[%s436] sm:$0xff] %vm476, %v475
      %vm670 = vcmask 257024
      %671 = vst.msk [vmem:[%s443] sm:$0xf] %vm670, %v562
      %672 = vst.msk [vmem:[%s450] sm:$0xf] %vm670, %v615
      %673 = vst.msk [vmem:[%s457] sm:$0xf] %vm670, %v668
      %p674 = scmp.lt.s32.totalorder %s26, 1
      %s675 = scalar_select %p674, %s26, 1
      %p676 = scmp.lt.s32.totalorder %s27, 0
      %s677 = scalar_select %p676, %s27, 0
      %s678 = sadd.s32 %s677, %s675
      %s679 = smul.addr %s678, 8
      %s680 = scalar_lea.vmem %s7, %s679
      %p681 = scmp.lt.s32.totalorder %s26, 1
      %s682 = scalar_select %p681, %s26, 1
      %p683 = scmp.lt.s32.totalorder %s27, 0
      %s684 = scalar_select %p683, %s27, 0
      %s685 = sadd.s32 %s684, %s682
      %s686 = smul.addr %s685, 4
      %s687 = scalar_lea.vmem %s8, %s686
      %p688 = scmp.lt.s32.totalorder %s26, 1
      %s689 = scalar_select %p688, %s26, 1
      %p690 = scmp.lt.s32.totalorder %s27, 0
      %s691 = scalar_select %p690, %s27, 0
      %s692 = sadd.s32 %s691, %s689
      %s693 = smul.addr %s692, 4
      %s694 = scalar_lea.vmem %s9, %s693
      %p695 = scmp.lt.s32.totalorder %s26, 1
      %s696 = scalar_select %p695, %s26, 1
      %p697 = scmp.lt.s32.totalorder %s27, 0
      %s698 = scalar_select %p697, %s27, 0
      %s699 = sadd.s32 %s698, %s696
      %s700 = smul.addr %s699, 4
      %s701 = scalar_lea.vmem %s10, %s700
      // Predicated region
      $region49: #{decoder_forward.7} parent=47 // pred_check
        %p702 = pneg %p213
      $region50: #{decoder_forward.7} parent=47 // pred_check_branch
        %704 = sbr.rel (%p702) target = $region52
      $region51: #{decoder_forward.7} parent=47 // pred_region
        _
      $region52: #{decoder_forward.7} parent=47 // pred_fallthru
        _
      // Predicated region
      $region53: #{decoder_forward.7} parent=47 // pred_check
        %p705 = pneg %p241
      $region54: #{decoder_forward.7} parent=47 // pred_check_branch
        %707 = sbr.rel (%p705) target = $region56
      $region55: #{decoder_forward.7} parent=47 // pred_region
        _
      $region56: #{decoder_forward.7} parent=47 // pred_fallthru
        _
      // Predicated region
      $region57: #{decoder_forward.7} parent=47 // pred_check
        %p708 = pneg %p269
      $region58: #{decoder_forward.7} parent=47 // pred_check_branch
        %710 = sbr.rel (%p708) target = $region60
      $region59: #{decoder_forward.7} parent=47 // pred_region
        _
      $region60: #{decoder_forward.7} parent=47 // pred_fallthru
        _
      // Predicated region
      $region61: #{decoder_forward.7} parent=47 // pred_check
        %p711 = pneg %p297
      $region62: #{decoder_forward.7} parent=47 // pred_check_branch
        %713 = sbr.rel (%p711) target = $region64
      $region63: #{decoder_forward.7} parent=47 // pred_region
        _
      $region64: #{decoder_forward.7} parent=47 // pred_fallthru
        _
    $region48: #{decoder_forward.7} parent=5 // pred_fallthru
      _
    %p714 = scmp.le.s32.totalorder 2, %s17
    // Predicated region
    $region65: #{decoder_forward.7} parent=5 // pred_check
      %p715 = pneg %p714
    $region66: #{decoder_forward.7} parent=5 // pred_check_branch
      %717 = sbr.rel (%p715) target = $region68
    $region67: #{decoder_forward.7} parent=5 // pred_region
      %s718 = ssub.s32 %s17, 2
      // Predicated region
      $region69: #{decoder_forward.7} parent=67 // pred_check
        %p719 = pneg %p219
      $region70: #{decoder_forward.7} parent=67 // pred_check_branch
        %721 = sbr.rel (%p719) target = $region72
      $region71: #{decoder_forward.7} parent=67 // pred_region
        %p722 = scmp.lt.s32.totalorder %s28, 1
        %s723 = scalar_select %p722, %s28, 1
        %p724 = scmp.lt.s32.totalorder %s29, 0
        %s725 = scalar_select %p724, %s29, 0
        %s726 = sadd.s32 %s725, %s723
        %s727 = smul.addr %s726, 8
        %s728 = scalar_lea.vmem %s7, %s727
      $region72: #{decoder_forward.7} parent=67 // pred_fallthru
        _
      // Predicated region
      $region73: #{decoder_forward.7} parent=67 // pred_check
        %p729 = pneg %p247
      $region74: #{decoder_forward.7} parent=67 // pred_check_branch
        %731 = sbr.rel (%p729) target = $region76
      $region75: #{decoder_forward.7} parent=67 // pred_region
        %p732 = scmp.lt.s32.totalorder %s28, 1
        %s733 = scalar_select %p732, %s28, 1
        %p734 = scmp.lt.s32.totalorder %s29, 0
        %s735 = scalar_select %p734, %s29, 0
        %s736 = sadd.s32 %s735, %s733
        %s737 = smul.addr %s736, 4
        %s738 = scalar_lea.vmem %s8, %s737
      $region76: #{decoder_forward.7} parent=67 // pred_fallthru
        _
      // Predicated region
      $region77: #{decoder_forward.7} parent=67 // pred_check
        %p739 = pneg %p275
      $region78: #{decoder_forward.7} parent=67 // pred_check_branch
        %741 = sbr.rel (%p739) target = $region80
      $region79: #{decoder_forward.7} parent=67 // pred_region
        %p742 = scmp.lt.s32.totalorder %s28, 1
        %s743 = scalar_select %p742, %s28, 1
        %p744 = scmp.lt.s32.totalorder %s29, 0
        %s745 = scalar_select %p744, %s29, 0
        %s746 = sadd.s32 %s745, %s743
        %s747 = smul.addr %s746, 4
        %s748 = scalar_lea.vmem %s9, %s747
      $region80: #{decoder_forward.7} parent=67 // pred_fallthru
        _
      // Predicated region
      $region81: #{decoder_forward.7} parent=67 // pred_check
        %p749 = pneg %p303
      $region82: #{decoder_forward.7} parent=67 // pred_check_branch
        %751 = sbr.rel (%p749) target = $region84
      $region83: #{decoder_forward.7} parent=67 // pred_region
        %p752 = scmp.lt.s32.totalorder %s28, 1
        %s753 = scalar_select %p752, %s28, 1
        %p754 = scmp.lt.s32.totalorder %s29, 0
        %s755 = scalar_select %p754, %s29, 0
        %s756 = sadd.s32 %s755, %s753
        %s757 = smul.addr %s756, 4
        %s758 = scalar_lea.vmem %s10, %s757
      $region84: #{decoder_forward.7} parent=67 // pred_fallthru
        _
    $region68: #{decoder_forward.7} parent=5 // pred_fallthru
      _
  $region6: #{decoder_forward.7} parent=0 // loop_footer
    %s21 = sadd.s32 1, %s17
  $region7: #{decoder_forward.7} parent=0 // loop_footer_branch
    %16 = sbr.rel target = $region3
  $region8: #{decoder_forward.7} parent=0 // loop_exit
    _

// kernel: decoder_forward.9
$region0: #{decoder_forward.9}
  #allocation0 [shape = 'u32[]', space=smem, size = 0x4, offset = 0x4, fixed_abs, tag = 'smem constant byte address 0x4 - core index']
  #allocation1 [shape = 'u32[144,128]{1,0:T(1,128)}', space=vmem, size = 0x12000, scoped, tag = 'internal scratch']
  %s0 = inlined_call_operand.vmem [shape: f32[2,8,32], index: 0, kind: input, shape index: {}]
  %s1 = inlined_call_operand.vmem [shape: bf16[2,8,32], index: 1, kind: input, shape index: {}]
  %s2 = inlined_call_operand.vmem [shape: bf16[2,8,32], index: 2, kind: input, shape index: {}]
  %s3 = inlined_call_operand.vmem [shape: bf16[2,8,32], index: 3, kind: input, shape index: {}]
  %s4 = inlined_call_operand.vmem [shape: bf16[2,8,32], index: 4, kind: input, shape index: {}]
  %s5 = inlined_call_operand.vmem [shape: bf16[2,8,32], index: 5, kind: input, shape index: {}]
  %s6 = inlined_call_operand.vmem [shape: f32[1,32], index: 6, kind: input, shape index: {}]
  %s7 = inlined_call_operand.vmem [shape: f32[1,32], index: 7, kind: input, shape index: {}]
  %s8 = inlined_call_operand.vmem [shape: f32[1,32], index: 8, kind: input, shape index: {}]
  %s9 = inlined_call_operand.vmem [shape: f32[1,32], index: 9, kind: input, shape index: {}]
  %s10 = inlined_call_operand.vmem [shape: f32[1,32], index: 10, kind: input, shape index: {}]
  %s11 = inlined_call_operand.vmem [shape: f32[1,32], index: 11, kind: input, shape index: {}]
  %s12 = inlined_call_operand.vmem [shape: bf16[32,32], index: 12, kind: input, shape index: {}]
  %s13 = inlined_call_operand.vmem [shape: bf16[32,32], index: 13, kind: input, shape index: {}]
  %s14 = inlined_call_operand.vmem [shape: bf16[32,32], index: 14, kind: input, shape index: {}]
  %s15 = inlined_call_operand.vmem [shape: bf16[32,64], index: 15, kind: input, shape index: {}]
  %s16 = inlined_call_operand.vmem [shape: f32[1,64], index: 16, kind: input, shape index: {}]
  %s17 = inlined_call_operand.vmem [shape: bf16[64,32], index: 17, kind: input, shape index: {}]
  %s18 = inlined_call_operand.vmem [shape: f32[1,32], index: 18, kind: input, shape index: {}]
  %s19 = inlined_call_operand.vmem [shape: bf16[32,64], index: 19, kind: input, shape index: {}]
  %s20 = inlined_call_operand.vmem [shape: f32[1,64], index: 20, kind: input, shape index: {}]
  %s21 = inlined_call_operand.vmem [shape: bf16[64,32], index: 21, kind: input, shape index: {}]
  %s22 = inlined_call_operand.vmem [shape: f32[1,32], index: 22, kind: input, shape index: {}]
  %s23 = inlined_call_operand.vmem [shape: f32[2,8,32], index: 23, kind: output, shape index: {}]
  %s24 = sld [smem:[#allocation0]]
  $region125: #{decoder_forward.9} parent=0
    _
  %s26 = ssub.s32 1, %s24
  %s27 = scalar_select 0, %s26, %s24
  loop: start=0, step=1, limit=4
  $region2: #{decoder_forward.9} parent=0 // loop_pre_header
    _
  $region3: #{decoder_forward.9} parent=0 // loop_header
    %s29 = sphi 0, %s33
    %p30 = scmp.ge.s32.totalorder %s29, 4
    %s36 = sphi 0, %s48
    %s37 = sphi 0, %s44
    %s38 = sphi 0, %s36
    %s39 = sphi 0, %s37
    %s40 = sphi 0, %s38
    %s41 = sphi 0, %s39
    %s53 = sphi 0, %s55
    %s56 = sphi 0, %s53
    %s57 = sphi 0, %s56
    %s73 = sphi 0, %s57
    %s81 = sphi 0, %s83
    %s84 = sphi 0, %s81
    %s85 = sphi 0, %s84
    %s101 = sphi 0, %s85
    %s107 = sphi 0, %s109
    %s110 = sphi 0, %s107
    %s111 = sphi 0, %s110
    %s127 = sphi 0, %s111
    %s133 = sphi 0, %s135
    %s136 = sphi 0, %s133
    %s137 = sphi 0, %s136
    %s153 = sphi 0, %s137
    %s159 = sphi 0, %s161
    %s162 = sphi 0, %s159
    %s163 = sphi 0, %s162
    %s179 = sphi 0, %s163
    %s185 = sphi 0, %s187
    %s188 = sphi 0, %s185
    %s189 = sphi 0, %s188
    %s205 = sphi 0, %s189
    %s209 = sphi 0, %s209
    %s211 = sphi 0, %s209
    %s212 = sphi 0, %s211
    %s226 = sphi 0, %s212
    %s230 = sphi 0, %s230
    %s232 = sphi 0, %s230
    %s233 = sphi 0, %s232
    %s247 = sphi 0, %s233
    %s251 = sphi 0, %s251
    %s253 = sphi 0, %s251
    %s254 = sphi 0, %s253
    %s268 = sphi 0, %s254
    %s272 = sphi 0, %s272
    %s274 = sphi 0, %s272
    %s275 = sphi 0, %s274
    %s289 = sphi 0, %s275
    %s293 = sphi 0, %s293
    %s295 = sphi 0, %s293
    %s296 = sphi 0, %s295
    %s310 = sphi 0, %s296
    %s314 = sphi 0, %s314
    %s316 = sphi 0, %s314
    %s317 = sphi 0, %s316
    %s331 = sphi 0, %s317
    %s335 = sphi 0, %s335
    %s337 = sphi 0, %s335
    %s338 = sphi 0, %s337
    %s352 = sphi 0, %s338
    %s356 = sphi 0, %s356
    %s358 = sphi 0, %s356
    %s359 = sphi 0, %s358
    %s373 = sphi 0, %s359
    %s377 = sphi 0, %s377
    %s379 = sphi 0, %s377
    %s380 = sphi 0, %s379
    %s394 = sphi 0, %s380
    %s398 = sphi 0, %s398
    %s400 = sphi 0, %s398
    %s401 = sphi 0, %s400
    %s415 = sphi 0, %s401
    %s419 = sphi 0, %s419
    %s421 = sphi 0, %s419
    %s422 = sphi 0, %s421
    %s436 = sphi 0, %s422
    %s440 = sphi 0, %s440
    %s442 = sphi 0, %s440
    %s443 = sphi 0, %s442
    %s457 = sphi 0, %s443
    %s461 = sphi 0, %s461
    %s463 = sphi 0, %s461
    %s464 = sphi 0, %s463
    %s478 = sphi 0, %s464
    %s482 = sphi 0, %s482
    %s484 = sphi 0, %s482
    %s485 = sphi 0, %s484
    %s499 = sphi 0, %s485
    %s503 = sphi 0, %s503
    %s505 = sphi 0, %s503
    %s506 = sphi 0, %s505
    %s520 = sphi 0, %s506
    %s524 = sphi 0, %s524
    %s526 = sphi 0, %s524
    %s527 = sphi 0, %s526
    %s541 = sphi 0, %s527
    %s545 = sphi 0, %s545
    %s547 = sphi 0, %s545
    %s548 = sphi 0, %s547
    %s562 = sphi 0, %s548
    %s570 = sphi 0, %s572
    %s573 = sphi 0, %s570
    %s574 = sphi 0, %s573
    %s590 = sphi 0, %s574
  $region4: #{decoder_forward.9} parent=0 // loop_header_branch
    %32 = sbr.rel (%p30) target = $region8
  $region5: #{decoder_forward.9} parent=0 // loop_body
    %s34 = ssub.s32 %s29, 1
    %s35 = ssub.s32 %s29, 2
    %s42 = sadd.s32 1, %s37
    %p43 = scmp.ge.s32.totalorder %s42, 1
    %s44 = scalar_select %p43, 0, %s42
    %s45 = sadd.s32 1, %s36
    %s46 = scalar_select %p43, %s45, %s36
    %p47 = scmp.ge.s32.totalorder %s46, 2
    %s48 = scalar_select %p47, 0, %s46
    %s49 = ssub.s32 %s36, %s48
    %s50 = ssub.s32 %s37, %s44
    %s51 = sor.u32 %s49, %s50
    %p52 = scmp.eq.s32.totalorder %s51, 0
    %s54 = sadd.s32 %s53, 1
    %s55 = scalar_select %p52, %s53, %s54
    %p58 = pneg %p52
    %p59 = scmp.eq.s32.totalorder %s29, 1
    %p60 = por %p58, %p59
    %p61 = scmp.ne.s32.totalorder %s53, %s56
    %p62 = scmp.eq.s32.totalorder %s29, 0
    %p63 = por %p61, %p62
    %p64 = scmp.ne.s32.totalorder %s53, %s56
    %p65 = scmp.eq.s32.totalorder %s34, 1
    %p66 = por %p64, %p65
    %p67 = scmp.ne.s32.totalorder %s56, %s57
    %p68 = scmp.eq.s32.totalorder %s34, 0
    %p69 = por %p67, %p68
    %p70 = scmp.ne.s32.totalorder %s56, %s57
    %p71 = scmp.eq.s32.totalorder %s35, 1
    %p72 = por %p70, %p71
    %p74 = scmp.ne.s32.totalorder %s57, %s73
    %p75 = scmp.eq.s32.totalorder %s35, 0
    %p76 = por %p74, %p75
    %s77 = ssub.s32 %s36, %s48
    %s78 = ssub.s32 %s37, %s44
    %s79 = sor.u32 %s77, %s78
    %p80 = scmp.eq.s32.totalorder %s79, 0
    %s82 = sadd.s32 %s81, 1
    %s83 = scalar_select %p80, %s81, %s82
    %p86 = pneg %p80
    %p87 = scmp.eq.s32.totalorder %s29, 1
    %p88 = por %p86, %p87
    %p89 = scmp.ne.s32.totalorder %s81, %s84
    %p90 = scmp.eq.s32.totalorder %s29, 0
    %p91 = por %p89, %p90
    %p92 = scmp.ne.s32.totalorder %s81, %s84
    %p93 = scmp.eq.s32.totalorder %s34, 1
    %p94 = por %p92, %p93
    %p95 = scmp.ne.s32.totalorder %s84, %s85
    %p96 = scmp.eq.s32.totalorder %s34, 0
    %p97 = por %p95, %p96
    %p98 = scmp.ne.s32.totalorder %s84, %s85
    %p99 = scmp.eq.s32.totalorder %s35, 1
    %p100 = por %p98, %p99
    %p102 = scmp.ne.s32.totalorder %s85, %s101
    %p103 = scmp.eq.s32.totalorder %s35, 0
    %p104 = por %p102, %p103
    %s105 = ssub.s32 %s36, %s48
    %p106 = scmp.eq.s32.totalorder %s105, 0
    %s108 = sadd.s32 %s107, 1
    %s109 = scalar_select %p106, %s107, %s108
    %p112 = pneg %p106
    %p113 = scmp.eq.s32.totalorder %s29, 1
    %p114 = por %p112, %p113
    %p115 = scmp.ne.s32.totalorder %s107, %s110
    %p116 = scmp.eq.s32.totalorder %s29, 0
    %p117 = por %p115, %p116
    %p118 = scmp.ne.s32.totalorder %s107, %s110
    %p119 = scmp.eq.s32.totalorder %s34, 1
    %p120 = por %p118, %p119
    %p121 = scmp.ne.s32.totalorder %s110, %s111
    %p122 = scmp.eq.s32.totalorder %s34, 0
    %p123 = por %p121, %p122
    %p124 = scmp.ne.s32.totalorder %s110, %s111
    %p125 = scmp.eq.s32.totalorder %s35, 1
    %p126 = por %p124, %p125
    %p128 = scmp.ne.s32.totalorder %s111, %s127
    %p129 = scmp.eq.s32.totalorder %s35, 0
    %p130 = por %p128, %p129
    %s131 = ssub.s32 %s36, %s48
    %p132 = scmp.eq.s32.totalorder %s131, 0
    %s134 = sadd.s32 %s133, 1
    %s135 = scalar_select %p132, %s133, %s134
    %p138 = pneg %p132
    %p139 = scmp.eq.s32.totalorder %s29, 1
    %p140 = por %p138, %p139
    %p141 = scmp.ne.s32.totalorder %s133, %s136
    %p142 = scmp.eq.s32.totalorder %s29, 0
    %p143 = por %p141, %p142
    %p144 = scmp.ne.s32.totalorder %s133, %s136
    %p145 = scmp.eq.s32.totalorder %s34, 1
    %p146 = por %p144, %p145
    %p147 = scmp.ne.s32.totalorder %s136, %s137
    %p148 = scmp.eq.s32.totalorder %s34, 0
    %p149 = por %p147, %p148
    %p150 = scmp.ne.s32.totalorder %s136, %s137
    %p151 = scmp.eq.s32.totalorder %s35, 1
    %p152 = por %p150, %p151
    %p154 = scmp.ne.s32.totalorder %s137, %s153
    %p155 = scmp.eq.s32.totalorder %s35, 0
    %p156 = por %p154, %p155
    %s157 = ssub.s32 %s36, %s48
    %p158 = scmp.eq.s32.totalorder %s157, 0
    %s160 = sadd.s32 %s159, 1
    %s161 = scalar_select %p158, %s159, %s160
    %p164 = pneg %p158
    %p165 = scmp.eq.s32.totalorder %s29, 1
    %p166 = por %p164, %p165
    %p167 = scmp.ne.s32.totalorder %s159, %s162
    %p168 = scmp.eq.s32.totalorder %s29, 0
    %p169 = por %p167, %p168
    %p170 = scmp.ne.s32.totalorder %s159, %s162
    %p171 = scmp.eq.s32.totalorder %s34, 1
    %p172 = por %p170, %p171
    %p173 = scmp.ne.s32.totalorder %s162, %s163
    %p174 = scmp.eq.s32.totalorder %s34, 0
    %p175 = por %p173, %p174
    %p176 = scmp.ne.s32.totalorder %s162, %s163
    %p177 = scmp.eq.s32.totalorder %s35, 1
    %p178 = por %p176, %p177
    %p180 = scmp.ne.s32.totalorder %s163, %s179
    %p181 = scmp.eq.s32.totalorder %s35, 0
    %p182 = por %p180, %p181
    %s183 = ssub.s32 %s36, %s48
    %p184 = scmp.eq.s32.totalorder %s183, 0
    %s186 = sadd.s32 %s185, 1
    %s187 = scalar_select %p184, %s185, %s186
    %p190 = pneg %p184
    %p191 = scmp.eq.s32.totalorder %s29, 1
    %p192 = por %p190, %p191
    %p193 = scmp.ne.s32.totalorder %s185, %s188
    %p194 = scmp.eq.s32.totalorder %s29, 0
    %p195 = por %p193, %p194
    %p196 = scmp.ne.s32.totalorder %s185, %s188
    %p197 = scmp.eq.s32.totalorder %s34, 1
    %p198 = por %p196, %p197
    %p199 = scmp.ne.s32.totalorder %s188, %s189
    %p200 = scmp.eq.s32.totalorder %s34, 0
    %p201 = por %p199, %p200
    %p202 = scmp.ne.s32.totalorder %s188, %s189
    %p203 = scmp.eq.s32.totalorder %s35, 1
    %p204 = por %p202, %p203
    %p206 = scmp.ne.s32.totalorder %s189, %s205
    %p207 = scmp.eq.s32.totalorder %s35, 0
    %p208 = por %p206, %p207
    %s210 = sadd.s32 %s209, 1
    %p213 = scmp.eq.s32.totalorder %s29, 1
    %p214 = scmp.ne.s32.totalorder %s209, %s211
    %p215 = scmp.eq.s32.totalorder %s29, 0
    %p216 = por %p214, %p215
    %p217 = scmp.ne.s32.totalorder %s209, %s211
    %p218 = scmp.eq.s32.totalorder %s34, 1
    %p219 = por %p217, %p218
    %p220 = scmp.ne.s32.totalorder %s211, %s212
    %p221 = scmp.eq.s32.totalorder %s34, 0
    %p222 = por %p220, %p221
    %p223 = scmp.ne.s32.totalorder %s211, %s212
    %p224 = scmp.eq.s32.totalorder %s35, 1
    %p225 = por %p223, %p224
    %p227 = scmp.ne.s32.totalorder %s212, %s226
    %p228 = scmp.eq.s32.totalorder %s35, 0
    %p229 = por %p227, %p228
    %s231 = sadd.s32 %s230, 1
    %p234 = scmp.eq.s32.totalorder %s29, 1
    %p235 = scmp.ne.s32.totalorder %s230, %s232
    %p236 = scmp.eq.s32.totalorder %s29, 0
    %p237 = por %p235, %p236
    %p238 = scmp.ne.s32.totalorder %s230, %s232
    %p239 = scmp.eq.s32.totalorder %s34, 1
    %p240 = por %p238, %p239
    %p241 = scmp.ne.s32.totalorder %s232, %s233
    %p242 = scmp.eq.s32.totalorder %s34, 0
    %p243 = por %p241, %p242
    %p244 = scmp.ne.s32.totalorder %s232, %s233
    %p245 = scmp.eq.s32.totalorder %s35, 1
    %p246 = por %p244, %p245
    %p248 = scmp.ne.s32.totalorder %s233, %s247
    %p249 = scmp.eq.s32.totalorder %s35, 0
    %p250 = por %p248, %p249
    %s252 = sadd.s32 %s251, 1
    %p255 = scmp.eq.s32.totalorder %s29, 1
    %p256 = scmp.ne.s32.totalorder %s251, %s253
    %p257 = scmp.eq.s32.totalorder %s29, 0
    %p258 = por %p256, %p257
    %p259 = scmp.ne.s32.totalorder %s251, %s253
    %p260 = scmp.eq.s32.totalorder %s34, 1
    %p261 = por %p259, %p260
    %p262 = scmp.ne.s32.totalorder %s253, %s254
    %p263 = scmp.eq.s32.totalorder %s34, 0
    %p264 = por %p262, %p263
    %p265 = scmp.ne.s32.totalorder %s253, %s254
    %p266 = scmp.eq.s32.totalorder %s35, 1
    %p267 = por %p265, %p266
    %p269 = scmp.ne.s32.totalorder %s254, %s268
    %p270 = scmp.eq.s32.totalorder %s35, 0
    %p271 = por %p269, %p270
    %s273 = sadd.s32 %s272, 1
    %p276 = scmp.eq.s32.totalorder %s29, 1
    %p277 = scmp.ne.s32.totalorder %s272, %s274
    %p278 = scmp.eq.s32.totalorder %s29, 0
    %p279 = por %p277, %p278
    %p280 = scmp.ne.s32.totalorder %s272, %s274
    %p281 = scmp.eq.s32.totalorder %s34, 1
    %p282 = por %p280, %p281
    %p283 = scmp.ne.s32.totalorder %s274, %s275
    %p284 = scmp.eq.s32.totalorder %s34, 0
    %p285 = por %p283, %p284
    %p286 = scmp.ne.s32.totalorder %s274, %s275
    %p287 = scmp.eq.s32.totalorder %s35, 1
    %p288 = por %p286, %p287
    %p290 = scmp.ne.s32.totalorder %s275, %s289
    %p291 = scmp.eq.s32.totalorder %s35, 0
    %p292 = por %p290, %p291
    %s294 = sadd.s32 %s293, 1
    %p297 = scmp.eq.s32.totalorder %s29, 1
    %p298 = scmp.ne.s32.totalorder %s293, %s295
    %p299 = scmp.eq.s32.totalorder %s29, 0
    %p300 = por %p298, %p299
    %p301 = scmp.ne.s32.totalorder %s293, %s295
    %p302 = scmp.eq.s32.totalorder %s34, 1
    %p303 = por %p301, %p302
    %p304 = scmp.ne.s32.totalorder %s295, %s296
    %p305 = scmp.eq.s32.totalorder %s34, 0
    %p306 = por %p304, %p305
    %p307 = scmp.ne.s32.totalorder %s295, %s296
    %p308 = scmp.eq.s32.totalorder %s35, 1
    %p309 = por %p307, %p308
    %p311 = scmp.ne.s32.totalorder %s296, %s310
    %p312 = scmp.eq.s32.totalorder %s35, 0
    %p313 = por %p311, %p312
    %s315 = sadd.s32 %s314, 1
    %p318 = scmp.eq.s32.totalorder %s29, 1
    %p319 = scmp.ne.s32.totalorder %s314, %s316
    %p320 = scmp.eq.s32.totalorder %s29, 0
    %p321 = por %p319, %p320
    %p322 = scmp.ne.s32.totalorder %s314, %s316
    %p323 = scmp.eq.s32.totalorder %s34, 1
    %p324 = por %p322, %p323
    %p325 = scmp.ne.s32.totalorder %s316, %s317
    %p326 = scmp.eq.s32.totalorder %s34, 0
    %p327 = por %p325, %p326
    %p328 = scmp.ne.s32.totalorder %s316, %s317
    %p329 = scmp.eq.s32.totalorder %s35, 1
    %p330 = por %p328, %p329
    %p332 = scmp.ne.s32.totalorder %s317, %s331
    %p333 = scmp.eq.s32.totalorder %s35, 0
    %p334 = por %p332, %p333
    %s336 = sadd.s32 %s335, 1
    %p339 = scmp.eq.s32.totalorder %s29, 1
    %p340 = scmp.ne.s32.totalorder %s335, %s337
    %p341 = scmp.eq.s32.totalorder %s29, 0
    %p342 = por %p340, %p341
    %p343 = scmp.ne.s32.totalorder %s335, %s337
    %p344 = scmp.eq.s32.totalorder %s34, 1
    %p345 = por %p343, %p344
    %p346 = scmp.ne.s32.totalorder %s337, %s338
    %p347 = scmp.eq.s32.totalorder %s34, 0
    %p348 = por %p346, %p347
    %p349 = scmp.ne.s32.totalorder %s337, %s338
    %p350 = scmp.eq.s32.totalorder %s35, 1
    %p351 = por %p349, %p350
    %p353 = scmp.ne.s32.totalorder %s338, %s352
    %p354 = scmp.eq.s32.totalorder %s35, 0
    %p355 = por %p353, %p354
    %s357 = sadd.s32 %s356, 1
    %p360 = scmp.eq.s32.totalorder %s29, 1
    %p361 = scmp.ne.s32.totalorder %s356, %s358
    %p362 = scmp.eq.s32.totalorder %s29, 0
    %p363 = por %p361, %p362
    %p364 = scmp.ne.s32.totalorder %s356, %s358
    %p365 = scmp.eq.s32.totalorder %s34, 1
    %p366 = por %p364, %p365
    %p367 = scmp.ne.s32.totalorder %s358, %s359
    %p368 = scmp.eq.s32.totalorder %s34, 0
    %p369 = por %p367, %p368
    %p370 = scmp.ne.s32.totalorder %s358, %s359
    %p371 = scmp.eq.s32.totalorder %s35, 1
    %p372 = por %p370, %p371
    %p374 = scmp.ne.s32.totalorder %s359, %s373
    %p375 = scmp.eq.s32.totalorder %s35, 0
    %p376 = por %p374, %p375
    %s378 = sadd.s32 %s377, 1
    %p381 = scmp.eq.s32.totalorder %s29, 1
    %p382 = scmp.ne.s32.totalorder %s377, %s379
    %p383 = scmp.eq.s32.totalorder %s29, 0
    %p384 = por %p382, %p383
    %p385 = scmp.ne.s32.totalorder %s377, %s379
    %p386 = scmp.eq.s32.totalorder %s34, 1
    %p387 = por %p385, %p386
    %p388 = scmp.ne.s32.totalorder %s379, %s380
    %p389 = scmp.eq.s32.totalorder %s34, 0
    %p390 = por %p388, %p389
    %p391 = scmp.ne.s32.totalorder %s379, %s380
    %p392 = scmp.eq.s32.totalorder %s35, 1
    %p393 = por %p391, %p392
    %p395 = scmp.ne.s32.totalorder %s380, %s394
    %p396 = scmp.eq.s32.totalorder %s35, 0
    %p397 = por %p395, %p396
    %s399 = sadd.s32 %s398, 1
    %p402 = scmp.eq.s32.totalorder %s29, 1
    %p403 = scmp.ne.s32.totalorder %s398, %s400
    %p404 = scmp.eq.s32.totalorder %s29, 0
    %p405 = por %p403, %p404
    %p406 = scmp.ne.s32.totalorder %s398, %s400
    %p407 = scmp.eq.s32.totalorder %s34, 1
    %p408 = por %p406, %p407
    %p409 = scmp.ne.s32.totalorder %s400, %s401
    %p410 = scmp.eq.s32.totalorder %s34, 0
    %p411 = por %p409, %p410
    %p412 = scmp.ne.s32.totalorder %s400, %s401
    %p413 = scmp.eq.s32.totalorder %s35, 1
    %p414 = por %p412, %p413
    %p416 = scmp.ne.s32.totalorder %s401, %s415
    %p417 = scmp.eq.s32.totalorder %s35, 0
    %p418 = por %p416, %p417
    %s420 = sadd.s32 %s419, 1
    %p423 = scmp.eq.s32.totalorder %s29, 1
    %p424 = scmp.ne.s32.totalorder %s419, %s421
    %p425 = scmp.eq.s32.totalorder %s29, 0
    %p426 = por %p424, %p425
    %p427 = scmp.ne.s32.totalorder %s419, %s421
    %p428 = scmp.eq.s32.totalorder %s34, 1
    %p429 = por %p427, %p428
    %p430 = scmp.ne.s32.totalorder %s421, %s422
    %p431 = scmp.eq.s32.totalorder %s34, 0
    %p432 = por %p430, %p431
    %p433 = scmp.ne.s32.totalorder %s421, %s422
    %p434 = scmp.eq.s32.totalorder %s35, 1
    %p435 = por %p433, %p434
    %p437 = scmp.ne.s32.totalorder %s422, %s436
    %p438 = scmp.eq.s32.totalorder %s35, 0
    %p439 = por %p437, %p438
    %s441 = sadd.s32 %s440, 1
    %p444 = scmp.eq.s32.totalorder %s29, 1
    %p445 = scmp.ne.s32.totalorder %s440, %s442
    %p446 = scmp.eq.s32.totalorder %s29, 0
    %p447 = por %p445, %p446
    %p448 = scmp.ne.s32.totalorder %s440, %s442
    %p449 = scmp.eq.s32.totalorder %s34, 1
    %p450 = por %p448, %p449
    %p451 = scmp.ne.s32.totalorder %s442, %s443
    %p452 = scmp.eq.s32.totalorder %s34, 0
    %p453 = por %p451, %p452
    %p454 = scmp.ne.s32.totalorder %s442, %s443
    %p455 = scmp.eq.s32.totalorder %s35, 1
    %p456 = por %p454, %p455
    %p458 = scmp.ne.s32.totalorder %s443, %s457
    %p459 = scmp.eq.s32.totalorder %s35, 0
    %p460 = por %p458, %p459
    %s462 = sadd.s32 %s461, 1
    %p465 = scmp.eq.s32.totalorder %s29, 1
    %p466 = scmp.ne.s32.totalorder %s461, %s463
    %p467 = scmp.eq.s32.totalorder %s29, 0
    %p468 = por %p466, %p467
    %p469 = scmp.ne.s32.totalorder %s461, %s463
    %p470 = scmp.eq.s32.totalorder %s34, 1
    %p471 = por %p469, %p470
    %p472 = scmp.ne.s32.totalorder %s463, %s464
    %p473 = scmp.eq.s32.totalorder %s34, 0
    %p474 = por %p472, %p473
    %p475 = scmp.ne.s32.totalorder %s463, %s464
    %p476 = scmp.eq.s32.totalorder %s35, 1
    %p477 = por %p475, %p476
    %p479 = scmp.ne.s32.totalorder %s464, %s478
    %p480 = scmp.eq.s32.totalorder %s35, 0
    %p481 = por %p479, %p480
    %s483 = sadd.s32 %s482, 1
    %p486 = scmp.eq.s32.totalorder %s29, 1
    %p487 = scmp.ne.s32.totalorder %s482, %s484
    %p488 = scmp.eq.s32.totalorder %s29, 0
    %p489 = por %p487, %p488
    %p490 = scmp.ne.s32.totalorder %s482, %s484
    %p491 = scmp.eq.s32.totalorder %s34, 1
    %p492 = por %p490, %p491
    %p493 = scmp.ne.s32.totalorder %s484, %s485
    %p494 = scmp.eq.s32.totalorder %s34, 0
    %p495 = por %p493, %p494
    %p496 = scmp.ne.s32.totalorder %s484, %s485
    %p497 = scmp.eq.s32.totalorder %s35, 1
    %p498 = por %p496, %p497
    %p500 = scmp.ne.s32.totalorder %s485, %s499
    %p501 = scmp.eq.s32.totalorder %s35, 0
    %p502 = por %p500, %p501
    %s504 = sadd.s32 %s503, 1
    %p507 = scmp.eq.s32.totalorder %s29, 1
    %p508 = scmp.ne.s32.totalorder %s503, %s505
    %p509 = scmp.eq.s32.totalorder %s29, 0
    %p510 = por %p508, %p509
    %p511 = scmp.ne.s32.totalorder %s503, %s505
    %p512 = scmp.eq.s32.totalorder %s34, 1
    %p513 = por %p511, %p512
    %p514 = scmp.ne.s32.totalorder %s505, %s506
    %p515 = scmp.eq.s32.totalorder %s34, 0
    %p516 = por %p514, %p515
    %p517 = scmp.ne.s32.totalorder %s505, %s506
    %p518 = scmp.eq.s32.totalorder %s35, 1
    %p519 = por %p517, %p518
    %p521 = scmp.ne.s32.totalorder %s506, %s520
    %p522 = scmp.eq.s32.totalorder %s35, 0
    %p523 = por %p521, %p522
    %s525 = sadd.s32 %s524, 1
    %p528 = scmp.eq.s32.totalorder %s29, 1
    %p529 = scmp.ne.s32.totalorder %s524, %s526
    %p530 = scmp.eq.s32.totalorder %s29, 0
    %p531 = por %p529, %p530
    %p532 = scmp.ne.s32.totalorder %s524, %s526
    %p533 = scmp.eq.s32.totalorder %s34, 1
    %p534 = por %p532, %p533
    %p535 = scmp.ne.s32.totalorder %s526, %s527
    %p536 = scmp.eq.s32.totalorder %s34, 0
    %p537 = por %p535, %p536
    %p538 = scmp.ne.s32.totalorder %s526, %s527
    %p539 = scmp.eq.s32.totalorder %s35, 1
    %p540 = por %p538, %p539
    %p542 = scmp.ne.s32.totalorder %s527, %s541
    %p543 = scmp.eq.s32.totalorder %s35, 0
    %p544 = por %p542, %p543
    %s546 = sadd.s32 %s545, 1
    %p549 = scmp.eq.s32.totalorder %s29, 1
    %p550 = scmp.ne.s32.totalorder %s545, %s547
    %p551 = scmp.eq.s32.totalorder %s29, 0
    %p552 = por %p550, %p551
    %p553 = scmp.ne.s32.totalorder %s545, %s547
    %p554 = scmp.eq.s32.totalorder %s34, 1
    %p555 = por %p553, %p554
    %p556 = scmp.ne.s32.totalorder %s547, %s548
    %p557 = scmp.eq.s32.totalorder %s34, 0
    %p558 = por %p556, %p557
    %p559 = scmp.ne.s32.totalorder %s547, %s548
    %p560 = scmp.eq.s32.totalorder %s35, 1
    %p561 = por %p559, %p560
    %p563 = scmp.ne.s32.totalorder %s548, %s562
    %p564 = scmp.eq.s32.totalorder %s35, 0
    %p565 = por %p563, %p564
    %s566 = ssub.s32 %s36, %s48
    %s567 = ssub.s32 %s37, %s44
    %s568 = sor.u32 %s566, %s567
    %p569 = scmp.eq.s32.totalorder %s568, 0
    %s571 = sadd.s32 %s570, 1
    %s572 = scalar_select %p569, %s570, %s571
    %p575 = pneg %p569
    %p576 = scmp.eq.s32.totalorder %s29, 1
    %p577 = por %p575, %p576
    %p578 = scmp.ne.s32.totalorder %s570, %s573
    %p579 = scmp.eq.s32.totalorder %s29, 0
    %p580 = por %p578, %p579
    %p581 = scmp.ne.s32.totalorder %s570, %s573
    %p582 = scmp.eq.s32.totalorder %s34, 1
    %p583 = por %p581, %p582
    %p584 = scmp.ne.s32.totalorder %s573, %s574
    %p585 = scmp.eq.s32.totalorder %s34, 0
    %p586 = por %p584, %p585
    %p587 = scmp.ne.s32.totalorder %s573, %s574
    %p588 = scmp.eq.s32.totalorder %s35, 1
    %p589 = por %p587, %p588
    %p591 = scmp.ne.s32.totalorder %s574, %s590
    %p592 = scmp.eq.s32.totalorder %s35, 0
    %p593 = por %p591, %p592
    %p594 = scmp.le.s32.totalorder 1, %s29
    %p595 = scmp.lt.s32.totalorder %s29, 3
    %p596 = pnand %p594, %p595
    %p597 = pneg %p596
    // Predicated region
    $region9: #{decoder_forward.9} parent=5 // pred_check
      _
    $region10: #{decoder_forward.9} parent=5 // pred_check_branch
      %599 = sbr.rel (%p596) target = $region12
    $region11: #{decoder_forward.9} parent=5 // pred_region
      %s600 = ssub.s32 %s29, 1
      // Predicated region
      $region13: #{decoder_forward.9} parent=11 // pred_check
        %p601 = pneg %p222
      $region14: #{decoder_forward.9} parent=11 // pred_check_branch
        %603 = sbr.rel (%p601) target = $region16
      $region15: #{decoder_forward.9} parent=11 // pred_region
        _
      $region16: #{decoder_forward.9} parent=11 // pred_fallthru
        _
      // Predicated region
      $region17: #{decoder_forward.9} parent=11 // pred_check
        %p604 = pneg %p243
      $region18: #{decoder_forward.9} parent=11 // pred_check_branch
        %606 = sbr.rel (%p604) target = $region20
      $region19: #{decoder_forward.9} parent=11 // pred_region
        _
      $region20: #{decoder_forward.9} parent=11 // pred_fallthru
        _
      // Predicated region
      $region21: #{decoder_forward.9} parent=11 // pred_check
        %p607 = pneg %p264
      $region22: #{decoder_forward.9} parent=11 // pred_check_branch
        %609 = sbr.rel (%p607) target = $region24
      $region23: #{decoder_forward.9} parent=11 // pred_region
        _
      $region24: #{decoder_forward.9} parent=11 // pred_fallthru
        _
      // Predicated region
      $region25: #{decoder_forward.9} parent=11 // pred_check
        %p610 = pneg %p285
      $region26: #{decoder_forward.9} parent=11 // pred_check_branch
        %612 = sbr.rel (%p610) target = $region28
      $region27: #{decoder_forward.9} parent=11 // pred_region
        _
      $region28: #{decoder_forward.9} parent=11 // pred_fallthru
        _
      // Predicated region
      $region29: #{decoder_forward.9} parent=11 // pred_check
        %p613 = pneg %p306
      $region30: #{decoder_forward.9} parent=11 // pred_check_branch
        %615 = sbr.rel (%p613) target = $region32
      $region31: #{decoder_forward.9} parent=11 // pred_region
        _
      $region32: #{decoder_forward.9} parent=11 // pred_fallthru
        _
      // Predicated region
      $region33: #{decoder_forward.9} parent=11 // pred_check
        %p616 = pneg %p327
      $region34: #{decoder_forward.9} parent=11 // pred_check_branch
        %618 = sbr.rel (%p616) target = $region36
      $region35: #{decoder_forward.9} parent=11 // pred_region
        _
      $region36: #{decoder_forward.9} parent=11 // pred_fallthru
        _
      // Predicated region
      $region37: #{decoder_forward.9} parent=11 // pred_check
        %p619 = pneg %p348
      $region38: #{decoder_forward.9} parent=11 // pred_check_branch
        %621 = sbr.rel (%p619) target = $region40
      $region39: #{decoder_forward.9} parent=11 // pred_region
        _
      $region40: #{decoder_forward.9} parent=11 // pred_fallthru
        _
      // Predicated region
      $region41: #{decoder_forward.9} parent=11 // pred_check
        %p622 = pneg %p369
      $region42: #{decoder_forward.9} parent=11 // pred_check_branch
        %624 = sbr.rel (%p622) target = $region44
      $region43: #{decoder_forward.9} parent=11 // pred_region
        _
      $region44: #{decoder_forward.9} parent=11 // pred_fallthru
        _
      // Predicated region
      $region45: #{decoder_forward.9} parent=11 // pred_check
        %p625 = pneg %p390
      $region46: #{decoder_forward.9} parent=11 // pred_check_branch
        %627 = sbr.rel (%p625) target = $region48
      $region47: #{decoder_forward.9} parent=11 // pred_region
        _
      $region48: #{decoder_forward.9} parent=11 // pred_fallthru
        _
      // Predicated region
      $region49: #{decoder_forward.9} parent=11 // pred_check
        %p628 = pneg %p411
      $region50: #{decoder_forward.9} parent=11 // pred_check_branch
        %630 = sbr.rel (%p628) target = $region52
      $region51: #{decoder_forward.9} parent=11 // pred_region
        _
      $region52: #{decoder_forward.9} parent=11 // pred_fallthru
        _
      // Predicated region
      $region53: #{decoder_forward.9} parent=11 // pred_check
        %p631 = pneg %p432
      $region54: #{decoder_forward.9} parent=11 // pred_check_branch
        %633 = sbr.rel (%p631) target = $region56
      $region55: #{decoder_forward.9} parent=11 // pred_region
        _
      $region56: #{decoder_forward.9} parent=11 // pred_fallthru
        _
      // Predicated region
      $region57: #{decoder_forward.9} parent=11 // pred_check
        %p634 = pneg %p453
      $region58: #{decoder_forward.9} parent=11 // pred_check_branch
        %636 = sbr.rel (%p634) target = $region60
      $region59: #{decoder_forward.9} parent=11 // pred_region
        _
      $region60: #{decoder_forward.9} parent=11 // pred_fallthru
        _
      // Predicated region
      $region61: #{decoder_forward.9} parent=11 // pred_check
        %p637 = pneg %p474
      $region62: #{decoder_forward.9} parent=11 // pred_check_branch
        %639 = sbr.rel (%p637) target = $region64
      $region63: #{decoder_forward.9} parent=11 // pred_region
        _
      $region64: #{decoder_forward.9} parent=11 // pred_fallthru
        _
      // Predicated region
      $region65: #{decoder_forward.9} parent=11 // pred_check
        %p640 = pneg %p495
      $region66: #{decoder_forward.9} parent=11 // pred_check_branch
        %642 = sbr.rel (%p640) target = $region68
      $region67: #{decoder_forward.9} parent=11 // pred_region
        _
      $region68: #{decoder_forward.9} parent=11 // pred_fallthru
        _
      // Predicated region
      $region69: #{decoder_forward.9} parent=11 // pred_check
        %p643 = pneg %p516
      $region70: #{decoder_forward.9} parent=11 // pred_check_branch
        %645 = sbr.rel (%p643) target = $region72
      $region71: #{decoder_forward.9} parent=11 // pred_region
        _
      $region72: #{decoder_forward.9} parent=11 // pred_fallthru
        _
      // Predicated region
      $region73: #{decoder_forward.9} parent=11 // pred_check
        %p646 = pneg %p537
      $region74: #{decoder_forward.9} parent=11 // pred_check_branch
        %648 = sbr.rel (%p646) target = $region76
      $region75: #{decoder_forward.9} parent=11 // pred_region
        _
      $region76: #{decoder_forward.9} parent=11 // pred_fallthru
        _
      // Predicated region
      $region77: #{decoder_forward.9} parent=11 // pred_check
        %p649 = pneg %p558
      $region78: #{decoder_forward.9} parent=11 // pred_check_branch
        %651 = sbr.rel (%p649) target = $region80
      $region79: #{decoder_forward.9} parent=11 // pred_region
        _
      $region80: #{decoder_forward.9} parent=11 // pred_fallthru
        _
    $region12: #{decoder_forward.9} parent=5 // pred_fallthru
      _
    %p652 = scmp.lt.s32.totalorder %s29, 2
    // Predicated region
    $region81: #{decoder_forward.9} parent=5 // pred_check
      %p653 = pneg %p652
    $region82: #{decoder_forward.9} parent=5 // pred_check_branch
      %655 = sbr.rel (%p653) target = $region84
    $region83: #{decoder_forward.9} parent=5 // pred_region
      // Predicated region
      $region85: #{decoder_forward.9} parent=83 // pred_check
        %p656 = pneg %p63
      $region86: #{decoder_forward.9} parent=83 // pred_check_branch
        %658 = sbr.rel (%p656) target = $region88
      $region87: #{decoder_forward.9} parent=83 // pred_region
        %p659 = scmp.lt.s32.totalorder %s36, 1
        %s660 = scalar_select %p659, %s36, 1
        %p661 = scmp.lt.s32.totalorder %s37, 0
        %s662 = scalar_select %p661, %s37, 0
        %s663 = sadd.s32 %s662, %s660
        %s664 = smul.addr %s663, 8
        %s665 = scalar_lea.vmem %s0, %s664
      $region88: #{decoder_forward.9} parent=83 // pred_fallthru
        _
      // Predicated region
      $region89: #{decoder_forward.9} parent=83 // pred_check
        %p666 = pneg %p91
      $region90: #{decoder_forward.9} parent=83 // pred_check_branch
        %668 = sbr.rel (%p666) target = $region92
      $region91: #{decoder_forward.9} parent=83 // pred_region
        %p669 = scmp.lt.s32.totalorder %s36, 1
        %s670 = scalar_select %p669, %s36, 1
        %p671 = scmp.lt.s32.totalorder %s37, 0
        %s672 = scalar_select %p671, %s37, 0
        %s673 = sadd.s32 %s672, %s670
        %s674 = smul.addr %s673, 4
        %s675 = scalar_lea.vmem %s1, %s674
      $region92: #{decoder_forward.9} parent=83 // pred_fallthru
        _
      // Predicated region
      $region93: #{decoder_forward.9} parent=83 // pred_check
        %p676 = pneg %p117
      $region94: #{decoder_forward.9} parent=83 // pred_check_branch
        %678 = sbr.rel (%p676) target = $region96
      $region95: #{decoder_forward.9} parent=83 // pred_region
        %p679 = scmp.lt.s32.totalorder %s36, 1
        %s680 = scalar_select %p679, %s36, 1
        %s681 = smul.addr %s680, 4
        %s682 = scalar_lea.vmem %s2, %s681
      $region96: #{decoder_forward.9} parent=83 // pred_fallthru
        _
      // Predicated region
      $region97: #{decoder_forward.9} parent=83 // pred_check
        %p683 = pneg %p143
      $region98: #{decoder_forward.9} parent=83 // pred_check_branch
        %685 = sbr.rel (%p683) target = $region100
      $region99: #{decoder_forward.9} parent=83 // pred_region
        %p686 = scmp.lt.s32.totalorder %s36, 1
        %s687 = scalar_select %p686, %s36, 1
        %s688 = smul.addr %s687, 4
        %s689 = scalar_lea.vmem %s3, %s688
      $region100: #{decoder_forward.9} parent=83 // pred_fallthru
        _
      // Predicated region
      $region101: #{decoder_forward.9} parent=83 // pred_check
        %p690 = pneg %p169
      $region102: #{decoder_forward.9} parent=83 // pred_check_branch
        %692 = sbr.rel (%p690) target = $region104
      $region103: #{decoder_forward.9} parent=83 // pred_region
        %p693 = scmp.lt.s32.totalorder %s36, 1
        %s694 = scalar_select %p693, %s36, 1
        %s695 = smul.addr %s694, 4
        %s696 = scalar_lea.vmem %s4, %s695
      $region104: #{decoder_forward.9} parent=83 // pred_fallthru
        _
      // Predicated region
      $region105: #{decoder_forward.9} parent=83 // pred_check
        %p697 = pneg %p195
      $region106: #{decoder_forward.9} parent=83 // pred_check_branch
        %699 = sbr.rel (%p697) target = $region108
      $region107: #{decoder_forward.9} parent=83 // pred_region
        %p700 = scmp.lt.s32.totalorder %s36, 1
        %s701 = scalar_select %p700, %s36, 1
        %s702 = smul.addr %s701, 4
        %s703 = scalar_lea.vmem %s5, %s702
      $region108: #{decoder_forward.9} parent=83 // pred_fallthru
        _
    $region84: #{decoder_forward.9} parent=5 // pred_fallthru
      _
    %p704 = scmp.le.s32.totalorder 1, %s29
    %p705 = scmp.lt.s32.totalorder %s29, 3
    %p706 = pnand %p704, %p705
    %p707 = pneg %p706
    // Predicated region
    $region109: #{decoder_forward.9} parent=5 // pred_check
      _
    $region110: #{decoder_forward.9} parent=5 // pred_check_branch
      %709 = sbr.rel (%p706) target = $region112
    $region111: #{decoder_forward.9} parent=5 // pred_region
      %s710 = ssub.s32 %s29, 1
      %p711 = scmp.lt.s32.totalorder %s38, 1
      %s712 = scalar_select %p711, %s38, 1
      %p713 = scmp.lt.s32.totalorder %s39, 0
      %s714 = scalar_select %p713, %s39, 0
      %s715 = sadd.s32 %s714, %s712
      %s716 = smul.addr %s715, 8
      %s717 = scalar_lea.vmem %s0, %s716
      %p718 = pneg %p69
      %p719 = pneg %p66
      %p720 = scmp.lt.s32.totalorder %s38, 1
      %s721 = scalar_select %p720, %s38, 1
      %p722 = scmp.lt.s32.totalorder %s39, 0
      %s723 = scalar_select %p722, %s39, 0
      %s724 = sadd.s32 %s723, %s721
      %s725 = smul.addr %s724, 4
      %s726 = scalar_lea.vmem %s1, %s725
      %p727 = pneg %p97
      %p728 = pneg %p94
      %p729 = scmp.lt.s32.totalorder %s38, 1
      %s730 = scalar_select %p729, %s38, 1
      %s731 = smul.addr %s730, 4
      %s732 = scalar_lea.vmem %s2, %s731
      %p733 = pneg %p123
      %p734 = pneg %p120
      %p735 = scmp.lt.s32.totalorder %s38, 1
      %s736 = scalar_select %p735, %s38, 1
      %s737 = smul.addr %s736, 4
      %s738 = scalar_lea.vmem %s3, %s737
      %p739 = pneg %p149
      %p740 = pneg %p146
      %p741 = scmp.lt.s32.totalorder %s38, 1
      %s742 = scalar_select %p741, %s38, 1
      %s743 = smul.addr %s742, 4
      %s744 = scalar_lea.vmem %s4, %s743
      %p745 = pneg %p175
      %p746 = pneg %p172
      %p747 = scmp.lt.s32.totalorder %s38, 1
      %s748 = scalar_select %p747, %s38, 1
      %s749 = smul.addr %s748, 4
      %s750 = scalar_lea.vmem %s5, %s749
      %p751 = pneg %p201
      %p752 = pneg %p198
      %p753 = pneg %p222
      %p754 = pneg %p219
      %p755 = pneg %p243
      %p756 = pneg %p240
      %p757 = pneg %p264
      %p758 = pneg %p261
      %p759 = pneg %p285
      %p760 = pneg %p282
      %p761 = pneg %p306
      %p762 = pneg %p303
      %p763 = pneg %p327
      %p764 = pneg %p324
      %p765 = pneg %p348
      %p766 = pneg %p345
      %p767 = pneg %p369
      %p768 = pneg %p366
      %p769 = pneg %p390
      %p770 = pneg %p387
      %p771 = pneg %p411
      %p772 = pneg %p408
      %p773 = pneg %p432
      %p774 = pneg %p429
      %p775 = pneg %p453
      %p776 = pneg %p450
      %p777 = pneg %p474
      %p778 = pneg %p471
      %p779 = pneg %p495
      %p780 = pneg %p492
      %p781 = pneg %p516
      %p782 = pneg %p513
      %p783 = pneg %p537
      %p784 = pneg %p534
      %p785 = pneg %p558
      %p786 = pneg %p555
      %p787 = pneg %p586
      %p788 = pneg %p583
      %p789 = scmp.lt.s32.totalorder %s38, 1
      %s790 = scalar_select %p789, %s38, 1
      %p791 = scmp.lt.s32.totalorder %s39, 0
      %s792 = scalar_select %p791, %s39, 0
      %s793 = sadd.s32 %s792, %s790
      %s794 = smul.addr %s793, 8
      %s795 = scalar_lea.vmem %s23, %s794
      %p796 = scmp.lt.s32.totalorder %s38, 1
      %s797 = scalar_select %p796, %s38, 1
      %p798 = scmp.lt.s32.totalorder %s39, 0
      %s799 = scalar_select %p798, %s39, 0
      %s800 = sadd.s32 %s799, %s797
      %s801 = smul.addr %s800, 8
      %s802 = scalar_lea.vmem %s0, %s801
      %p803 = scmp.lt.s32.totalorder %s38, 1
      %s804 = scalar_select %p803, %s38, 1
      %p805 = scmp.lt.s32.totalorder %s39, 0
      %s806 = scalar_select %p805, %s39, 0
      %s807 = sadd.s32 %s806, %s804
      %s808 = smul.addr %s807, 4
      %s809 = scalar_lea.vmem %s1, %s808
      %p810 = scmp.lt.s32.totalorder %s38, 1
      %s811 = scalar_select %p810, %s38, 1
      %s812 = smul.addr %s811, 4
      %s813 = scalar_lea.vmem %s2, %s812
      %p814 = scmp.lt.s32.totalorder %s38, 1
      %s815 = scalar_select %p814, %s38, 1
      %s816 = smul.addr %s815, 4
      %s817 = scalar_lea.vmem %s3, %s816
      %p818 = scmp.lt.s32.totalorder %s38, 1
      %s819 = scalar_select %p818, %s38, 1
      %s820 = smul.addr %s819, 4
      %s821 = scalar_lea.vmem %s4, %s820
      %p822 = scmp.lt.s32.totalorder %s38, 1
      %s823 = scalar_select %p822, %s38, 1
      %s824 = smul.addr %s823, 4
      %s825 = scalar_lea.vmem %s5, %s824
      %p826 = scmp.lt.s32.totalorder %s38, 1
      %s827 = scalar_select %p826, %s38, 1
      %p828 = scmp.lt.s32.totalorder %s39, 0
      %s829 = scalar_select %p828, %s39, 0
      %s830 = sadd.s32 %s829, %s827
      %s831 = smul.addr %s830, 8
      %s832 = scalar_lea.vmem %s23, %s831
      %v834 = vld [vmem:[%s6] sm:$0x1]
      %v835 = vld [vmem:[%s7] sm:$0x1]
      %v836 = vld [vmem:[%s8] sm:$0x1]
      %v837 = vld [vmem:[%s9] sm:$0x1]
      %v838 = vld [vmem:[%s10] sm:$0x1]
      %v839 = vld [vmem:[%s11] sm:$0x1]
      %v840 = vld [vmem:[%s12] sm:$0xf]
      %v841 = vld [vmem:[%s12 + $0x4] sm:$0xf]
      %v842 = vld [vmem:[%s12 + $0x8] sm:$0xf]
      %v843 = vld [vmem:[%s12 + $0xc] sm:$0xf]
      %v844 = vld [vmem:[%s13] sm:$0xf]
      %v845 = vld [vmem:[%s13 + $0x4] sm:$0xf]
      %v846 = vld [vmem:[%s13 + $0x8] sm:$0xf]
      %v847 = vld [vmem:[%s13 + $0xc] sm:$0xf]
      %v848 = vld [vmem:[%s14] sm:$0xf]
      %v849 = vld [vmem:[%s14 + $0x4] sm:$0xf]
      %v850 = vld [vmem:[%s14 + $0x8] sm:$0xf]
      %v851 = vld [vmem:[%s14 + $0xc] sm:$0xf]
      %v852 = vld [vmem:[%s15] sm:$0xf]
      %v853 = vld [vmem:[%s15 + $0x4] sm:$0xf]
      %v854 = vld [vmem:[%s15 + $0x8] sm:$0xf]
      %v855 = vld [vmem:[%s15 + $0xc] sm:$0xf]
      %v856 = vld [vmem:[%s16] sm:$0x1]
      %v857 = vld [vmem:[%s17] sm:$0xf]
      %v858 = vld [vmem:[%s17 + $0x4] sm:$0xf]
      %v859 = vld [vmem:[%s17 + $0x8] sm:$0xf]
      %v860 = vld [vmem:[%s17 + $0xc] sm:$0xf]
      %v861 = vld [vmem:[%s17 + $0x10] sm:$0xf]
      %v862 = vld [vmem:[%s17 + $0x14] sm:$0xf]
      %v863 = vld [vmem:[%s17 + $0x18] sm:$0xf]
      %v864 = vld [vmem:[%s17 + $0x1c] sm:$0xf]
      %v865 = vld [vmem:[%s18] sm:$0x1]
      %v866 = vld [vmem:[%s19] sm:$0xf]
      %v867 = vld [vmem:[%s19 + $0x4] sm:$0xf]
      %v868 = vld [vmem:[%s19 + $0x8] sm:$0xf]
      %v869 = vld [vmem:[%s19 + $0xc] sm:$0xf]
      %v870 = vld [vmem:[%s20] sm:$0x1]
      %v871 = vld [vmem:[%s21] sm:$0xf]
      %v872 = vld [vmem:[%s21 + $0x4] sm:$0xf]
      %v873 = vld [vmem:[%s21 + $0x8] sm:$0xf]
      %v874 = vld [vmem:[%s21 + $0xc] sm:$0xf]
      %v875 = vld [vmem:[%s21 + $0x10] sm:$0xf]
      %v876 = vld [vmem:[%s21 + $0x14] sm:$0xf]
      %v877 = vld [vmem:[%s21 + $0x18] sm:$0xf]
      %v878 = vld [vmem:[%s21 + $0x1c] sm:$0xf]
      %v879 = vld [vmem:[%s22] sm:$0x1]
      %v880 = vld [vmem:[%s802] sm:$0xff]
      %s881 = smul.u32 %s39, 8
      %v882 = vlaneseq
      %v883 = vshrl.u32 %v882, 7
      %v884 = vstv %s881
      %v885 = vadd.s32 %v884, %v883
      %v886 = vlaneseq
      %v887 = vand.u32 %v886, 127
      %vm888 = vcmp.gt.s32.totalorder %v887, %v885
      %v889 = vsel %vm888, -1e+09, 0.0
      %v890 = vld [vmem:[%s809] sm:$0xf]
      %v891 = vld [vmem:[%s813] sm:$0xf]
      %v892 = vld [vmem:[%s817] sm:$0xf]
      %v893 = vld [vmem:[%s821] sm:$0xf]
      %v894 = vld [vmem:[%s825] sm:$0xf]
      %vm895 = vcmask 64512
      %v897 = vsel %vm895, %v890, 0
      %v900 = vsel %vm895, %v891, 0
      %902 = vmatprep.subr.bf16.mxu0 0
      %903 = vmatpush1.bf16.xpose.msra.mxu0 0
      %904 = vmatprep.subr.bf16.mxu0 0
      %905 = vmatpush1.bf16.xpose.msra.mxu0 0
      %906 = vmatprep.subr.bf16.mxu0 0
      %907 = vmatpush1.bf16.xpose.msra.mxu0 0
      %908 = vmatprep.subr.bf16.mxu0 0
      %909 = vmatpush1.bf16.xpose.msra.mxu0 0
      %910 = vmatprep.subr.bf16.mxu0 0
      %911 = vmatpush1.bf16.xpose.msra.mxu0 0
      %912 = vmatprep.subr.bf16.mxu0 0
      %913 = vmatpush1.bf16.xpose.msra.mxu0 0
      %914 = vmatprep.subr.bf16.mxu0 0
      %915 = vmatpush1.bf16.xpose.msra.mxu0 0
      %916 = vmatprep.subr.bf16.mxu0 0
      %917 = vmatpush1.bf16.xpose.msra.mxu0 %v900
      %918 = vmatprep.subr.bf16.mxu0 0
      %919 = vmatpush2.bf16.xpose.msra.mxu0 0
      %920 = vmatprep.subr.bf16.mxu0 0
      %921 = vmatpush2.bf16.xpose.msra.mxu0 0
      %922 = vmatprep.subr.bf16.mxu0 0
      %923 = vmatpush2.bf16.xpose.msra.mxu0 0
      %924 = vmatprep.subr.bf16.mxu0 0
      %925 = vmatpush2.bf16.xpose.msra.mxu0 0
      %926 = vmatprep.subr.bf16.mxu0 0
      %927 = vmatpush2.bf16.xpose.msra.mxu0 0
      %928 = vmatprep.subr.bf16.mxu0 0
      %929 = vmatpush2.bf16.xpose.msra.mxu0 0
      %930 = vmatprep.subr.bf16.mxu0 0
      %931 = vmatpush2.bf16.xpose.msra.mxu0 0
      %932 = vmatprep.subr.bf16.mxu0 0
      %933 = vmatpush2.bf16.xpose.msra.mxu0 0
      %934 = vmatprep.mubr.bf16.mxu0 0
      %935 = vmatmul.mubr.bf16.gmra.mxu0 %v897
      %v936 = vpop.f32.mrf.mxu0
      %v937 = vadd.f32 %v889, %v936
      %v938 = vpop.f32.mrf.mxu0
      %v939 = vpop.f32.mrf.mxu0
      %v940 = vpop.f32.mrf.mxu0
      %941 = vdwg.mxu0
      %v942 = vsel %vm895, %v937, -inf
      %943 = vmax.xlane.f32.xlu0 %v942
      %v944 = vpop.xlane.xlu0 %943
      %v945 = vsub.f32 %v937, %v944
      %v946 = vmul.f32 %v945, 1.442695
      %v947 = vpow.pop %v946
      %v948 = vsel %vm895, %v947, 0.0
      %949 = vadd.xlane.f32.xlu0 %v948
      %v950 = vpop.xlane.xlu0 %949
      %v951 = vrcp.pop %v950
      %v952 = vmul.f32 1.0, %v951
      %v953 = vmul.f32 %v947, %v952
      %v954 = vpack.c.bf16 %v953, %v953
      %v956 = vsel %vm895, %v954, 0
      %vm958 = vcmask 1043456
      %v960 = vsel %vm958, %v892, 0
      %962 = vmatprep.subr.bf16.mxu0 0
      %963 = vmatpush1.bf16.msra.mxu0 0
      %964 = vmatprep.subr.bf16.mxu0 0
      %965 = vmatpush1.bf16.msra.mxu0 0
      %966 = vmatprep.subr.bf16.mxu0 0
      %967 = vmatpush1.bf16.msra.mxu0 0
      %968 = vmatprep.subr.bf16.mxu0 0
      %969 = vmatpush1.bf16.msra.mxu0 0
      %970 = vmatprep.subr.bf16.mxu0 0
      %971 = vmatpush1.bf16.msra.mxu0 0
      %972 = vmatprep.subr.bf16.mxu0 0
      %973 = vmatpush1.bf16.msra.mxu0 0
      %974 = vmatprep.subr.bf16.mxu0 0
      %975 = vmatpush1.bf16.msra.mxu0 0
      %976 = vmatprep.subr.bf16.mxu0 0
      %977 = vmatpush1.bf16.msra.mxu0 %v960
      %978 = vmatprep.subr.bf16.mxu0 0
      %979 = vmatpush2.bf16.msra.mxu0 0
      %980 = vmatprep.subr.bf16.mxu0 0
      %981 = vmatpush2.bf16.msra.mxu0 0
      %982 = vmatprep.subr.bf16.mxu0 0
      %983 = vmatpush2.bf16.msra.mxu0 0
      %984 = vmatprep.subr.bf16.mxu0 0
      %985 = vmatpush2.bf16.msra.mxu0 0
      %986 = vmatprep.subr.bf16.mxu0 0
      %987 = vmatpush2.bf16.msra.mxu0 0
      %988 = vmatprep.subr.bf16.mxu0 0
      %989 = vmatpush2.bf16.msra.mxu0 0
      %990 = vmatprep.subr.bf16.mxu0 0
      %991 = vmatpush2.bf16.msra.mxu0 0
      %992 = vmatprep.subr.bf16.mxu0 0
      %993 = vmatpush2.bf16.msra.mxu0 0
      %994 = vmatprep.mubr.bf16.mxu0 0
      %995 = vmatmul.mubr.bf16.gmra.mxu0 %v956
      %v996 = vpop.f32.mrf.mxu0
      %v997 = vadd.f32 0.0, %v996
      %v998 = vpop.f32.mrf.mxu0
      %v999 = vpop.f32.mrf.mxu0
      %v1000 = vpop.f32.mrf.mxu0
      %1001 = vdwg.mxu0
      %v1002 = vpack.c.bf16 %v997, %v997
      %v1004 = vunpack.c.l.b16 %v890
      %v1005 = vpack.c.b16 %v1004, %v1004
      %1006 = vrot.lane.b32.xlu0 %v1005, 120
      %v1007 = vpop.permute.xlu0 %1006
      %v1009 = vunpack.c.l.b16 %v891
      %v1010 = vpack.c.b16 %v1009, %v1009
      %1011 = vrot.lane.b32.xlu0 %v1010, 120
      %v1012 = vpop.permute.xlu0 %1011
      %v1014 = vsel %vm895, %v1007, 0
      %v1017 = vsel %vm895, %v1012, 0
      %1019 = vmatprep.subr.bf16.mxu0 0
      %1020 = vmatpush1.bf16.xpose.msra.mxu0 0
      %1021 = vmatprep.subr.bf16.mxu0 0
      %1022 = vmatpush1.bf16.xpose.msra.mxu0 0
      %1023 = vmatprep.subr.bf16.mxu0 0
      %1024 = vmatpush1.bf16.xpose.msra.mxu0 0
      %1025 = vmatprep.subr.bf16.mxu0 0
      %1026 = vmatpush1.bf16.xpose.msra.mxu0 0
      %1027 = vmatprep.subr.bf16.mxu0 0
      %1028 = vmatpush1.bf16.xpose.msra.mxu0 0
      %1029 = vmatprep.subr.bf16.mxu0 0
      %1030 = vmatpush1.bf16.xpose.msra.mxu0 0
      %1031 = vmatprep.subr.bf16.mxu0 0
      %1032 = vmatpush1.bf16.xpose.msra.mxu0 0
      %1033 = vmatprep.subr.bf16.mxu0 0
      %1034 = vmatpush1.bf16.xpose.msra.mxu0 %v1017
      %1035 = vmatprep.subr.bf16.mxu0 0
      %1036 = vmatpush2.bf16.xpose.msra.mxu0 0
      %1037 = vmatprep.subr.bf16.mxu0 0
      %1038 = vmatpush2.bf16.xpose.msra.mxu0 0
      %1039 = vmatprep.subr.bf16.mxu0 0
      %1040 = vmatpush2.bf16.xpose.msra.mxu0 0
      %1041 = vmatprep.subr.bf16.mxu0 0
      %1042 = vmatpush2.bf16.xpose.msra.mxu0 0
      %1043 = vmatprep.subr.bf16.mxu0 0
      %1044 = vmatpush2.bf16.xpose.msra.mxu0 0
      %1045 = vmatprep.subr.bf16.mxu0 0
      %1046 = vmatpush2.bf16.xpose.msra.mxu0 0
      %1047 = vmatprep.subr.bf16.mxu0 0
      %1048 = vmatpush2.bf16.xpose.msra.mxu0 0
      %1049 = vmatprep.subr.bf16.mxu0 0
      %1050 = vmatpush2.bf16.xpose.msra.mxu0 0
      %1051 = vmatprep.mubr.bf16.mxu0 0
      %1052 = vmatmul.mubr.bf16.gmra.mxu0 %v1014
      %v1053 = vpop.f32.mrf.mxu0
      %v1054 = vadd.f32 %v889, %v1053
      %v1055 = vpop.f32.mrf.mxu0
      %v1056 = vpop.f32.mrf.mxu0
      %v1057 = vpop.f32.mrf.mxu0
      %1058 = vdwg.mxu0
      %v1059 = vsel %vm895, %v1054, -inf
      %1060 = vmax.xlane.f32.xlu0 %v1059
      %v1061 = vpop.xlane.xlu0 %1060
      %v1062 = vsub.f32 %v1054, %v1061
      %v1063 = vmul.f32 %v1062, 1.442695
      %v1064 = vpow.pop %v1063
      %v1065 = vsel %vm895, %v1064, 0.0
      %1066 = vadd.xlane.f32.xlu0 %v1065
      %v1067 = vpop.xlane.xlu0 %1066
      %v1068 = vrcp.pop %v1067
      %v1069 = vmul.f32 1.0, %v1068
      %v1070 = vmul.f32 %v1064, %v1069
      %v1071 = vpack.c.bf16 %v1070, %v1070
      %v1073 = vunpack.c.l.b16 %v892
      %v1074 = vpack.c.b16 %v1073, %v1073
      %1075 = vrot.lane.b32.xlu0 %v1074, 120
      %v1076 = vpop.permute.xlu0 %1075
      %v1078 = vsel %vm895, %v1071, 0
      %v1081 = vsel %vm958, %v1076, 0
      %1083 = vmatprep.subr.bf16.mxu0 0
      %1084 = vmatpush1.bf16.msra.mxu0 0
      %1085 = vmatprep.subr.bf16.mxu0 0
      %1086 = vmatpush1.bf16.msra.mxu0 0
      %1087 = vmatprep.subr.bf16.mxu0 0
      %1088 = vmatpush1.bf16.msra.mxu0 0
      %1089 = vmatprep.subr.bf16.mxu0 0
      %1090 = vmatpush1.bf16.msra.mxu0 0
      %1091 = vmatprep.subr.bf16.mxu0 0
      %1092 = vmatpush1.bf16.msra.mxu0 0
      %1093 = vmatprep.subr.bf16.mxu0 0
      %1094 = vmatpush1.bf16.msra.mxu0 0
      %1095 = vmatprep.subr.bf16.mxu0 0
      %1096 = vmatpush1.bf16.msra.mxu0 0
      %1097 = vmatprep.subr.bf16.mxu0 0
      %1098 = vmatpush1.bf16.msra.mxu0 %v1081
      %1099 = vmatprep.subr.bf16.mxu0 0
      %1100 = vmatpush2.bf16.msra.mxu0 0
      %1101 = vmatprep.subr.bf16.mxu0 0
      %1102 = vmatpush2.bf16.msra.mxu0 0
      %1103 = vmatprep.subr.bf16.mxu0 0
      %1104 = vmatpush2.bf16.msra.mxu0 0
      %1105 = vmatprep.subr.bf16.mxu0 0
      %1106 = vmatpush2.bf16.msra.mxu0 0
      %1107 = vmatprep.subr.bf16.mxu0 0
      %1108 = vmatpush2.bf16.msra.mxu0 0
      %1109 = vmatprep.subr.bf16.mxu0 0
      %1110 = vmatpush2.bf16.msra.mxu0 0
      %1111 = vmatprep.subr.bf16.mxu0 0
      %1112 = vmatpush2.bf16.msra.mxu0 0
      %1113 = vmatprep.subr.bf16.mxu0 0
      %1114 = vmatpush2.bf16.msra.mxu0 0
      %1115 = vmatprep.mubr.bf16.mxu0 0
      %1116 = vmatmul.mubr.bf16.gmra.mxu0 %v1078
      %v1117 = vpop.f32.mrf.mxu0
      %v1118 = vadd.f32 0.0, %v1117
      %v1119 = vpop.f32.mrf.mxu0
      %v1120 = vpop.f32.mrf.mxu0
      %v1121 = vpop.f32.mrf.mxu0
      %1122 = vdwg.mxu0
      %v1123 = vpack.c.bf16 %v1118, %v1118
      %v1125 = vsel %vm895, %v1123, 0
      %v1128 = vsel %vm958, %v841, 0
      %1130 = vmatprep.subr.bf16.mxu0 0
      %1131 = vmatpush1.bf16.msra.mxu0 0
      %1132 = vmatprep.subr.bf16.mxu0 0
      %1133 = vmatpush1.bf16.msra.mxu0 0
      %1134 = vmatprep.subr.bf16.mxu0 0
      %1135 = vmatpush1.bf16.msra.mxu0 0
      %1136 = vmatprep.subr.bf16.mxu0 0
      %1137 = vmatpush1.bf16.msra.mxu0 0
      %1138 = vmatprep.subr.bf16.mxu0 0
      %1139 = vmatpush1.bf16.msra.mxu0 0
      %1140 = vmatprep.subr.bf16.mxu0 0
      %1141 = vmatpush1.bf16.msra.mxu0 0
      %1142 = vmatprep.subr.bf16.mxu0 0
      %1143 = vmatpush1.bf16.msra.mxu0 0
      %1144 = vmatprep.subr.bf16.mxu0 0
      %1145 = vmatpush1.bf16.msra.mxu0 %v1128
      %1146 = vmatprep.subr.bf16.mxu0 0
      %1147 = vmatpush2.bf16.msra.mxu0 0
      %1148 = vmatprep.subr.bf16.mxu0 0
      %1149 = vmatpush2.bf16.msra.mxu0 0
      %1150 = vmatprep.subr.bf16.mxu0 0
      %1151 = vmatpush2.bf16.msra.mxu0 0
      %1152 = vmatprep.subr.bf16.mxu0 0
      %1153 = vmatpush2.bf16.msra.mxu0 0
      %1154 = vmatprep.subr.bf16.mxu0 0
      %1155 = vmatpush2.bf16.msra.mxu0 0
      %1156 = vmatprep.subr.bf16.mxu0 0
      %1157 = vmatpush2.bf16.msra.mxu0 0
      %1158 = vmatprep.subr.bf16.mxu0 0
      %1159 = vmatpush2.bf16.msra.mxu0 0
      %1160 = vmatprep.subr.bf16.mxu0 0
      %1161 = vmatpush2.bf16.msra.mxu0 0
      %1162 = vmatprep.mubr.bf16.mxu0 0
      %1163 = vmatmul.mubr.bf16.gmra.mxu0 %v1125
      %v1164 = vpop.f32.mrf.mxu0
      %v1165 = vadd.f32 0.0, %v1164
      %v1166 = vpop.f32.mrf.mxu0
      %v1167 = vpop.f32.mrf.mxu0
      %v1168 = vpop.f32.mrf.mxu0
      %1169 = vdwg.mxu0
      %v1171 = vsel %vm895, %v1002, 0
      %v1174 = vsel %vm958, %v840, 0
      %1176 = vmatprep.subr.bf16.mxu0 0
      %1177 = vmatpush1.bf16.msra.mxu0 0
      %1178 = vmatprep.subr.bf16.mxu0 0
      %1179 = vmatpush1.bf16.msra.mxu0 0
      %1180 = vmatprep.subr.bf16.mxu0 0
      %1181 = vmatpush1.bf16.msra.mxu0 0
      %1182 = vmatprep.subr.bf16.mxu0 0
      %1183 = vmatpush1.bf16.msra.mxu0 0
      %1184 = vmatprep.subr.bf16.mxu0 0
      %1185 = vmatpush1.bf16.msra.mxu0 0
      %1186 = vmatprep.subr.bf16.mxu0 0
      %1187 = vmatpush1.bf16.msra.mxu0 0
      %1188 = vmatprep.subr.bf16.mxu0 0
      %1189 = vmatpush1.bf16.msra.mxu0 0
      %1190 = vmatprep.subr.bf16.mxu0 0
      %1191 = vmatpush1.bf16.msra.mxu0 %v1174
      %1192 = vmatprep.subr.bf16.mxu0 0
      %1193 = vmatpush2.bf16.msra.mxu0 0
      %1194 = vmatprep.subr.bf16.mxu0 0
      %1195 = vmatpush2.bf16.msra.mxu0 0
      %1196 = vmatprep.subr.bf16.mxu0 0
      %1197 = vmatpush2.bf16.msra.mxu0 0
      %1198 = vmatprep.subr.bf16.mxu0 0
      %1199 = vmatpush2.bf16.msra.mxu0 0
      %1200 = vmatprep.subr.bf16.mxu0 0
      %1201 = vmatpush2.bf16.msra.mxu0 0
      %1202 = vmatprep.subr.bf16.mxu0 0
      %1203 = vmatpush2.bf16.msra.mxu0 0
      %1204 = vmatprep.subr.bf16.mxu0 0
      %1205 = vmatpush2.bf16.msra.mxu0 0
      %1206 = vmatprep.subr.bf16.mxu0 0
      %1207 = vmatpush2.bf16.msra.mxu0 0
      %1208 = vmatprep.mubr.bf16.mxu0 0
      %1209 = vmatmul.mubr.bf16.gmra.mxu0 %v1171
      %v1210 = vpop.f32.mrf.mxu0
      %v1211 = vadd.f32 %v1165, %v1210
      %v1212 = vpop.f32.mrf.mxu0
      %v1213 = vpop.f32.mrf.mxu0
      %v1214 = vpop.f32.mrf.mxu0
      %1215 = vdwg.mxu0
      %1216 = vrot.lane.b32.xlu0 %v1005, 112
      %v1217 = vpop.permute.xlu0 %1216
      %1218 = vrot.lane.b32.xlu0 %v1010, 112
      %v1219 = vpop.permute.xlu0 %1218
      %v1221 = vsel %vm895, %v1217, 0
      %v1224 = vsel %vm895, %v1219, 0
      %1226 = vmatprep.subr.bf16.mxu0 0
      %1227 = vmatpush1.bf16.xpose.msra.mxu0 0
      %1228 = vmatprep.subr.bf16.mxu0 0
      %1229 = vmatpush1.bf16.xpose.msra.mxu0 0
      %1230 = vmatprep.subr.bf16.mxu0 0
      %1231 = vmatpush1.bf16.xpose.msra.mxu0 0
      %1232 = vmatprep.subr.bf16.mxu0 0
      %1233 = vmatpush1.bf16.xpose.msra.mxu0 0
      %1234 = vmatprep.subr.bf16.mxu0 0
      %1235 = vmatpush1.bf16.xpose.msra.mxu0 0
      %1236 = vmatprep.subr.bf16.mxu0 0
      %1237 = vmatpush1.bf16.xpose.msra.mxu0 0
      %1238 = vmatprep.subr.bf16.mxu0 0
      %1239 = vmatpush1.bf16.xpose.msra.mxu0 0
      %1240 = vmatprep.subr.bf16.mxu0 0
      %1241 = vmatpush1.bf16.xpose.msra.mxu0 %v1224
      %1242 = vmatprep.subr.bf16.mxu0 0
      %1243 = vmatpush2.bf16.xpose.msra.mxu0 0
      %1244 = vmatprep.subr.bf16.mxu0 0
      %1245 = vmatpush2.bf16.xpose.msra.mxu0 0
      %1246 = vmatprep.subr.bf16.mxu0 0
      %1247 = vmatpush2.bf16.xpose.msra.mxu0 0
      %1248 = vmatprep.subr.bf16.mxu0 0
      %1249 = vmatpush2.bf16.xpose.msra.mxu0 0
      %1250 = vmatprep.subr.bf16.mxu0 0
      %1251 = vmatpush2.bf16.xpose.msra.mxu0 0
      %1252 = vmatprep.subr.bf16.mxu0 0
      %1253 = vmatpush2.bf16.xpose.msra.mxu0 0
      %1254 = vmatprep.subr.bf16.mxu0 0
      %1255 = vmatpush2.bf16.xpose.msra.mxu0 0
      %1256 = vmatprep.subr.bf16.mxu0 0
      %1257 = vmatpush2.bf16.xpose.msra.mxu0 0
      %1258 = vmatprep.mubr.bf16.mxu0 0
      %1259 = vmatmul.mubr.bf16.gmra.mxu0 %v1221
      %v1260 = vpop.f32.mrf.mxu0
      %v1261 = vadd.f32 %v889, %v1260
      %v1262 = vpop.f32.mrf.mxu0
      %v1263 = vpop.f32.mrf.mxu0
      %v1264 = vpop.f32.mrf.mxu0
      %1265 = vdwg.mxu0
      %v1266 = vsel %vm895, %v1261, -inf
      %1267 = vmax.xlane.f32.xlu0 %v1266
      %v1268 = vpop.xlane.xlu0 %1267
      %v1269 = vsub.f32 %v1261, %v1268
      %v1270 = vmul.f32 %v1269, 1.442695
      %v1271 = vpow.pop %v1270
      %v1272 = vsel %vm895, %v1271, 0.0
      %1273 = vadd.xlane.f32.xlu0 %v1272
      %v1274 = vpop.xlane.xlu0 %1273
      %v1275 = vrcp.pop %v1274
      %v1276 = vmul.f32 1.0, %v1275
      %v1277 = vmul.f32 %v1271, %v1276
      %v1278 = vpack.c.bf16 %v1277, %v1277
      %1279 = vrot.lane.b32.xlu0 %v1074, 112
      %v1280 = vpop.permute.xlu0 %1279
      %v1282 = vsel %vm895, %v1278, 0
      %v1285 = vsel %vm958, %v1280, 0
      %1287 = vmatprep.subr.bf16.mxu0 0
      %1288 = vmatpush1.bf16.msra.mxu0 0
      %1289 = vmatprep.subr.bf16.mxu0 0
      %1290 = vmatpush1.bf16.msra.mxu0 0
      %1291 = vmatprep.subr.bf16.mxu0 0
      %1292 = vmatpush1.bf16.msra.mxu0 0
      %1293 = vmatprep.subr.bf16.mxu0 0
      %1294 = vmatpush1.bf16.msra.mxu0 0
      %1295 = vmatprep.subr.bf16.mxu0 0
      %1296 = vmatpush1.bf16.msra.mxu0 0
      %1297 = vmatprep.subr.bf16.mxu0 0
      %1298 = vmatpush1.bf16.msra.mxu0 0
      %1299 = vmatprep.subr.bf16.mxu0 0
      %1300 = vmatpush1.bf16.msra.mxu0 0
      %1301 = vmatprep.subr.bf16.mxu0 0
      %1302 = vmatpush1.bf16.msra.mxu0 %v1285
      %1303 = vmatprep.subr.bf16.mxu0 0
      %1304 = vmatpush2.bf16.msra.mxu0 0
      %1305 = vmatprep.subr.bf16.mxu0 0
      %1306 = vmatpush2.bf16.msra.mxu0 0
      %1307 = vmatprep.subr.bf16.mxu0 0
      %1308 = vmatpush2.bf16.msra.mxu0 0
      %1309 = vmatprep.subr.bf16.mxu0 0
      %1310 = vmatpush2.bf16.msra.mxu0 0
      %1311 = vmatprep.subr.bf16.mxu0 0
      %1312 = vmatpush2.bf16.msra.mxu0 0
      %1313 = vmatprep.subr.bf16.mxu0 0
      %1314 = vmatpush2.bf16.msra.mxu0 0
      %1315 = vmatprep.subr.bf16.mxu0 0
      %1316 = vmatpush2.bf16.msra.mxu0 0
      %1317 = vmatprep.subr.bf16.mxu0 0
      %1318 = vmatpush2.bf16.msra.mxu0 0
      %1319 = vmatprep.mubr.bf16.mxu0 0
      %1320 = vmatmul.mubr.bf16.gmra.mxu0 %v1282
      %v1321 = vpop.f32.mrf.mxu0
      %v1322 = vadd.f32 0.0, %v1321
      %v1323 = vpop.f32.mrf.mxu0
      %v1324 = vpop.f32.mrf.mxu0
      %v1325 = vpop.f32.mrf.mxu0
      %1326 = vdwg.mxu0
      %v1327 = vpack.c.bf16 %v1322, %v1322
      %v1329 = vsel %vm895, %v1327, 0
      %v1332 = vsel %vm958, %v842, 0
      %1334 = vmatprep.subr.bf16.mxu0 0
      %1335 = vmatpush1.bf16.msra.mxu0 0
      %1336 = vmatprep.subr.bf16.mxu0 0
      %1337 = vmatpush1.bf16.msra.mxu0 0
      %1338 = vmatprep.subr.bf16.mxu0 0
      %1339 = vmatpush1.bf16.msra.mxu0 0
      %1340 = vmatprep.subr.bf16.mxu0 0
      %1341 = vmatpush1.bf16.msra.mxu0 0
      %1342 = vmatprep.subr.bf16.mxu0 0
      %1343 = vmatpush1.bf16.msra.mxu0 0
      %1344 = vmatprep.subr.bf16.mxu0 0
      %1345 = vmatpush1.bf16.msra.mxu0 0
      %1346 = vmatprep.subr.bf16.mxu0 0
      %1347 = vmatpush1.bf16.msra.mxu0 0
      %1348 = vmatprep.subr.bf16.mxu0 0
      %1349 = vmatpush1.bf16.msra.mxu0 %v1332
      %1350 = vmatprep.subr.bf16.mxu0 0
      %1351 = vmatpush2.bf16.msra.mxu0 0
      %1352 = vmatprep.subr.bf16.mxu0 0
      %1353 = vmatpush2.bf16.msra.mxu0 0
      %1354 = vmatprep.subr.bf16.mxu0 0
      %1355 = vmatpush2.bf16.msra.mxu0 0
      %1356 = vmatprep.subr.bf16.mxu0 0
      %1357 = vmatpush2.bf16.msra.mxu0 0
      %1358 = vmatprep.subr.bf16.mxu0 0
      %1359 = vmatpush2.bf16.msra.mxu0 0
      %1360 = vmatprep.subr.bf16.mxu0 0
      %1361 = vmatpush2.bf16.msra.mxu0 0
      %1362 = vmatprep.subr.bf16.mxu0 0
      %1363 = vmatpush2.bf16.msra.mxu0 0
      %1364 = vmatprep.subr.bf16.mxu0 0
      %1365 = vmatpush2.bf16.msra.mxu0 0
      %1366 = vmatprep.mubr.bf16.mxu0 0
      %1367 = vmatmul.mubr.bf16.gmra.mxu0 %v1329
      %v1368 = vpop.f32.mrf.mxu0
      %v1369 = vadd.f32 0.0, %v1368
      %v1370 = vpop.f32.mrf.mxu0
      %v1371 = vpop.f32.mrf.mxu0
      %v1372 = vpop.f32.mrf.mxu0
      %1373 = vdwg.mxu0
      %v1374 = vadd.f32 %v1211, %v1369
      %1375 = vrot.lane.b32.xlu0 %v1005, 104
      %v1376 = vpop.permute.xlu0 %1375
      %1377 = vrot.lane.b32.xlu0 %v1010, 104
      %v1378 = vpop.permute.xlu0 %1377
      %v1380 = vsel %vm895, %v1376, 0
      %v1383 = vsel %vm895, %v1378, 0
      %1385 = vmatprep.subr.bf16.mxu0 0
      %1386 = vmatpush1.bf16.xpose.msra.mxu0 0
      %1387 = vmatprep.subr.bf16.mxu0 0
      %1388 = vmatpush1.bf16.xpose.msra.mxu0 0
      %1389 = vmatprep.subr.bf16.mxu0 0
      %1390 = vmatpush1.bf16.xpose.msra.mxu0 0
      %1391 = vmatprep.subr.bf16.mxu0 0
      %1392 = vmatpush1.bf16.xpose.msra.mxu0 0
      %1393 = vmatprep.subr.bf16.mxu0 0
      %1394 = vmatpush1.bf16.xpose.msra.mxu0 0
      %1395 = vmatprep.subr.bf16.mxu0 0
      %1396 = vmatpush1.bf16.xpose.msra.mxu0 0
      %1397 = vmatprep.subr.bf16.mxu0 0
      %1398 = vmatpush1.bf16.xpose.msra.mxu0 0
      %1399 = vmatprep.subr.bf16.mxu0 0
      %1400 = vmatpush1.bf16.xpose.msra.mxu0 %v1383
      %1401 = vmatprep.subr.bf16.mxu0 0
      %1402 = vmatpush2.bf16.xpose.msra.mxu0 0
      %1403 = vmatprep.subr.bf16.mxu0 0
      %1404 = vmatpush2.bf16.xpose.msra.mxu0 0
      %1405 = vmatprep.subr.bf16.mxu0 0
      %1406 = vmatpush2.bf16.xpose.msra.mxu0 0
      %1407 = vmatprep.subr.bf16.mxu0 0
      %1408 = vmatpush2.bf16.xpose.msra.mxu0 0
      %1409 = vmatprep.subr.bf16.mxu0 0
      %1410 = vmatpush2.bf16.xpose.msra.mxu0 0
      %1411 = vmatprep.subr.bf16.mxu0 0
      %1412 = vmatpush2.bf16.xpose.msra.mxu0 0
      %1413 = vmatprep.subr.bf16.mxu0 0
      %1414 = vmatpush2.bf16.xpose.msra.mxu0 0
      %1415 = vmatprep.subr.bf16.mxu0 0
      %1416 = vmatpush2.bf16.xpose.msra.mxu0 0
      %1417 = vmatprep.mubr.bf16.mxu0 0
      %1418 = vmatmul.mubr.bf16.gmra.mxu0 %v1380
      %v1419 = vpop.f32.mrf.mxu0
      %v1420 = vadd.f32 %v889, %v1419
      %v1421 = vpop.f32.mrf.mxu0
      %v1422 = vpop.f32.mrf.mxu0
      %v1423 = vpop.f32.mrf.mxu0
      %1424 = vdwg.mxu0
      %v1425 = vsel %vm895, %v1420, -inf
      %1426 = vmax.xlane.f32.xlu0 %v1425
      %v1427 = vpop.xlane.xlu0 %1426
      %v1428 = vsub.f32 %v1420, %v1427
      %v1429 = vmul.f32 %v1428, 1.442695
      %v1430 = vpow.pop %v1429
      %v1431 = vsel %vm895, %v1430, 0.0
      %1432 = vadd.xlane.f32.xlu0 %v1431
      %v1433 = vpop.xlane.xlu0 %1432
      %v1434 = vrcp.pop %v1433
      %v1435 = vmul.f32 1.0, %v1434
      %v1436 = vmul.f32 %v1430, %v1435
      %v1437 = vpack.c.bf16 %v1436, %v1436
      %1438 = vrot.lane.b32.xlu0 %v1074, 104
      %v1439 = vpop.permute.xlu0 %1438
      %v1441 = vsel %vm895, %v1437, 0
      %v1444 = vsel %vm958, %v1439, 0
      %1446 = vmatprep.subr.bf16.mxu0 0
      %1447 = vmatpush1.bf16.msra.mxu0 0
      %1448 = vmatprep.subr.bf16.mxu0 0
      %1449 = vmatpush1.bf16.msra.mxu0 0
      %1450 = vmatprep.subr.bf16.mxu0 0
      %1451 = vmatpush1.bf16.msra.mxu0 0
      %1452 = vmatprep.subr.bf16.mxu0 0
      %1453 = vmatpush1.bf16.msra.mxu0 0
      %1454 = vmatprep.subr.bf16.mxu0 0
      %1455 = vmatpush1.bf16.msra.mxu0 0
      %1456 = vmatprep.subr.bf16.mxu0 0
      %1457 = vmatpush1.bf16.msra.mxu0 0
      %1458 = vmatprep.subr.bf16.mxu0 0
      %1459 = vmatpush1.bf16.msra.mxu0 0
      %1460 = vmatprep.subr.bf16.mxu0 0
      %1461 = vmatpush1.bf16.msra.mxu0 %v1444
      %1462 = vmatprep.subr.bf16.mxu0 0
      %1463 = vmatpush2.bf16.msra.mxu0 0
      %1464 = vmatprep.subr.bf16.mxu0 0
      %1465 = vmatpush2.bf16.msra.mxu0 0
      %1466 = vmatprep.subr.bf16.mxu0 0
      %1467 = vmatpush2.bf16.msra.mxu0 0
      %1468 = vmatprep.subr.bf16.mxu0 0
      %1469 = vmatpush2.bf16.msra.mxu0 0
      %1470 = vmatprep.subr.bf16.mxu0 0
      %1471 = vmatpush2.bf16.msra.mxu0 0
      %1472 = vmatprep.subr.bf16.mxu0 0
      %1473 = vmatpush2.bf16.msra.mxu0 0
      %1474 = vmatprep.subr.bf16.mxu0 0
      %1475 = vmatpush2.bf16.msra.mxu0 0
      %1476 = vmatprep.subr.bf16.mxu0 0
      %1477 = vmatpush2.bf16.msra.mxu0 0
      %1478 = vmatprep.mubr.bf16.mxu0 0
      %1479 = vmatmul.mubr.bf16.gmra.mxu0 %v1441
      %v1480 = vpop.f32.mrf.mxu0
      %v1481 = vadd.f32 0.0, %v1480
      %v1482 = vpop.f32.mrf.mxu0
      %v1483 = vpop.f32.mrf.mxu0
      %v1484 = vpop.f32.mrf.mxu0
      %1485 = vdwg.mxu0
      %v1486 = vpack.c.bf16 %v1481, %v1481
      %v1488 = vsel %vm895, %v1486, 0
      %v1491 = vsel %vm958, %v843, 0
      %1493 = vmatprep.subr.bf16.mxu0 0
      %1494 = vmatpush1.bf16.msra.mxu0 0
      %1495 = vmatprep.subr.bf16.mxu0 0
      %1496 = vmatpush1.bf16.msra.mxu0 0
      %1497 = vmatprep.subr.bf16.mxu0 0
      %1498 = vmatpush1.bf16.msra.mxu0 0
      %1499 = vmatprep.subr.bf16.mxu0 0
      %1500 = vmatpush1.bf16.msra.mxu0 0
      %1501 = vmatprep.subr.bf16.mxu0 0
      %1502 = vmatpush1.bf16.msra.mxu0 0
      %1503 = vmatprep.subr.bf16.mxu0 0
      %1504 = vmatpush1.bf16.msra.mxu0 0
      %1505 = vmatprep.subr.bf16.mxu0 0
      %1506 = vmatpush1.bf16.msra.mxu0 0
      %1507 = vmatprep.subr.bf16.mxu0 0
      %1508 = vmatpush1.bf16.msra.mxu0 %v1491
      %1509 = vmatprep.subr.bf16.mxu0 0
      %1510 = vmatpush2.bf16.msra.mxu0 0
      %1511 = vmatprep.subr.bf16.mxu0 0
      %1512 = vmatpush2.bf16.msra.mxu0 0
      %1513 = vmatprep.subr.bf16.mxu0 0
      %1514 = vmatpush2.bf16.msra.mxu0 0
      %1515 = vmatprep.subr.bf16.mxu0 0
      %1516 = vmatpush2.bf16.msra.mxu0 0
      %1517 = vmatprep.subr.bf16.mxu0 0
      %1518 = vmatpush2.bf16.msra.mxu0 0
      %1519 = vmatprep.subr.bf16.mxu0 0
      %1520 = vmatpush2.bf16.msra.mxu0 0
      %1521 = vmatprep.subr.bf16.mxu0 0
      %1522 = vmatpush2.bf16.msra.mxu0 0
      %1523 = vmatprep.subr.bf16.mxu0 0
      %1524 = vmatpush2.bf16.msra.mxu0 0
      %1525 = vmatprep.mubr.bf16.mxu0 0
      %1526 = vmatmul.mubr.bf16.gmra.mxu0 %v1488
      %v1527 = vpop.f32.mrf.mxu0
      %v1528 = vadd.f32 0.0, %v1527
      %v1529 = vpop.f32.mrf.mxu0
      %v1530 = vpop.f32.mrf.mxu0
      %v1531 = vpop.f32.mrf.mxu0
      %1532 = vdwg.mxu0
      %v1533 = vadd.f32 %v1374, %v1528
      %vm1534 = vcmask 261120
      %v1535 = vsel %vm1534, %v880, 0.0
      %1536 = vadd.xlane.f32.xlu0 %v1535
      %v1537 = vpop.xlane.xlu0 %1536
      %v1538 = vrcp.pop 32.0
      %v1539 = vmul.f32 %v1537, %v1538
      %v1540 = vsub.f32 %v880, %v1539
      %v1541 = vmul.f32 %v1540, %v1540
      %v1542 = vsel %vm1534, %v1541, 0.0
      %1543 = vadd.xlane.f32.xlu0 %v1542
      %v1544 = vpop.xlane.xlu0 %1543
      %v1545 = vmul.f32 %v1544, %v1538
      %v1546 = vadd.f32 %v1545, 1e-06
      %v1547 = vrsqrt.pop %v1546
      %v1548 = vmul.f32 %v1540, %v1547
      %v1550 = vlaneseq
      %v1551 = vshrl.u32 %v1550, 7
      %v1552 = vsub.s32 0, %v1551
      %v1553 = vrot.slane %v834, %v1552
      %v1555 = vmul.f32 %v1548, %v1553
      %v1557 = vlaneseq
      %v1558 = vshrl.u32 %v1557, 7
      %v1559 = vsub.s32 0, %v1558
      %v1560 = vrot.slane %v835, %v1559
      %v1562 = vadd.f32 %v1555, %v1560
      %v1563 = vpack.c.bf16 %v1562, %v1562
      %v1565 = vlaneseq
      %v1566 = vshrl.u32 %v1565, 7
      %v1567 = vsub.s32 0, %v1566
      %v1568 = vrot.slane %v856, %v1567
      %v1574 = vunpack.c.l.b16 %v852
      %v1575 = vunpack.c.l.b16 %v853
      %v1576 = vunpack.c.l.b16 %v854
      %v1577 = vunpack.c.l.b16 %v855
      %v1578 = vpack.c.b16 %v1575, %v1574
      %v1579 = vpack.c.b16 %v1577, %v1576
      %v1583 = vsel %vm1534, %v1563, 0
      %1585 = vmatprep.subr.bf16.mxu0 0
      %1586 = vmatpush1.bf16.msra.mxu0 0
      %1587 = vmatprep.subr.bf16.mxu0 0
      %1588 = vmatpush1.bf16.msra.mxu0 0
      %1589 = vmatprep.subr.bf16.mxu0 0
      %1590 = vmatpush1.bf16.msra.mxu0 0
      %1591 = vmatprep.subr.bf16.mxu0 0
      %1592 = vmatpush1.bf16.msra.mxu0 0
      %1593 = vmatprep.subr.bf16.mxu0 0
      %1594 = vmatpush1.bf16.msra.mxu0 0
      %1595 = vmatprep.subr.bf16.mxu0 0
      %1596 = vmatpush1.bf16.msra.mxu0 0
      %1597 = vmatprep.subr.bf16.mxu0 0
      %1598 = vmatpush1.bf16.msra.mxu0 %v1579
      %1599 = vmatprep.subr.bf16.mxu0 0
      %1600 = vmatpush1.bf16.msra.mxu0 %v1578
      %1601 = vmatprep.subr.bf16.mxu0 0
      %1602 = vmatpush2.bf16.msra.mxu0 0
      %1603 = vmatprep.subr.bf16.mxu0 0
      %1604 = vmatpush2.bf16.msra.mxu0 0
      %1605 = vmatprep.subr.bf16.mxu0 0
      %1606 = vmatpush2.bf16.msra.mxu0 0
      %1607 = vmatprep.subr.bf16.mxu0 0
      %1608 = vmatpush2.bf16.msra.mxu0 0
      %1609 = vmatprep.subr.bf16.mxu0 0
      %1610 = vmatpush2.bf16.msra.mxu0 0
      %1611 = vmatprep.subr.bf16.mxu0 0
      %1612 = vmatpush2.bf16.msra.mxu0 0
      %1613 = vmatprep.subr.bf16.mxu0 0
      %1614 = vmatpush2.bf16.msra.mxu0 0
      %1615 = vmatprep.subr.bf16.mxu0 0
      %1616 = vmatpush2.bf16.msra.mxu0 0
      %1617 = vmatprep.mubr.bf16.mxu0 0
      %1618 = vmatmul.mubr.bf16.gmra.mxu0 %v1583
      %v1619 = vpop.f32.mrf.mxu0
      %v1620 = vadd.f32 %v1568, %v1619
      %v1621 = vpop.f32.mrf.mxu0
      %v1622 = vpop.f32.mrf.mxu0
      %v1623 = vpop.f32.mrf.mxu0
      %1624 = vdwg.mxu0
      %v1625 = vmax.f32 %v1620, 0.0
      %v1626 = vpack.c.bf16 %v1625, %v1625
      %v1628 = vlaneseq
      %v1629 = vshrl.u32 %v1628, 7
      %v1630 = vsub.s32 0, %v1629
      %v1631 = vrot.slane %v865, %v1630
      %v1641 = vunpack.c.l.b16 %v857
      %v1642 = vunpack.c.l.b16 %v858
      %v1643 = vunpack.c.l.b16 %v859
      %v1644 = vunpack.c.l.b16 %v860
      %v1645 = vunpack.c.l.b16 %v861
      %v1646 = vunpack.c.l.b16 %v862
      %v1647 = vunpack.c.l.b16 %v863
      %v1648 = vunpack.c.l.b16 %v864
      %v1649 = vpack.c.b16 %v1642, %v1641
      %v1650 = vpack.c.b16 %v1644, %v1643
      %v1651 = vpack.c.b16 %v1646, %v1645
      %v1652 = vpack.c.b16 %v1648, %v1647
      %vm1657 = vcmask 523264
      %v1659 = vsel %vm1657, %v1626, 0
      %1661 = vmatprep.subr.bf16.mxu0 0
      %1662 = vmatpush1.bf16.msra.mxu0 0
      %1663 = vmatprep.subr.bf16.mxu0 0
      %1664 = vmatpush1.bf16.msra.mxu0 0
      %1665 = vmatprep.subr.bf16.mxu0 0
      %1666 = vmatpush1.bf16.msra.mxu0 0
      %1667 = vmatprep.subr.bf16.mxu0 0
      %1668 = vmatpush1.bf16.msra.mxu0 0
      %1669 = vmatprep.subr.bf16.mxu0 0
      %1670 = vmatpush1.bf16.msra.mxu0 %v1652
      %1671 = vmatprep.subr.bf16.mxu0 0
      %1672 = vmatpush1.bf16.msra.mxu0 %v1651
      %1673 = vmatprep.subr.bf16.mxu0 0
      %1674 = vmatpush1.bf16.msra.mxu0 %v1650
      %1675 = vmatprep.subr.bf16.mxu0 0
      %1676 = vmatpush1.bf16.msra.mxu0 %v1649
      %1677 = vmatprep.subr.bf16.mxu0 0
      %1678 = vmatpush2.bf16.msra.mxu0 0
      %1679 = vmatprep.subr.bf16.mxu0 0
      %1680 = vmatpush2.bf16.msra.mxu0 0
      %1681 = vmatprep.subr.bf16.mxu0 0
      %1682 = vmatpush2.bf16.msra.mxu0 0
      %1683 = vmatprep.subr.bf16.mxu0 0
      %1684 = vmatpush2.bf16.msra.mxu0 0
      %1685 = vmatprep.subr.bf16.mxu0 0
      %1686 = vmatpush2.bf16.msra.mxu0 0
      %1687 = vmatprep.subr.bf16.mxu0 0
      %1688 = vmatpush2.bf16.msra.mxu0 0
      %1689 = vmatprep.subr.bf16.mxu0 0
      %1690 = vmatpush2.bf16.msra.mxu0 0
      %1691 = vmatprep.subr.bf16.mxu0 0
      %1692 = vmatpush2.bf16.msra.mxu0 0
      %1693 = vmatprep.mubr.bf16.mxu0 0
      %1694 = vmatmul.mubr.bf16.gmra.mxu0 %v1659
      %v1695 = vpop.f32.mrf.mxu0
      %v1696 = vadd.f32 %v1631, %v1695
      %v1697 = vpop.f32.mrf.mxu0
      %v1698 = vpop.f32.mrf.mxu0
      %v1699 = vpop.f32.mrf.mxu0
      %1700 = vdwg.mxu0
      %v1701 = vadd.f32 %v1533, %v1696
      %v1702 = vadd.f32 %v880, %v1701
      %v1703 = vsel %vm1534, %v1702, 0.0
      %1704 = vadd.xlane.f32.xlu0 %v1703
      %v1705 = vpop.xlane.xlu0 %1704
      %v1706 = vmul.f32 %v1705, %v1538
      %v1707 = vsub.f32 %v1702, %v1706
      %v1708 = vmul.f32 %v1707, %v1707
      %v1709 = vsel %vm1534, %v1708, 0.0
      %1710 = vadd.xlane.f32.xlu0 %v1709
      %v1711 = vpop.xlane.xlu0 %1710
      %v1712 = vmul.f32 %v1711, %v1538
      %v1713 = vadd.f32 %v1712, 1e-06
      %v1714 = vrsqrt.pop %v1713
      %v1715 = vmul.f32 %v1707, %v1714
      %v1717 = vlaneseq
      %v1718 = vshrl.u32 %v1717, 7
      %v1719 = vsub.s32 0, %v1718
      %v1720 = vrot.slane %v836, %v1719
      %v1722 = vmul.f32 %v1715, %v1720
      %v1724 = vlaneseq
      %v1725 = vshrl.u32 %v1724, 7
      %v1726 = vsub.s32 0, %v1725
      %v1727 = vrot.slane %v837, %v1726
      %v1729 = vadd.f32 %v1722, %v1727
      %v1730 = vpack.c.bf16 %v1729, %v1729
      %v1735 = vunpack.c.l.b16 %v844
      %v1736 = vunpack.c.l.b16 %v845
      %v1737 = vunpack.c.l.b16 %v846
      %v1738 = vunpack.c.l.b16 %v847
      %v1739 = vpack.c.b16 %v1736, %v1735
      %v1740 = vpack.c.b16 %v1738, %v1737
      %v1744 = vsel %vm1534, %v1730, 0
      %1746 = vmatprep.subr.bf16.mxu0 0
      %1747 = vmatpush1.bf16.msra.mxu0 0
      %1748 = vmatprep.subr.bf16.mxu0 0
      %1749 = vmatpush1.bf16.msra.mxu0 0
      %1750 = vmatprep.subr.bf16.mxu0 0
      %1751 = vmatpush1.bf16.msra.mxu0 0
      %1752 = vmatprep.subr.bf16.mxu0 0
      %1753 = vmatpush1.bf16.msra.mxu0 0
      %1754 = vmatprep.subr.bf16.mxu0 0
      %1755 = vmatpush1.bf16.msra.mxu0 0
      %1756 = vmatprep.subr.bf16.mxu0 0
      %1757 = vmatpush1.bf16.msra.mxu0 0
      %1758 = vmatprep.subr.bf16.mxu0 0
      %1759 = vmatpush1.bf16.msra.mxu0 %v1740
      %1760 = vmatprep.subr.bf16.mxu0 0
      %1761 = vmatpush1.bf16.msra.mxu0 %v1739
      %1762 = vmatprep.subr.bf16.mxu0 0
      %1763 = vmatpush2.bf16.msra.mxu0 0
      %1764 = vmatprep.subr.bf16.mxu0 0
      %1765 = vmatpush2.bf16.msra.mxu0 0
      %1766 = vmatprep.subr.bf16.mxu0 0
      %1767 = vmatpush2.bf16.msra.mxu0 0
      %1768 = vmatprep.subr.bf16.mxu0 0
      %1769 = vmatpush2.bf16.msra.mxu0 0
      %1770 = vmatprep.subr.bf16.mxu0 0
      %1771 = vmatpush2.bf16.msra.mxu0 0
      %1772 = vmatprep.subr.bf16.mxu0 0
      %1773 = vmatpush2.bf16.msra.mxu0 0
      %1774 = vmatprep.subr.bf16.mxu0 0
      %1775 = vmatpush2.bf16.msra.mxu0 0
      %1776 = vmatprep.subr.bf16.mxu0 0
      %1777 = vmatpush2.bf16.msra.mxu0 0
      %1778 = vmatprep.mubr.bf16.mxu0 0
      %1779 = vmatmul.mubr.bf16.gmra.mxu0 %v1744
      %v1780 = vpop.f32.mrf.mxu0
      %v1781 = vadd.f32 0.0, %v1780
      %v1782 = vpop.f32.mrf.mxu0
      %v1783 = vpop.f32.mrf.mxu0
      %v1784 = vpop.f32.mrf.mxu0
      %1785 = vdwg.mxu0
      %v1786 = vmul.f32 %v1781, 0.35355338
      %v1787 = vpack.c.bf16 %v1786, %v1786
      %v1789 = vsel %vm895, %v1787, 0
      %v1792 = vsel %vm895, %v893, 0
      %1794 = vmatprep.subr.bf16.mxu0 0
      %1795 = vmatpush1.bf16.xpose.msra.mxu0 0
      %1796 = vmatprep.subr.bf16.mxu0 0
      %1797 = vmatpush1.bf16.xpose.msra.mxu0 0
      %1798 = vmatprep.subr.bf16.mxu0 0
      %1799 = vmatpush1.bf16.xpose.msra.mxu0 0
      %1800 = vmatprep.subr.bf16.mxu0 0
      %1801 = vmatpush1.bf16.xpose.msra.mxu0 0
      %1802 = vmatprep.subr.bf16.mxu0 0
      %1803 = vmatpush1.bf16.xpose.msra.mxu0 0
      %1804 = vmatprep.subr.bf16.mxu0 0
      %1805 = vmatpush1.bf16.xpose.msra.mxu0 0
      %1806 = vmatprep.subr.bf16.mxu0 0
      %1807 = vmatpush1.bf16.xpose.msra.mxu0 0
      %1808 = vmatprep.subr.bf16.mxu0 0
      %1809 = vmatpush1.bf16.xpose.msra.mxu0 %v1792
      %1810 = vmatprep.subr.bf16.mxu0 0
      %1811 = vmatpush2.bf16.xpose.msra.mxu0 0
      %1812 = vmatprep.subr.bf16.mxu0 0
      %1813 = vmatpush2.bf16.xpose.msra.mxu0 0
      %1814 = vmatprep.subr.bf16.mxu0 0
      %1815 = vmatpush2.bf16.xpose.msra.mxu0 0
      %1816 = vmatprep.subr.bf16.mxu0 0
      %1817 = vmatpush2.bf16.xpose.msra.mxu0 0
      %1818 = vmatprep.subr.bf16.mxu0 0
      %1819 = vmatpush2.bf16.xpose.msra.mxu0 0
      %1820 = vmatprep.subr.bf16.mxu0 0
      %1821 = vmatpush2.bf16.xpose.msra.mxu0 0
      %1822 = vmatprep.subr.bf16.mxu0 0
      %1823 = vmatpush2.bf16.xpose.msra.mxu0 0
      %1824 = vmatprep.subr.bf16.mxu0 0
      %1825 = vmatpush2.bf16.xpose.msra.mxu0 0
      %1826 = vmatprep.mubr.bf16.mxu0 0
      %1827 = vmatmul.mubr.bf16.gmra.mxu0 %v1789
      %v1828 = vpop.f32.mrf.mxu0
      %v1829 = vadd.f32 0.0, %v1828
      %v1830 = vpop.f32.mrf.mxu0
      %v1831 = vpop.f32.mrf.mxu0
      %v1832 = vpop.f32.mrf.mxu0
      %1833 = vdwg.mxu0
      %v1834 = vsel %vm895, %v1829, -inf
      %1835 = vmax.xlane.f32.xlu0 %v1834
      %v1836 = vpop.xlane.xlu0 %1835
      %v1837 = vsub.f32 %v1829, %v1836
      %v1838 = vmul.f32 %v1837, 1.442695
      %v1839 = vpow.pop %v1838
      %v1840 = vsel %vm895, %v1839, 0.0
      %1841 = vadd.xlane.f32.xlu0 %v1840
      %v1842 = vpop.xlane.xlu0 %1841
      %v1843 = vrcp.pop %v1842
      %v1844 = vmul.f32 1.0, %v1843
      %v1845 = vmul.f32 %v1839, %v1844
      %v1846 = vpack.c.bf16 %v1845, %v1845
      %v1848 = vsel %vm895, %v1846, 0
      %v1851 = vsel %vm958, %v894, 0
      %1853 = vmatprep.subr.bf16.mxu0 0
      %1854 = vmatpush1.bf16.msra.mxu0 0
      %1855 = vmatprep.subr.bf16.mxu0 0
      %1856 = vmatpush1.bf16.msra.mxu0 0
      %1857 = vmatprep.subr.bf16.mxu0 0
      %1858 = vmatpush1.bf16.msra.mxu0 0
      %1859 = vmatprep.subr.bf16.mxu0 0
      %1860 = vmatpush1.bf16.msra.mxu0 0
      %1861 = vmatprep.subr.bf16.mxu0 0
      %1862 = vmatpush1.bf16.msra.mxu0 0
      %1863 = vmatprep.subr.bf16.mxu0 0
      %1864 = vmatpush1.bf16.msra.mxu0 0
      %1865 = vmatprep.subr.bf16.mxu0 0
      %1866 = vmatpush1.bf16.msra.mxu0 0
      %1867 = vmatprep.subr.bf16.mxu0 0
      %1868 = vmatpush1.bf16.msra.mxu0 %v1851
      %1869 = vmatprep.subr.bf16.mxu0 0
      %1870 = vmatpush2.bf16.msra.mxu0 0
      %1871 = vmatprep.subr.bf16.mxu0 0
      %1872 = vmatpush2.bf16.msra.mxu0 0
      %1873 = vmatprep.subr.bf16.mxu0 0
      %1874 = vmatpush2.bf16.msra.mxu0 0
      %1875 = vmatprep.subr.bf16.mxu0 0
      %1876 = vmatpush2.bf16.msra.mxu0 0
      %1877 = vmatprep.subr.bf16.mxu0 0
      %1878 = vmatpush2.bf16.msra.mxu0 0
      %1879 = vmatprep.subr.bf16.mxu0 0
      %1880 = vmatpush2.bf16.msra.mxu0 0
      %1881 = vmatprep.subr.bf16.mxu0 0
      %1882 = vmatpush2.bf16.msra.mxu0 0
      %1883 = vmatprep.subr.bf16.mxu0 0
      %1884 = vmatpush2.bf16.msra.mxu0 0
      %1885 = vmatprep.mubr.bf16.mxu0 0
      %1886 = vmatmul.mubr.bf16.gmra.mxu0 %v1848
      %v1887 = vpop.f32.mrf.mxu0
      %v1888 = vadd.f32 0.0, %v1887
      %v1889 = vpop.f32.mrf.mxu0
      %v1890 = vpop.f32.mrf.mxu0
      %v1891 = vpop.f32.mrf.mxu0
      %1892 = vdwg.mxu0
      %v1893 = vpack.c.bf16 %v1888, %v1888
      %1895 = vrot.lane.b32.xlu0 %v1787, 120
      %v1896 = vpop.permute.xlu0 %1895
      %v1898 = vunpack.c.l.b16 %v893
      %v1899 = vpack.c.b16 %v1898, %v1898
      %1900 = vrot.lane.b32.xlu0 %v1899, 120
      %v1901 = vpop.permute.xlu0 %1900
      %v1903 = vsel %vm895, %v1896, 0
      %v1906 = vsel %vm895, %v1901, 0
      %1908 = vmatprep.subr.bf16.mxu0 0
      %1909 = vmatpush1.bf16.xpose.msra.mxu0 0
      %1910 = vmatprep.subr.bf16.mxu0 0
      %1911 = vmatpush1.bf16.xpose.msra.mxu0 0
      %1912 = vmatprep.subr.bf16.mxu0 0
      %1913 = vmatpush1.bf16.xpose.msra.mxu0 0
      %1914 = vmatprep.subr.bf16.mxu0 0
      %1915 = vmatpush1.bf16.xpose.msra.mxu0 0
      %1916 = vmatprep.subr.bf16.mxu0 0
      %1917 = vmatpush1.bf16.xpose.msra.mxu0 0
      %1918 = vmatprep.subr.bf16.mxu0 0
      %1919 = vmatpush1.bf16.xpose.msra.mxu0 0
      %1920 = vmatprep.subr.bf16.mxu0 0
      %1921 = vmatpush1.bf16.xpose.msra.mxu0 0
      %1922 = vmatprep.subr.bf16.mxu0 0
      %1923 = vmatpush1.bf16.xpose.msra.mxu0 %v1906
      %1924 = vmatprep.subr.bf16.mxu0 0
      %1925 = vmatpush2.bf16.xpose.msra.mxu0 0
      %1926 = vmatprep.subr.bf16.mxu0 0
      %1927 = vmatpush2.bf16.xpose.msra.mxu0 0
      %1928 = vmatprep.subr.bf16.mxu0 0
      %1929 = vmatpush2.bf16.xpose.msra.mxu0 0
      %1930 = vmatprep.subr.bf16.mxu0 0
      %1931 = vmatpush2.bf16.xpose.msra.mxu0 0
      %1932 = vmatprep.subr.bf16.mxu0 0
      %1933 = vmatpush2.bf16.xpose.msra.mxu0 0
      %1934 = vmatprep.subr.bf16.mxu0 0
      %1935 = vmatpush2.bf16.xpose.msra.mxu0 0
      %1936 = vmatprep.subr.bf16.mxu0 0
      %1937 = vmatpush2.bf16.xpose.msra.mxu0 0
      %1938 = vmatprep.subr.bf16.mxu0 0
      %1939 = vmatpush2.bf16.xpose.msra.mxu0 0
      %1940 = vmatprep.mubr.bf16.mxu0 0
      %1941 = vmatmul.mubr.bf16.gmra.mxu0 %v1903
      %v1942 = vpop.f32.mrf.mxu0
      %v1943 = vadd.f32 0.0, %v1942
      %v1944 = vpop.f32.mrf.mxu0
      %v1945 = vpop.f32.mrf.mxu0
      %v1946 = vpop.f32.mrf.mxu0
      %1947 = vdwg.mxu0
      %v1948 = vsel %vm895, %v1943, -inf
      %1949 = vmax.xlane.f32.xlu0 %v1948
      %v1950 = vpop.xlane.xlu0 %1949
      %v1951 = vsub.f32 %v1943, %v1950
      %v1952 = vmul.f32 %v1951, 1.442695
      %v1953 = vpow.pop %v1952
      %v1954 = vsel %vm895, %v1953, 0.0
      %1955 = vadd.xlane.f32.xlu0 %v1954
      %v1956 = vpop.xlane.xlu0 %1955
      %v1957 = vrcp.pop %v1956
      %v1958 = vmul.f32 1.0, %v1957
      %v1959 = vmul.f32 %v1953, %v1958
      %v1960 = vpack.c.bf16 %v1959, %v1959
      %v1962 = vunpack.c.l.b16 %v894
      %v1963 = vpack.c.b16 %v1962, %v1962
      %1964 = vrot.lane.b32.xlu0 %v1963, 120
      %v1965 = vpop.permute.xlu0 %1964
      %v1967 = vsel %vm895, %v1960, 0
      %v1970 = vsel %vm958, %v1965, 0
      %1972 = vmatprep.subr.bf16.mxu0 0
      %1973 = vmatpush1.bf16.msra.mxu0 0
      %1974 = vmatprep.subr.bf16.mxu0 0
      %1975 = vmatpush1.bf16.msra.mxu0 0
      %1976 = vmatprep.subr.bf16.mxu0 0
      %1977 = vmatpush1.bf16.msra.mxu0 0
      %1978 = vmatprep.subr.bf16.mxu0 0
      %1979 = vmatpush1.bf16.msra.mxu0 0
      %1980 = vmatprep.subr.bf16.mxu0 0
      %1981 = vmatpush1.bf16.msra.mxu0 0
      %1982 = vmatprep.subr.bf16.mxu0 0
      %1983 = vmatpush1.bf16.msra.mxu0 0
      %1984 = vmatprep.subr.bf16.mxu0 0
      %1985 = vmatpush1.bf16.msra.mxu0 0
      %1986 = vmatprep.subr.bf16.mxu0 0
      %1987 = vmatpush1.bf16.msra.mxu0 %v1970
      %1988 = vmatprep.subr.bf16.mxu0 0
      %1989 = vmatpush2.bf16.msra.mxu0 0
      %1990 = vmatprep.subr.bf16.mxu0 0
      %1991 = vmatpush2.bf16.msra.mxu0 0
      %1992 = vmatprep.subr.bf16.mxu0 0
      %1993 = vmatpush2.bf16.msra.mxu0 0
      %1994 = vmatprep.subr.bf16.mxu0 0
      %1995 = vmatpush2.bf16.msra.mxu0 0
      %1996 = vmatprep.subr.bf16.mxu0 0
      %1997 = vmatpush2.bf16.msra.mxu0 0
      %1998 = vmatprep.subr.bf16.mxu0 0
      %1999 = vmatpush2.bf16.msra.mxu0 0
      %2000 = vmatprep.subr.bf16.mxu0 0
      %2001 = vmatpush2.bf16.msra.mxu0 0
      %2002 = vmatprep.subr.bf16.mxu0 0
      %2003 = vmatpush2.bf16.msra.mxu0 0
      %2004 = vmatprep.mubr.bf16.mxu0 0
      %2005 = vmatmul.mubr.bf16.gmra.mxu0 %v1967
      %v2006 = vpop.f32.mrf.mxu0
      %v2007 = vadd.f32 0.0, %v2006
      %v2008 = vpop.f32.mrf.mxu0
      %v2009 = vpop.f32.mrf.mxu0
      %v2010 = vpop.f32.mrf.mxu0
      %2011 = vdwg.mxu0
      %v2012 = vpack.c.bf16 %v2007, %v2007
      %v2014 = vsel %vm895, %v2012, 0
      %v2017 = vsel %vm958, %v849, 0
      %2019 = vmatprep.subr.bf16.mxu0 0
      %2020 = vmatpush1.bf16.msra.mxu0 0
      %2021 = vmatprep.subr.bf16.mxu0 0
      %2022 = vmatpush1.bf16.msra.mxu0 0
      %2023 = vmatprep.subr.bf16.mxu0 0
      %2024 = vmatpush1.bf16.msra.mxu0 0
      %2025 = vmatprep.subr.bf16.mxu0 0
      %2026 = vmatpush1.bf16.msra.mxu0 0
      %2027 = vmatprep.subr.bf16.mxu0 0
      %2028 = vmatpush1.bf16.msra.mxu0 0
      %2029 = vmatprep.subr.bf16.mxu0 0
      %2030 = vmatpush1.bf16.msra.mxu0 0
      %2031 = vmatprep.subr.bf16.mxu0 0
      %2032 = vmatpush1.bf16.msra.mxu0 0
      %2033 = vmatprep.subr.bf16.mxu0 0
      %2034 = vmatpush1.bf16.msra.mxu0 %v2017
      %2035 = vmatprep.subr.bf16.mxu0 0
      %2036 = vmatpush2.bf16.msra.mxu0 0
      %2037 = vmatprep.subr.bf16.mxu0 0
      %2038 = vmatpush2.bf16.msra.mxu0 0
      %2039 = vmatprep.subr.bf16.mxu0 0
      %2040 = vmatpush2.bf16.msra.mxu0 0
      %2041 = vmatprep.subr.bf16.mxu0 0
      %2042 = vmatpush2.bf16.msra.mxu0 0
      %2043 = vmatprep.subr.bf16.mxu0 0
      %2044 = vmatpush2.bf16.msra.mxu0 0
      %2045 = vmatprep.subr.bf16.mxu0 0
      %2046 = vmatpush2.bf16.msra.mxu0 0
      %2047 = vmatprep.subr.bf16.mxu0 0
      %2048 = vmatpush2.bf16.msra.mxu0 0
      %2049 = vmatprep.subr.bf16.mxu0 0
      %2050 = vmatpush2.bf16.msra.mxu0 0
      %2051 = vmatprep.mubr.bf16.mxu0 0
      %2052 = vmatmul.mubr.bf16.gmra.mxu0 %v2014
      %v2053 = vpop.f32.mrf.mxu0
      %v2054 = vadd.f32 0.0, %v2053
      %v2055 = vpop.f32.mrf.mxu0
      %v2056 = vpop.f32.mrf.mxu0
      %v2057 = vpop.f32.mrf.mxu0
      %2058 = vdwg.mxu0
      %v2060 = vsel %vm895, %v1893, 0
      %v2063 = vsel %vm958, %v848, 0
      %2065 = vmatprep.subr.bf16.mxu0 0
      %2066 = vmatpush1.bf16.msra.mxu0 0
      %2067 = vmatprep.subr.bf16.mxu0 0
      %2068 = vmatpush1.bf16.msra.mxu0 0
      %2069 = vmatprep.subr.bf16.mxu0 0
      %2070 = vmatpush1.bf16.msra.mxu0 0
      %2071 = vmatprep.subr.bf16.mxu0 0
      %2072 = vmatpush1.bf16.msra.mxu0 0
      %2073 = vmatprep.subr.bf16.mxu0 0
      %2074 = vmatpush1.bf16.msra.mxu0 0
      %2075 = vmatprep.subr.bf16.mxu0 0
      %2076 = vmatpush1.bf16.msra.mxu0 0
      %2077 = vmatprep.subr.bf16.mxu0 0
      %2078 = vmatpush1.bf16.msra.mxu0 0
      %2079 = vmatprep.subr.bf16.mxu0 0
      %2080 = vmatpush1.bf16.msra.mxu0 %v2063
      %2081 = vmatprep.subr.bf16.mxu0 0
      %2082 = vmatpush2.bf16.msra.mxu0 0
      %2083 = vmatprep.subr.bf16.mxu0 0
      %2084 = vmatpush2.bf16.msra.mxu0 0
      %2085 = vmatprep.subr.bf16.mxu0 0
      %2086 = vmatpush2.bf16.msra.mxu0 0
      %2087 = vmatprep.subr.bf16.mxu0 0
      %2088 = vmatpush2.bf16.msra.mxu0 0
      %2089 = vmatprep.subr.bf16.mxu0 0
      %2090 = vmatpush2.bf16.msra.mxu0 0
      %2091 = vmatprep.subr.bf16.mxu0 0
      %2092 = vmatpush2.bf16.msra.mxu0 0
      %2093 = vmatprep.subr.bf16.mxu0 0
      %2094 = vmatpush2.bf16.msra.mxu0 0
      %2095 = vmatprep.subr.bf16.mxu0 0
      %2096 = vmatpush2.bf16.msra.mxu0 0
      %2097 = vmatprep.mubr.bf16.mxu0 0
      %2098 = vmatmul.mubr.bf16.gmra.mxu0 %v2060
      %v2099 = vpop.f32.mrf.mxu0
      %v2100 = vadd.f32 %v2054, %v2099
      %v2101 = vpop.f32.mrf.mxu0
      %v2102 = vpop.f32.mrf.mxu0
      %v2103 = vpop.f32.mrf.mxu0
      %2104 = vdwg.mxu0
      %2105 = vrot.lane.b32.xlu0 %v1787, 112
      %v2106 = vpop.permute.xlu0 %2105
      %2107 = vrot.lane.b32.xlu0 %v1899, 112
      %v2108 = vpop.permute.xlu0 %2107
      %v2110 = vsel %vm895, %v2106, 0
      %v2113 = vsel %vm895, %v2108, 0
      %2115 = vmatprep.subr.bf16.mxu0 0
      %2116 = vmatpush1.bf16.xpose.msra.mxu0 0
      %2117 = vmatprep.subr.bf16.mxu0 0
      %2118 = vmatpush1.bf16.xpose.msra.mxu0 0
      %2119 = vmatprep.subr.bf16.mxu0 0
      %2120 = vmatpush1.bf16.xpose.msra.mxu0 0
      %2121 = vmatprep.subr.bf16.mxu0 0
      %2122 = vmatpush1.bf16.xpose.msra.mxu0 0
      %2123 = vmatprep.subr.bf16.mxu0 0
      %2124 = vmatpush1.bf16.xpose.msra.mxu0 0
      %2125 = vmatprep.subr.bf16.mxu0 0
      %2126 = vmatpush1.bf16.xpose.msra.mxu0 0
      %2127 = vmatprep.subr.bf16.mxu0 0
      %2128 = vmatpush1.bf16.xpose.msra.mxu0 0
      %2129 = vmatprep.subr.bf16.mxu0 0
      %2130 = vmatpush1.bf16.xpose.msra.mxu0 %v2113
      %2131 = vmatprep.subr.bf16.mxu0 0
      %2132 = vmatpush2.bf16.xpose.msra.mxu0 0
      %2133 = vmatprep.subr.bf16.mxu0 0
      %2134 = vmatpush2.bf16.xpose.msra.mxu0 0
      %2135 = vmatprep.subr.bf16.mxu0 0
      %2136 = vmatpush2.bf16.xpose.msra.mxu0 0
      %2137 = vmatprep.subr.bf16.mxu0 0
      %2138 = vmatpush2.bf16.xpose.msra.mxu0 0
      %2139 = vmatprep.subr.bf16.mxu0 0
      %2140 = vmatpush2.bf16.xpose.msra.mxu0 0
      %2141 = vmatprep.subr.bf16.mxu0 0
      %2142 = vmatpush2.bf16.xpose.msra.mxu0 0
      %2143 = vmatprep.subr.bf16.mxu0 0
      %2144 = vmatpush2.bf16.xpose.msra.mxu0 0
      %2145 = vmatprep.subr.bf16.mxu0 0
      %2146 = vmatpush2.bf16.xpose.msra.mxu0 0
      %2147 = vmatprep.mubr.bf16.mxu0 0
      %2148 = vmatmul.mubr.bf16.gmra.mxu0 %v2110
      %v2149 = vpop.f32.mrf.mxu0
      %v2150 = vadd.f32 0.0, %v2149
      %v2151 = vpop.f32.mrf.mxu0
      %v2152 = vpop.f32.mrf.mxu0
      %v2153 = vpop.f32.mrf.mxu0
      %2154 = vdwg.mxu0
      %v2155 = vsel %vm895, %v2150, -inf
      %2156 = vmax.xlane.f32.xlu0 %v2155
      %v2157 = vpop.xlane.xlu0 %2156
      %v2158 = vsub.f32 %v2150, %v2157
      %v2159 = vmul.f32 %v2158, 1.442695
      %v2160 = vpow.pop %v2159
      %v2161 = vsel %vm895, %v2160, 0.0
      %2162 = vadd.xlane.f32.xlu0 %v2161
      %v2163 = vpop.xlane.xlu0 %2162
      %v2164 = vrcp.pop %v2163
      %v2165 = vmul.f32 1.0, %v2164
      %v2166 = vmul.f32 %v2160, %v2165
      %v2167 = vpack.c.bf16 %v2166, %v2166
      %2168 = vrot.lane.b32.xlu0 %v1963, 112
      %v2169 = vpop.permute.xlu0 %2168
      %v2171 = vsel %vm895, %v2167, 0
      %v2174 = vsel %vm958, %v2169, 0
      %2176 = vmatprep.subr.bf16.mxu0 0
      %2177 = vmatpush1.bf16.msra.mxu0 0
      %2178 = vmatprep.subr.bf16.mxu0 0
      %2179 = vmatpush1.bf16.msra.mxu0 0
      %2180 = vmatprep.subr.bf16.mxu0 0
      %2181 = vmatpush1.bf16.msra.mxu0 0
      %2182 = vmatprep.subr.bf16.mxu0 0
      %2183 = vmatpush1.bf16.msra.mxu0 0
      %2184 = vmatprep.subr.bf16.mxu0 0
      %2185 = vmatpush1.bf16.msra.mxu0 0
      %2186 = vmatprep.subr.bf16.mxu0 0
      %2187 = vmatpush1.bf16.msra.mxu0 0
      %2188 = vmatprep.subr.bf16.mxu0 0
      %2189 = vmatpush1.bf16.msra.mxu0 0
      %2190 = vmatprep.subr.bf16.mxu0 0
      %2191 = vmatpush1.bf16.msra.mxu0 %v2174
      %2192 = vmatprep.subr.bf16.mxu0 0
      %2193 = vmatpush2.bf16.msra.mxu0 0
      %2194 = vmatprep.subr.bf16.mxu0 0
      %2195 = vmatpush2.bf16.msra.mxu0 0
      %2196 = vmatprep.subr.bf16.mxu0 0
      %2197 = vmatpush2.bf16.msra.mxu0 0
      %2198 = vmatprep.subr.bf16.mxu0 0
      %2199 = vmatpush2.bf16.msra.mxu0 0
      %2200 = vmatprep.subr.bf16.mxu0 0
      %2201 = vmatpush2.bf16.msra.mxu0 0
      %2202 = vmatprep.subr.bf16.mxu0 0
      %2203 = vmatpush2.bf16.msra.mxu0 0
      %2204 = vmatprep.subr.bf16.mxu0 0
      %2205 = vmatpush2.bf16.msra.mxu0 0
      %2206 = vmatprep.subr.bf16.mxu0 0
      %2207 = vmatpush2.bf16.msra.mxu0 0
      %2208 = vmatprep.mubr.bf16.mxu0 0
      %2209 = vmatmul.mubr.bf16.gmra.mxu0 %v2171
      %v2210 = vpop.f32.mrf.mxu0
      %v2211 = vadd.f32 0.0, %v2210
      %v2212 = vpop.f32.mrf.mxu0
      %v2213 = vpop.f32.mrf.mxu0
      %v2214 = vpop.f32.mrf.mxu0
      %2215 = vdwg.mxu0
      %v2216 = vpack.c.bf16 %v2211, %v2211
      %v2218 = vsel %vm895, %v2216, 0
      %v2221 = vsel %vm958, %v850, 0
      %2223 = vmatprep.subr.bf16.mxu0 0
      %2224 = vmatpush1.bf16.msra.mxu0 0
      %2225 = vmatprep.subr.bf16.mxu0 0
      %2226 = vmatpush1.bf16.msra.mxu0 0
      %2227 = vmatprep.subr.bf16.mxu0 0
      %2228 = vmatpush1.bf16.msra.mxu0 0
      %2229 = vmatprep.subr.bf16.mxu0 0
      %2230 = vmatpush1.bf16.msra.mxu0 0
      %2231 = vmatprep.subr.bf16.mxu0 0
      %2232 = vmatpush1.bf16.msra.mxu0 0
      %2233 = vmatprep.subr.bf16.mxu0 0
      %2234 = vmatpush1.bf16.msra.mxu0 0
      %2235 = vmatprep.subr.bf16.mxu0 0
      %2236 = vmatpush1.bf16.msra.mxu0 0
      %2237 = vmatprep.subr.bf16.mxu0 0
      %2238 = vmatpush1.bf16.msra.mxu0 %v2221
      %2239 = vmatprep.subr.bf16.mxu0 0
      %2240 = vmatpush2.bf16.msra.mxu0 0
      %2241 = vmatprep.subr.bf16.mxu0 0
      %2242 = vmatpush2.bf16.msra.mxu0 0
      %2243 = vmatprep.subr.bf16.mxu0 0
      %2244 = vmatpush2.bf16.msra.mxu0 0
      %2245 = vmatprep.subr.bf16.mxu0 0
      %2246 = vmatpush2.bf16.msra.mxu0 0
      %2247 = vmatprep.subr.bf16.mxu0 0
      %2248 = vmatpush2.bf16.msra.mxu0 0
      %2249 = vmatprep.subr.bf16.mxu0 0
      %2250 = vmatpush2.bf16.msra.mxu0 0
      %2251 = vmatprep.subr.bf16.mxu0 0
      %2252 = vmatpush2.bf16.msra.mxu0 0
      %2253 = vmatprep.subr.bf16.mxu0 0
      %2254 = vmatpush2.bf16.msra.mxu0 0
      %2255 = vmatprep.mubr.bf16.mxu0 0
      %2256 = vmatmul.mubr.bf16.gmra.mxu0 %v2218
      %v2257 = vpop.f32.mrf.mxu0
      %v2258 = vadd.f32 0.0, %v2257
      %v2259 = vpop.f32.mrf.mxu0
      %v2260 = vpop.f32.mrf.mxu0
      %v2261 = vpop.f32.mrf.mxu0
      %2262 = vdwg.mxu0
      %v2263 = vadd.f32 %v2100, %v2258
      %2264 = vrot.lane.b32.xlu0 %v1787, 104
      %v2265 = vpop.permute.xlu0 %2264
      %2266 = vrot.lane.b32.xlu0 %v1899, 104
      %v2267 = vpop.permute.xlu0 %2266
      %v2269 = vsel %vm895, %v2265, 0
      %v2272 = vsel %vm895, %v2267, 0
      %2274 = vmatprep.subr.bf16.mxu0 0
      %2275 = vmatpush1.bf16.xpose.msra.mxu0 0
      %2276 = vmatprep.subr.bf16.mxu0 0
      %2277 = vmatpush1.bf16.xpose.msra.mxu0 0
      %2278 = vmatprep.subr.bf16.mxu0 0
      %2279 = vmatpush1.bf16.xpose.msra.mxu0 0
      %2280 = vmatprep.subr.bf16.mxu0 0
      %2281 = vmatpush1.bf16.xpose.msra.mxu0 0
      %2282 = vmatprep.subr.bf16.mxu0 0
      %2283 = vmatpush1.bf16.xpose.msra.mxu0 0
      %2284 = vmatprep.subr.bf16.mxu0 0
      %2285 = vmatpush1.bf16.xpose.msra.mxu0 0
      %2286 = vmatprep.subr.bf16.mxu0 0
      %2287 = vmatpush1.bf16.xpose.msra.mxu0 0
      %2288 = vmatprep.subr.bf16.mxu0 0
      %2289 = vmatpush1.bf16.xpose.msra.mxu0 %v2272
      %2290 = vmatprep.subr.bf16.mxu0 0
      %2291 = vmatpush2.bf16.xpose.msra.mxu0 0
      %2292 = vmatprep.subr.bf16.mxu0 0
      %2293 = vmatpush2.bf16.xpose.msra.mxu0 0
      %2294 = vmatprep.subr.bf16.mxu0 0
      %2295 = vmatpush2.bf16.xpose.msra.mxu0 0
      %2296 = vmatprep.subr.bf16.mxu0 0
      %2297 = vmatpush2.bf16.xpose.msra.mxu0 0
      %2298 = vmatprep.subr.bf16.mxu0 0
      %2299 = vmatpush2.bf16.xpose.msra.mxu0 0
      %2300 = vmatprep.subr.bf16.mxu0 0
      %2301 = vmatpush2.bf16.xpose.msra.mxu0 0
      %2302 = vmatprep.subr.bf16.mxu0 0
      %2303 = vmatpush2.bf16.xpose.msra.mxu0 0
      %2304 = vmatprep.subr.bf16.mxu0 0
      %2305 = vmatpush2.bf16.xpose.msra.mxu0 0
      %2306 = vmatprep.mubr.bf16.mxu0 0
      %2307 = vmatmul.mubr.bf16.gmra.mxu0 %v2269
      %v2308 = vpop.f32.mrf.mxu0
      %v2309 = vadd.f32 0.0, %v2308
      %v2310 = vpop.f32.mrf.mxu0
      %v2311 = vpop.f32.mrf.mxu0
      %v2312 = vpop.f32.mrf.mxu0
      %2313 = vdwg.mxu0
      %v2314 = vsel %vm895, %v2309, -inf
      %2315 = vmax.xlane.f32.xlu0 %v2314
      %v2316 = vpop.xlane.xlu0 %2315
      %v2317 = vsub.f32 %v2309, %v2316
      %v2318 = vmul.f32 %v2317, 1.442695
      %v2319 = vpow.pop %v2318
      %v2320 = vsel %vm895, %v2319, 0.0
      %2321 = vadd.xlane.f32.xlu0 %v2320
      %v2322 = vpop.xlane.xlu0 %2321
      %v2323 = vrcp.pop %v2322
      %v2324 = vmul.f32 1.0, %v2323
      %v2325 = vmul.f32 %v2319, %v2324
      %v2326 = vpack.c.bf16 %v2325, %v2325
      %2327 = vrot.lane.b32.xlu0 %v1963, 104
      %v2328 = vpop.permute.xlu0 %2327
      %v2330 = vsel %vm895, %v2326, 0
      %v2333 = vsel %vm958, %v2328, 0
      %2335 = vmatprep.subr.bf16.mxu0 0
      %2336 = vmatpush1.bf16.msra.mxu0 0
      %2337 = vmatprep.subr.bf16.mxu0 0
      %2338 = vmatpush1.bf16.msra.mxu0 0
      %2339 = vmatprep.subr.bf16.mxu0 0
      %2340 = vmatpush1.bf16.msra.mxu0 0
      %2341 = vmatprep.subr.bf16.mxu0 0
      %2342 = vmatpush1.bf16.msra.mxu0 0
      %2343 = vmatprep.subr.bf16.mxu0 0
      %2344 = vmatpush1.bf16.msra.mxu0 0
      %2345 = vmatprep.subr.bf16.mxu0 0
      %2346 = vmatpush1.bf16.msra.mxu0 0
      %2347 = vmatprep.subr.bf16.mxu0 0
      %2348 = vmatpush1.bf16.msra.mxu0 0
      %2349 = vmatprep.subr.bf16.mxu0 0
      %2350 = vmatpush1.bf16.msra.mxu0 %v2333
      %2351 = vmatprep.subr.bf16.mxu0 0
      %2352 = vmatpush2.bf16.msra.mxu0 0
      %2353 = vmatprep.subr.bf16.mxu0 0
      %2354 = vmatpush2.bf16.msra.mxu0 0
      %2355 = vmatprep.subr.bf16.mxu0 0
      %2356 = vmatpush2.bf16.msra.mxu0 0
      %2357 = vmatprep.subr.bf16.mxu0 0
      %2358 = vmatpush2.bf16.msra.mxu0 0
      %2359 = vmatprep.subr.bf16.mxu0 0
      %2360 = vmatpush2.bf16.msra.mxu0 0
      %2361 = vmatprep.subr.bf16.mxu0 0
      %2362 = vmatpush2.bf16.msra.mxu0 0
      %2363 = vmatprep.subr.bf16.mxu0 0
      %2364 = vmatpush2.bf16.msra.mxu0 0
      %2365 = vmatprep.subr.bf16.mxu0 0
      %2366 = vmatpush2.bf16.msra.mxu0 0
      %2367 = vmatprep.mubr.bf16.mxu0 0
      %2368 = vmatmul.mubr.bf16.gmra.mxu0 %v2330
      %v2369 = vpop.f32.mrf.mxu0
      %v2370 = vadd.f32 0.0, %v2369
      %v2371 = vpop.f32.mrf.mxu0
      %v2372 = vpop.f32.mrf.mxu0
      %v2373 = vpop.f32.mrf.mxu0
      %2374 = vdwg.mxu0
      %v2375 = vpack.c.bf16 %v2370, %v2370
      %v2377 = vsel %vm895, %v2375, 0
      %v2380 = vsel %vm958, %v851, 0
      %2382 = vmatprep.subr.bf16.mxu0 0
      %2383 = vmatpush1.bf16.msra.mxu0 0
      %2384 = vmatprep.subr.bf16.mxu0 0
      %2385 = vmatpush1.bf16.msra.mxu0 0
      %2386 = vmatprep.subr.bf16.mxu0 0
      %2387 = vmatpush1.bf16.msra.mxu0 0
      %2388 = vmatprep.subr.bf16.mxu0 0
      %2389 = vmatpush1.bf16.msra.mxu0 0
      %2390 = vmatprep.subr.bf16.mxu0 0
      %2391 = vmatpush1.bf16.msra.mxu0 0
      %2392 = vmatprep.subr.bf16.mxu0 0
      %2393 = vmatpush1.bf16.msra.mxu0 0
      %2394 = vmatprep.subr.bf16.mxu0 0
      %2395 = vmatpush1.bf16.msra.mxu0 0
      %2396 = vmatprep.subr.bf16.mxu0 0
      %2397 = vmatpush1.bf16.msra.mxu0 %v2380
      %2398 = vmatprep.subr.bf16.mxu0 0
      %2399 = vmatpush2.bf16.msra.mxu0 0
      %2400 = vmatprep.subr.bf16.mxu0 0
      %2401 = vmatpush2.bf16.msra.mxu0 0
      %2402 = vmatprep.subr.bf16.mxu0 0
      %2403 = vmatpush2.bf16.msra.mxu0 0
      %2404 = vmatprep.subr.bf16.mxu0 0
      %2405 = vmatpush2.bf16.msra.mxu0 0
      %2406 = vmatprep.subr.bf16.mxu0 0
      %2407 = vmatpush2.bf16.msra.mxu0 0
      %2408 = vmatprep.subr.bf16.mxu0 0
      %2409 = vmatpush2.bf16.msra.mxu0 0
      %2410 = vmatprep.subr.bf16.mxu0 0
      %2411 = vmatpush2.bf16.msra.mxu0 0
      %2412 = vmatprep.subr.bf16.mxu0 0
      %2413 = vmatpush2.bf16.msra.mxu0 0
      %2414 = vmatprep.mubr.bf16.mxu0 0
      %2415 = vmatmul.mubr.bf16.gmra.mxu0 %v2377
      %v2416 = vpop.f32.mrf.mxu0
      %v2417 = vadd.f32 0.0, %v2416
      %v2418 = vpop.f32.mrf.mxu0
      %v2419 = vpop.f32.mrf.mxu0
      %v2420 = vpop.f32.mrf.mxu0
      %2421 = vdwg.mxu0
      %v2422 = vadd.f32 %v2263, %v2417
      %v2424 = vlaneseq
      %v2425 = vshrl.u32 %v2424, 7
      %v2426 = vsub.s32 0, %v2425
      %v2427 = vrot.slane %v838, %v2426
      %v2429 = vmul.f32 %v1715, %v2427
      %v2431 = vlaneseq
      %v2432 = vshrl.u32 %v2431, 7
      %v2433 = vsub.s32 0, %v2432
      %v2434 = vrot.slane %v839, %v2433
      %v2436 = vadd.f32 %v2429, %v2434
      %v2437 = vpack.c.bf16 %v2436, %v2436
      %v2439 = vlaneseq
      %v2440 = vshrl.u32 %v2439, 7
      %v2441 = vsub.s32 0, %v2440
      %v2442 = vrot.slane %v870, %v2441
      %v2448 = vunpack.c.l.b16 %v866
      %v2449 = vunpack.c.l.b16 %v867
      %v2450 = vunpack.c.l.b16 %v868
      %v2451 = vunpack.c.l.b16 %v869
      %v2452 = vpack.c.b16 %v2449, %v2448
      %v2453 = vpack.c.b16 %v2451, %v2450
      %v2457 = vsel %vm1534, %v2437, 0
      %2459 = vmatprep.subr.bf16.mxu0 0
      %2460 = vmatpush1.bf16.msra.mxu0 0
      %2461 = vmatprep.subr.bf16.mxu0 0
      %2462 = vmatpush1.bf16.msra.mxu0 0
      %2463 = vmatprep.subr.bf16.mxu0 0
      %2464 = vmatpush1.bf16.msra.mxu0 0
      %2465 = vmatprep.subr.bf16.mxu0 0
      %2466 = vmatpush1.bf16.msra.mxu0 0
      %2467 = vmatprep.subr.bf16.mxu0 0
      %2468 = vmatpush1.bf16.msra.mxu0 0
      %2469 = vmatprep.subr.bf16.mxu0 0
      %2470 = vmatpush1.bf16.msra.mxu0 0
      %2471 = vmatprep.subr.bf16.mxu0 0
      %2472 = vmatpush1.bf16.msra.mxu0 %v2453
      %2473 = vmatprep.subr.bf16.mxu0 0
      %2474 = vmatpush1.bf16.msra.mxu0 %v2452
      %2475 = vmatprep.subr.bf16.mxu0 0
      %2476 = vmatpush2.bf16.msra.mxu0 0
      %2477 = vmatprep.subr.bf16.mxu0 0
      %2478 = vmatpush2.bf16.msra.mxu0 0
      %2479 = vmatprep.subr.bf16.mxu0 0
      %2480 = vmatpush2.bf16.msra.mxu0 0
      %2481 = vmatprep.subr.bf16.mxu0 0
      %2482 = vmatpush2.bf16.msra.mxu0 0
      %2483 = vmatprep.subr.bf16.mxu0 0
      %2484 = vmatpush2.bf16.msra.mxu0 0
      %2485 = vmatprep.subr.bf16.mxu0 0
      %2486 = vmatpush2.bf16.msra.mxu0 0
      %2487 = vmatprep.subr.bf16.mxu0 0
      %2488 = vmatpush2.bf16.msra.mxu0 0
      %2489 = vmatprep.subr.bf16.mxu0 0
      %2490 = vmatpush2.bf16.msra.mxu0 0
      %2491 = vmatprep.mubr.bf16.mxu0 0
      %2492 = vmatmul.mubr.bf16.gmra.mxu0 %v2457
      %v2493 = vpop.f32.mrf.mxu0
      %v2494 = vadd.f32 %v2442, %v2493
      %v2495 = vpop.f32.mrf.mxu0
      %v2496 = vpop.f32.mrf.mxu0
      %v2497 = vpop.f32.mrf.mxu0
      %2498 = vdwg.mxu0
      %v2499 = vmax.f32 %v2494, 0.0
      %v2500 = vpack.c.bf16 %v2499, %v2499
      %v2502 = vlaneseq
      %v2503 = vshrl.u32 %v2502, 7
      %v2504 = vsub.s32 0, %v2503
      %v2505 = vrot.slane %v879, %v2504
      %v2515 = vunpack.c.l.b16 %v871
      %v2516 = vunpack.c.l.b16 %v872
      %v2517 = vunpack.c.l.b16 %v873
      %v2518 = vunpack.c.l.b16 %v874
      %v2519 = vunpack.c.l.b16 %v875
      %v2520 = vunpack.c.l.b16 %v876
      %v2521 = vunpack.c.l.b16 %v877
      %v2522 = vunpack.c.l.b16 %v878
      %v2523 = vpack.c.b16 %v2516, %v2515
      %v2524 = vpack.c.b16 %v2518, %v2517
      %v2525 = vpack.c.b16 %v2520, %v2519
      %v2526 = vpack.c.b16 %v2522, %v2521
      %v2532 = vsel %vm1657, %v2500, 0
      %2534 = vmatprep.subr.bf16.mxu0 0
      %2535 = vmatpush1.bf16.msra.mxu0 0
      %2536 = vmatprep.subr.bf16.mxu0 0
      %2537 = vmatpush1.bf16.msra.mxu0 0
      %2538 = vmatprep.subr.bf16.mxu0 0
      %2539 = vmatpush1.bf16.msra.mxu0 0
      %2540 = vmatprep.subr.bf16.mxu0 0
      %2541 = vmatpush1.bf16.msra.mxu0 0
      %2542 = vmatprep.subr.bf16.mxu0 0
      %2543 = vmatpush1.bf16.msra.mxu0 %v2526
      %2544 = vmatprep.subr.bf16.mxu0 0
      %2545 = vmatpush1.bf16.msra.mxu0 %v2525
      %2546 = vmatprep.subr.bf16.mxu0 0
      %2547 = vmatpush1.bf16.msra.mxu0 %v2524
      %2548 = vmatprep.subr.bf16.mxu0 0
      %2549 = vmatpush1.bf16.msra.mxu0 %v2523
      %2550 = vmatprep.subr.bf16.mxu0 0
      %2551 = vmatpush2.bf16.msra.mxu0 0
      %2552 = vmatprep.subr.bf16.mxu0 0
      %2553 = vmatpush2.bf16.msra.mxu0 0
      %2554 = vmatprep.subr.bf16.mxu0 0
      %2555 = vmatpush2.bf16.msra.mxu0 0
      %2556 = vmatprep.subr.bf16.mxu0 0
      %2557 = vmatpush2.bf16.msra.mxu0 0
      %2558 = vmatprep.subr.bf16.mxu0 0
      %2559 = vmatpush2.bf16.msra.mxu0 0
      %2560 = vmatprep.subr.bf16.mxu0 0
      %2561 = vmatpush2.bf16.msra.mxu0 0
      %2562 = vmatprep.subr.bf16.mxu0 0
      %2563 = vmatpush2.bf16.msra.mxu0 0
      %2564 = vmatprep.subr.bf16.mxu0 0
      %2565 = vmatpush2.bf16.msra.mxu0 0
      %2566 = vmatprep.mubr.bf16.mxu0 0
      %2567 = vmatmul.mubr.bf16.gmra.mxu0 %v2532
      %v2568 = vpop.f32.mrf.mxu0
      %v2569 = vadd.f32 %v2505, %v2568
      %v2570 = vpop.f32.mrf.mxu0
      %v2571 = vpop.f32.mrf.mxu0
      %v2572 = vpop.f32.mrf.mxu0
      %2573 = vdwg.mxu0
      %v2574 = vadd.f32 %v2569, %v2422
      %v2575 = vadd.f32 %v1702, %v2574
      %2576 = vst.msk [vmem:[%s832] sm:$0xff] %vm1534, %v2575
      %p2577 = scmp.lt.s32.totalorder %s38, 1
      %s2578 = scalar_select %p2577, %s38, 1
      %p2579 = scmp.lt.s32.totalorder %s39, 0
      %s2580 = scalar_select %p2579, %s39, 0
      %s2581 = sadd.s32 %s2580, %s2578
      %s2582 = smul.addr %s2581, 8
      %s2583 = scalar_lea.vmem %s23, %s2582
      // Predicated region
      $region113: #{decoder_forward.9} parent=111 // pred_check
        %p2584 = pneg %p583
      $region114: #{decoder_forward.9} parent=111 // pred_check_branch
        %2586 = sbr.rel (%p2584) target = $region116
      $region115: #{decoder_forward.9} parent=111 // pred_region
        _
      $region116: #{decoder_forward.9} parent=111 // pred_fallthru
        _
    $region112: #{decoder_forward.9} parent=5 // pred_fallthru
      _
    %p2587 = scmp.le.s32.totalorder 2, %s29
    // Predicated region
    $region117: #{decoder_forward.9} parent=5 // pred_check
      %p2588 = pneg %p2587
    $region118: #{decoder_forward.9} parent=5 // pred_check_branch
      %2590 = sbr.rel (%p2588) target = $region120
    $region119: #{decoder_forward.9} parent=5 // pred_region
      %s2591 = ssub.s32 %s29, 2
      // Predicated region
      $region121: #{decoder_forward.9} parent=119 // pred_check
        %p2592 = pneg %p589
      $region122: #{decoder_forward.9} parent=119 // pred_check_branch
        %2594 = sbr.rel (%p2592) target = $region124
      $region123: #{decoder_forward.9} parent=119 // pred_region
        %p2595 = scmp.lt.s32.totalorder %s40, 1
        %s2596 = scalar_select %p2595, %s40, 1
        %p2597 = scmp.lt.s32.totalorder %s41, 0
        %s2598 = scalar_select %p2597, %s41, 0
        %s2599 = sadd.s32 %s2598, %s2596
        %s2600 = smul.addr %s2599, 8
        %s2601 = scalar_lea.vmem %s23, %s2600
      $region124: #{decoder_forward.9} parent=119 // pred_fallthru
        _
    $region120: #{decoder_forward.9} parent=5 // pred_fallthru
      _
  $region6: #{decoder_forward.9} parent=0 // loop_footer
    %s33 = sadd.s32 1, %s29
  $region7: #{decoder_forward.9} parent=0 // loop_footer_branch
    %28 = sbr.rel target = $region3
  $region8: #{decoder_forward.9} parent=0 // loop_exit
    _

</llo_original>
